<compile_context>
chip_gen: v5e
topology: v5e:2x2
jax: 0.10.0
libtpu: 0.0.40
codegen_flags: <defaults>
</compile_context>

<pallas_src>
import functools
import math

import numpy as np
import jax
import jax.numpy as jnp
from jax.experimental import pallas as pl
from jax.experimental.pallas import tpu as pltpu


# ----------------------------------------------------------------------------- utils
def _round_up(x, m):
    return (x + m - 1) // m * m


# ----------------------------------------------------------------------------- matmul kernel (bf16 operands, f32 accumulation)
def _mm_kernel(a_ref, b_ref, bias_ref, o_ref, acc_ref, *, act):
    @pl.when(pl.program_id(2) == 0)
    def _():
        acc_ref[...] = jnp.zeros_like(acc_ref)

    acc_ref[...] += jnp.dot(a_ref[...], b_ref[...], preferred_element_type=jnp.float32)

    @pl.when(pl.program_id(2) == pl.num_programs(2) - 1)
    def _():
        y = acc_ref[...] + bias_ref[...]
        if act == "relu":
            y = jnp.maximum(y, 0.0)
        o_ref[...] = y.astype(o_ref.dtype)


def pallas_matmul(a, b, bias=None, act=None):
    """a: (M,K)  b: (K,N)  bias: (N,) optional, fused.  Returns (M,N) float32."""
    M, K = a.shape
    K2, N = b.shape
    assert K == K2
    # Tiny GEMMs (fc head K=8, CPB-MLP K=2 / N=heads) are far below the Pallas
    # launch floor -> let XLA fuse them (review item).
    if M < 16 or K < 16 or N < 8:
        y = jnp.dot(a.astype(jnp.float32), b.astype(jnp.float32),
                    preferred_element_type=jnp.float32)
        if bias is not None:
            y = y + bias.astype(jnp.float32)
        if act == "relu":
            y = jnp.maximum(y, 0.0)
        return y

    a = a.astype(jnp.bfloat16)
    b = b.astype(jnp.bfloat16)
    if bias is None:
        bias = jnp.zeros((N,), jnp.float32)

    tm = min(256, _round_up(M, 8))
    tn = min(256, _round_up(N, 128))
    tk = min(512, _round_up(K, 128))
    Mp, Kp, Np = _round_up(M, tm), _round_up(K, tk), _round_up(N, tn)
    a_p = jnp.pad(a, ((0, Mp - M), (0, Kp - K)))
    b_p = jnp.pad(b, ((0, Kp - K), (0, Np - N)))
    bias_p = jnp.pad(bias.astype(jnp.float32), (0, Np - N)).reshape(1, Np)

    out = pl.pallas_call(
        functools.partial(_mm_kernel, act=act),
        out_shape=jax.ShapeDtypeStruct((Mp, Np), jnp.float32),
        grid_spec=pltpu.PrefetchScalarGridSpec(
            num_scalar_prefetch=0,
            grid=(Mp // tm, Np // tn, Kp // tk),
            in_specs=[
                pl.BlockSpec((tm, tk), lambda i, j, k: (i, k)),
                pl.BlockSpec((tk, tn), lambda i, j, k: (k, j)),
                pl.BlockSpec((1, tn), lambda i, j, k: (0, j)),
            ],
            out_specs=pl.BlockSpec((tm, tn), lambda i, j, k: (i, j)),
            scratch_shapes=[pltpu.VMEM((tm, tn), jnp.float32)],
        ),
        compiler_params=pltpu.CompilerParams(
            dimension_semantics=("parallel", "parallel", "arbitrary")),
    )(a_p, b_p, bias_p)
    return out[:M, :N]


# ----------------------------------------------------------------------------- row-norm kernel (LayerNorm / GroupNorm [+SiLU])
def _rownorm_kernel(x_ref, g_ref, b_ref, o_ref, *, eps, n_valid, act):
    x = x_ref[0]                       # (tr, Lp)
    g = g_ref[0]                       # (1, Lp)
    b = b_ref[0]                       # (1, Lp)
    col = jax.lax.broadcasted_iota(jnp.int32, x.shape, 1)
    mask = col < n_valid
    inv_n = 1.0 / n_valid
    xm = jnp.where(mask, x, 0.0)
    mean = jnp.sum(xm, axis=-1, keepdims=True) * inv_n
    d = jnp.where(mask, x - mean, 0.0)
    var = jnp.sum(d * d, axis=-1, keepdims=True) * inv_n
    y = (x - mean) * jax.lax.rsqrt(var + eps) * g + b
    if act == "silu":
        # SiLU via exp + EUP reciprocal (frees VALU slots).
        y = y * pl.reciprocal(1.0 + jnp.exp(-y), approx=True)
    o_ref[0] = y


def pallas_rownorm(x3, gamma3, beta3, eps=1e-5, act=None):
    """x3: (G, R, L); gamma3/beta3: (G, 1, L).  Row-wise norm over L, row-tiled."""
    x3 = x3.astype(jnp.float32)
    G, R, L = x3.shape
    tr = min(256, _round_up(R, 8))
    Rp, Lp = _round_up(R, tr), _round_up(L, 128)
    xp = jnp.pad(x3, ((0, 0), (0, Rp - R), (0, Lp - L)))
    gp = jnp.pad(gamma3.astype(jnp.float32), ((0, 0), (0, 0), (0, Lp - L)))
    bp = jnp.pad(beta3.astype(jnp.float32), ((0, 0), (0, 0), (0, Lp - L)))
    out = pl.pallas_call(
        functools.partial(_rownorm_kernel, eps=eps, n_valid=L, act=act),
        out_shape=jax.ShapeDtypeStruct((G, Rp, Lp), jnp.float32),
        grid=(G, Rp // tr),
        in_specs=[
            pl.BlockSpec((1, tr, Lp), lambda g, r: (g, r, 0)),
            pl.BlockSpec((1, 1, Lp), lambda g, r: (g, 0, 0)),
            pl.BlockSpec((1, 1, Lp), lambda g, r: (g, 0, 0)),
        ],
        out_specs=pl.BlockSpec((1, tr, Lp), lambda g, r: (g, r, 0)),
        compiler_params=pltpu.CompilerParams(
            dimension_semantics=("parallel", "parallel")),
    )(xp, gp, bp)
    return out[:, :R, :L]


def layer_norm(x2d, gamma, beta, eps=1e-5):
    R, L = x2d.shape
    y = pallas_rownorm(x2d[None], gamma.reshape(1, 1, L), beta.reshape(1, 1, L), eps=eps)
    return y[0]


def group_norm_silu(x, gamma, beta, groups=2, eps=1e-5):
    B, C, H, W = x.shape
    G, Cg = groups, C // groups
    xr = jnp.transpose(x.reshape(B, G, Cg * H * W), (1, 0, 2))          # (G, B, L)
    g = jnp.broadcast_to(gamma.reshape(G, Cg, 1), (G, Cg, H * W)).reshape(G, 1, -1)
    bt = jnp.broadcast_to(beta.reshape(G, Cg, 1), (G, Cg, H * W)).reshape(G, 1, -1)
    y = pallas_rownorm(xr, g, bt, eps=eps, act="silu")
    return jnp.transpose(y, (1, 0, 2)).reshape(B, C, H, W)


# ----------------------------------------------------------------------------- window attention kernel (SwinV2 cosine attention)
def _attn_kernel(q_ref, k_ref, v_ref, b_ref, o_ref):
    q = q_ref[0]                                   # (heads, N, hd)
    k = k_ref[0]
    v = v_ref[0]
    s = jnp.einsum('hqd,hkd->hqk', q, k, preferred_element_type=jnp.float32)
    s = s + b_ref[0]                               # (heads, N, N) shared bias
    mx = jnp.max(s, axis=-1, keepdims=True)
    p = jnp.exp(s - mx)
    denom = jnp.sum(p, axis=-1, keepdims=True)
    o = jnp.einsum('hqk,hkd->hqd', p, v, preferred_element_type=jnp.float32)
    o_ref[0] = o * pl.reciprocal(denom, approx=True)


def pallas_window_attention(q, k, v, bias):
    """q,k,v: (B*nW, heads, N, hd); bias: (nW_b, heads, N, N), nW_b in {1, nW}."""
    BW, Hh, N, D = q.shape
    nWb = bias.shape[0]
    assert N % 8 == 0
    out = pl.pallas_call(
        _attn_kernel,
        out_shape=jax.ShapeDtypeStruct((BW, Hh, N, D), jnp.float32),
        grid=(BW,),
        in_specs=[
            pl.BlockSpec((1, Hh, N, D), lambda i: (i, 0, 0, 0)),
            pl.BlockSpec((1, Hh, N, D), lambda i: (i, 0, 0, 0)),
            pl.BlockSpec((1, Hh, N, D), lambda i: (i, 0, 0, 0)),
            pl.BlockSpec((1, Hh, N, N), lambda i: (i % nWb, 0, 0, 0)),
        ],
        out_specs=pl.BlockSpec((1, Hh, N, D), lambda i: (i, 0, 0, 0)),
        compiler_params=pltpu.CompilerParams(dimension_semantics=("parallel",)),
    )(q.astype(jnp.float32), k.astype(jnp.float32), v.astype(jnp.float32),
      bias.astype(jnp.float32))
    return out


# ----------------------------------------------------------------------------- conv helpers
def conv2d_3x3(x, w, b, stride=1, padding=1):
    # 3x3 convs via XLA conv (bf16 MXU path); avoids 9x im2col HBM inflation.
    y = jax.lax.conv_general_dilated(
        x.astype(jnp.bfloat16), w.astype(jnp.bfloat16),
        window_strides=(stride, stride),
        padding=((padding, padding), (padding, padding)),
        dimension_numbers=("NCHW", "OIHW", "NCHW"),
        preferred_element_type=jnp.float32)
    return y + b.astype(jnp.float32)[None, :, None, None]


def conv2d_1x1(x, w, b):
    B, Cin, H, W = x.shape
    Cout = w.shape[0]
    xr = jnp.transpose(x, (0, 2, 3, 1)).reshape(-1, Cin)
    y = pallas_matmul(xr, w.reshape(Cout, Cin).T, bias=b)
    return jnp.transpose(y.reshape(B, H, W, Cout), (0, 3, 1, 2))


def conv_transpose2d_k2s2(x, w, b):
    # w: (Cin, Cout, 2, 2); stride == kernel == 2 (no overlap) -> pure GEMM.
    B, Cin, H, W = x.shape
    Cout = w.shape[1]
    xr = jnp.transpose(x, (0, 2, 3, 1)).reshape(B * H * W, Cin)
    y = pallas_matmul(xr, w.reshape(Cin, Cout * 4), bias=jnp.repeat(b, 4))
    y = y.reshape(B, H, W, Cout, 2, 2)
    y = jnp.transpose(y, (0, 3, 1, 4, 2, 5)).reshape(B, Cout, 2 * H, 2 * W)
    return y


# ----------------------------------------------------------------------------- model pieces
def space_time_cube_embedding(x, prm):
    # x: (B, T=2, V, lat, long)
    B, T, V, H, W = x.shape
    x = jnp.transpose(x, (0, 2, 1, 3, 4))                      # (B, V, T, H, W)
    Cout = prm["emb_conv_w"].shape[0]
    Td, Hd, Wd = T // 2, H // 4, W // 4
    xr = x.reshape(B, V, Td, 2, Hd, 4, Wd, 4)
    xr = jnp.transpose(xr, (0, 2, 4, 6, 1, 3, 5, 7)).reshape(B * Td * Hd * Wd, V * 2 * 4 * 4)
    y = pallas_matmul(xr, prm["emb_conv_w"].reshape(Cout, -1).T, bias=prm["emb_conv_b"])
    y = layer_norm(y, prm["emb_ln_g"], prm["emb_ln_b"])
    y = y.reshape(B, Td, Hd, Wd, Cout)
    y = jnp.transpose(y, (0, 1, 4, 2, 3))                      # (B, Td, C, Hd, Wd)
    if y.shape[1] == 1:                                        # torch.squeeze(x, dim=1)
        y = jnp.squeeze(y, axis=1)
    return y


def residual_block(x, pr):
    x = conv2d_3x3(x, pr["conv1_w"], pr["conv1_b"], stride=1, padding=1)
    x = group_norm_silu(x, pr["gn1_g"], pr["gn1_b"])
    x = conv2d_3x3(x, pr["conv2_w"], pr["conv2_b"], stride=1, padding=1)
    x = group_norm_silu(x, pr["gn2_g"], pr["gn2_b"])
    return x


def down_block(x, pr):
    x = conv2d_3x3(x, pr["conv1_w"], pr["conv1_b"], stride=2, padding=1)
    x = jnp.concatenate([x, residual_block(x, pr["res"])], axis=1)
    return conv2d_1x1(x, pr["adj_w"], pr["adj_b"])


def up_block(x, skip, pr):
    x = jnp.concatenate([x, skip], axis=1)
    x = conv_transpose2d_k2s2(x, pr["up_w"], pr["up_b"])
    x = jnp.concatenate([x, residual_block(x, pr["res"])], axis=1)
    return conv2d_1x1(x, pr["adj_w"], pr["adj_b"])


# --- SwinTransformerBlockV2 pieces (torchvision semantics, eval mode) ---------
def make_relative_position_index(ws):
    coords = np.stack(np.meshgrid(np.arange(ws[0]), np.arange(ws[1]), indexing="ij"))
    flat = coords.reshape(2, -1)
    rel = (flat[:, :, None] - flat[:, None, :]).transpose(1, 2, 0).astype(np.int64)
    rel[:, :, 0] += ws[0] - 1
    rel[:, :, 1] += ws[1] - 1
    rel[:, :, 0] *= 2 * ws[1] - 1
    return rel.sum(-1).reshape(-1).astype(np.int32)


def make_relative_coords_table(ws):
    rh = np.arange(-(ws[0] - 1), ws[0], dtype=np.float32)
    rw = np.arange(-(ws[1] - 1), ws[1], dtype=np.float32)
    table = np.stack(np.meshgrid(rh, rw, indexing="ij")).transpose(1, 2, 0)[None]
    table[:, :, :, 0] /= (ws[0] - 1)
    table[:, :, :, 1] /= (ws[1] - 1)
    table *= 8
    table = np.sign(table) * np.log2(np.abs(table) + 1.0) / 3.0
    return table.astype(np.float32)


def make_attn_mask(pH, pW, ws, ss):
    mask = np.zeros((pH, pW), np.float32)
    h_slices = ((0, pH - ws[0]), (pH - ws[0], pH - ss[0]), (pH - ss[0], pH))
    w_slices = ((0, pW - ws[1]), (pW - ws[1], pW - ss[1]), (pW - ss[1], pW))
    cnt = 0
    for hs in h_slices:
        for wsl in w_slices:
            mask[hs[0]:hs[1], wsl[0]:wsl[1]] = cnt
            cnt += 1
    mask = mask.reshape(pH // ws[0], ws[0], pW // ws[1], ws[1])
    mask = mask.transpose(0, 2, 1, 3).reshape(-1, ws[0] * ws[1])
    diff = mask[:, None, :] - mask[:, :, None]
    return np.where(diff != 0, -100.0, 0.0).astype(np.float32)


def relative_position_bias_v2(bp, rel_index, coords_table, num_heads, N):
    t = jnp.asarray(coords_table, jnp.float32).reshape(-1, 2)
    h = pallas_matmul(t, bp["cpb_w1"].T, bias=bp["cpb_b1"], act="relu")
    h = pallas_matmul(h, bp["cpb_w2"].T)                       # (T, heads), no bias
    bias = h[jnp.asarray(rel_index)].reshape(N, N, num_heads)
    bias = jnp.transpose(bias, (2, 0, 1))
    return 16.0 * jax.nn.sigmoid(bias)                         # (heads, N, N)


def shifted_window_attention_v2(x, bp, rel_index, coords_table, num_heads, ws, ss):
    B, H, W, C = x.shape
    ss = list(ss)
    pad_r = (ws[1] - W % ws[1]) % ws[1]
    pad_b = (ws[0] - H % ws[0]) % ws[0]
    xp = jnp.pad(x, ((0, 0), (0, pad_b), (0, pad_r), (0, 0)))
    pH, pW = H + pad_b, W + pad_r
    if ws[0] >= pH:
        ss[0] = 0
    if ws[1] >= pW:
        ss[1] = 0
    shifted = sum(ss) > 0
    if shifted:
        xp = jnp.roll(xp, shift=(-ss[0], -ss[1]), axis=(1, 2))
    nWh, nWw = pH // ws[0], pW // ws[1]
    nW, N = nWh * nWw, ws[0] * ws[1]
    xw = xp.reshape(B, nWh, ws[0], nWw, ws[1], C)
    xw = jnp.transpose(xw, (0, 1, 3, 2, 4, 5)).reshape(B * nW, N, C)

    qkv = pallas_matmul(xw.reshape(-1, C), bp["qkv_w"].T, bias=bp["qkv_b"])
    hd = C // num_heads
    qkv = qkv.reshape(B * nW, N, 3, num_heads, hd)
    qkv = jnp.transpose(qkv, (2, 0, 3, 1, 4))                  # (3, B*nW, heads, N, hd)
    q, k, v = qkv[0], qkv[1], qkv[2]

    def l2n(t):  # F.normalize(dim=-1), eps=1e-12
        n = jnp.sqrt(jnp.sum(t * t, axis=-1, keepdims=True))
        return t / jnp.maximum(n, 1e-12)

    logit_scale = jnp.exp(jnp.minimum(bp["logit_scale"], math.log(100.0)))   # (heads,1,1)
    q = l2n(q) * logit_scale.reshape(1, num_heads, 1, 1)       # fold per-head scale into q
    k = l2n(k)

    rel_bias = relative_position_bias_v2(bp, rel_index, coords_table, num_heads, N)
    if shifted:
        am = jnp.asarray(make_attn_mask(pH, pW, ws, ss))       # (nW, N, N)
        bias = rel_bias[None] + am[:, None]                    # (nW, heads, N, N)
    else:
        bias = rel_bias[None]                                  # (1, heads, N, N)

    out = pallas_window_attention(q, k, v, bias)               # (B*nW, heads, N, hd)
    out = jnp.transpose(out, (0, 2, 1, 3)).reshape(B * nW * N, C)
    out = pallas_matmul(out, bp["proj_w"].T, bias=bp["proj_b"])

    out = out.reshape(B, nWh, nWw, ws[0], ws[1], C)
    out = jnp.transpose(out, (0, 1, 3, 2, 4, 5)).reshape(B, pH, pW, C)
    if shifted:
        out = jnp.roll(out, shift=(ss[0], ss[1]), axis=(1, 2))
    return out[:, :H, :W, :]


def swin_block_v2(x, bp, rel_index, coords_table, num_heads, ws, ss):
    # TODO(synk): dropout / attention-dropout / stochastic-depth are eval-mode identities here.
    B, H, W, C = x.shape
    attn = shifted_window_attention_v2(x, bp, rel_index, coords_table, num_heads, ws, ss)
    x = x + layer_norm(attn.reshape(-1, C), bp["norm1_g"], bp["norm1_b"]).reshape(B, H, W, C)
    h = pallas_matmul(x.reshape(-1, C), bp["mlp_w1"].T, bias=bp["mlp_b1"])
    h = jax.nn.gelu(h, approximate=False)                      # exact (erf) GELU, in glue
    h = pallas_matmul(h, bp["mlp_w2"].T, bias=bp["mlp_b2"])
    x = x + layer_norm(h, bp["norm2_g"], bp["norm2_b"]).reshape(B, H, W, C)
    return x


def u_transformer(x, prm, num_heads, window_size, rel_index, coords_table):
    down = down_block(x, prm["down"])
    y = jnp.transpose(down, (0, 2, 3, 1))                      # NHWC for attention
    for i, bp in enumerate(prm["blocks"]):
        shift = [0, 0] if i % 2 == 0 else [window_size[0] // 2, window_size[1] // 2]
        y = swin_block_v2(y, bp, rel_index, coords_table, num_heads, window_size, shift)
    y = jnp.transpose(y, (0, 3, 1, 2))
    return up_block(y, down, prm["up"])


def fc_head(x, prm, input_var, lat, long):
    B, C, H4, W4 = x.shape
    y = jnp.transpose(x, (0, 2, 3, 1))                                           # Permute [0,2,3,1]
    y = pallas_matmul(y.reshape(-1, C), prm["fc1_w"].T, bias=prm["fc1_b"])
    y = y.reshape(B, H4, W4, input_var)
    y = jnp.transpose(y, (0, 3, 2, 1))                                           # Permute [0,3,2,1]
    y = pallas_matmul(y.reshape(-1, H4), prm["fc2_w"].T, bias=prm["fc2_b"])
    y = y.reshape(B, input_var, W4, lat)
    y = jnp.transpose(y, (0, 1, 3, 2))                                           # Permute [0,1,3,2]
    y = pallas_matmul(y.reshape(-1, W4), prm["fc3_w"].T, bias=prm["fc3_b"])
    return y.reshape(B, input_var, lat, long)


def fuxi_forward(x, prm, *, input_var, heads, lat, long, window_size, rel_index, coords_table):
    y = space_time_cube_embedding(x, prm)
    y = u_transformer(y, prm, heads, list(window_size), rel_index, coords_table)
    return fc_head(y, prm, input_var, lat, long)


# ----------------------------------------------------------------------------- deterministic parameter init
def init_params(key, V, C, nblocks, lat, long, heads):
    keys = iter(jax.random.split(key, 256))

    def rnd(shape, scale=0.05):
        return (scale * jax.random.normal(next(keys), shape)).astype(jnp.float32)

    ones = lambda s: jnp.ones(s, jnp.float32)
    zeros = lambda s: jnp.zeros(s, jnp.float32)

    def res_params(c):
        return dict(conv1_w=rnd((c, c, 3, 3)), conv1_b=rnd((c,)),
                    gn1_g=ones((c,)), gn1_b=zeros((c,)),
                    conv2_w=rnd((c, c, 3, 3)), conv2_b=rnd((c,)),
                    gn2_g=ones((c,)), gn2_b=zeros((c,)))

    prm = dict(
        emb_conv_w=rnd((C, V, 2, 4, 4)), emb_conv_b=rnd((C,)),
        emb_ln_g=ones((C,)), emb_ln_b=zeros((C,)),
        down=dict(conv1_w=rnd((C, C, 3, 3)), conv1_b=rnd((C,)), res=res_params(C),
                  adj_w=rnd((C, 2 * C, 1, 1)), adj_b=rnd((C,))),
        up=dict(up_w=rnd((2 * C, C, 2, 2)), up_b=rnd((C,)), res=res_params(C),
                adj_w=rnd((C, 2 * C, 1, 1)), adj_b=rnd((C,))),
        fc1_w=rnd((V, C)), fc1_b=rnd((V,)),
        fc2_w=rnd((lat, lat // 4)), fc2_b=rnd((lat,)),
        fc3_w=rnd((long, long // 4)), fc3_b=rnd((long,)),
    )
    blocks = []
    for _ in range(nblocks):
        qkv_b = rnd((3 * C,)).at[C:2 * C].set(0.0)             # SwinV2: k-bias is zero
        blocks.append(dict(
            norm1_g=ones((C,)), norm1_b=zeros((C,)),
            norm2_g=ones((C,)), norm2_b=zeros((C,)),
            qkv_w=rnd((3 * C, C)), qkv_b=qkv_b,
            proj_w=rnd((C, C)), proj_b=rnd((C,)),
            logit_scale=jnp.full((heads, 1, 1), math.log(10.0), jnp.float32),
            cpb_w1=rnd((512, 2)), cpb_b1=rnd((512,)), cpb_w2=rnd((heads, 512)),
            mlp_w1=rnd((4 * C, C)), mlp_b1=rnd((4 * C,)),
            mlp_w2=rnd((C, 4 * C)), mlp_b2=rnd((C,)),
        ))
    prm["blocks"] = blocks
    return prm


# ----------------------------------------------------------------------------- main
if __name__ == "__main__":
    B, INPUT_VAR, CHANNELS = 2, 4, 16
    TRANSFORMER_BLOCKS, HEADS = 2, 4
    LAT, LONG = 32, 32
    WINDOW = (8, 8)

    key = jax.random.PRNGKey(0)
    pkey, xkey = jax.random.split(key)
    params = init_params(pkey, INPUT_VAR, CHANNELS, TRANSFORMER_BLOCKS, LAT, LONG, HEADS)

    # forward input: (B, 2 timesteps, input_var, lat, long)  -- same as FuXi.forward(x)
    x = jax.random.normal(xkey, (B, 2, INPUT_VAR, LAT, LONG), dtype=jnp.float32)

    rel_index = make_relative_position_index(list(WINDOW))
    coords_table = make_relative_coords_table(list(WINDOW))

    fwd = jax.jit(functools.partial(
        fuxi_forward, input_var=INPUT_VAR, heads=HEADS, lat=LAT, long=LONG,
        window_size=WINDOW, rel_index=rel_index, coords_table=coords_table))

    out = jax.block_until_ready(fwd(x, params))

    assert out.shape == (B, INPUT_VAR, LAT, LONG), out.shape
    assert bool(jnp.all(jnp.isfinite(out)))
    print("KERNEL_OK")
</pallas_src>

<mosaic_0001>
module attributes {stable_mosaic.version = 11 : i64} {
  func.func @_mm_kernel(%arg0: i32, %arg1: i32, %arg2: i32, %arg3: memref<128x128xbf16, #tpu.memory_space<vmem>>, %arg4: memref<128x128xbf16, #tpu.memory_space<vmem>>, %arg5: memref<1x128xf32, #tpu.memory_space<vmem>>, %arg6: memref<128x128xf32, #tpu.memory_space<vmem>>, %arg7: memref<128x128xf32, #tpu.memory_space<vmem>>) attributes {dimension_semantics = [#tpu.dimension_semantics<parallel>, #tpu.dimension_semantics<parallel>, #tpu.dimension_semantics<arbitrary>], iteration_bounds = array<i64: 1, 1, 1>, scalar_prefetch = 0 : i64, scratch_operands = 1 : i64, tpu.core_type = #tpu.core_type<tc>, window_params = [{transform_indices = @transform_0, window_bounds = array<i64: 128, 128>}, {transform_indices = @transform_1, window_bounds = array<i64: 128, 128>}, {transform_indices = @transform_2, window_bounds = array<i64: 1, 128>}, {transform_indices = @transform_3, window_bounds = array<i64: 128, 128>}]} {
    %c0_i32 = arith.constant 0 : i32
    %0 = arith.cmpi eq, %arg2, %c0_i32 : i32
    %1 = arith.extui %0 : i1 to i32
    %c0_i32_0 = arith.constant 0 : i32
    %2 = arith.cmpi ne, %1, %c0_i32_0 : i32
    scf.if %2 {
      %cst_10 = arith.constant 0.000000e+00 : f32
      %12 = vector.broadcast %cst_10 : f32 to vector<128x128xf32>
      %c0_11 = arith.constant 0 : index
      %c0_12 = arith.constant 0 : index
      %13 = vector.load %arg7[%c0_11, %c0_12] : memref<128x128xf32, #tpu.memory_space<vmem>>, vector<128x128xf32>
      tpu.vector_store %arg7[%c0_11, %c0_12], %12 {strides = array<i32>} : memref<128x128xf32, #tpu.memory_space<vmem>>, vector<128x128xf32>,
    } else {
    }
    %c0 = arith.constant 0 : index
    %c0_1 = arith.constant 0 : index
    %3 = vector.load %arg7[%c0, %c0_1] : memref<128x128xf32, #tpu.memory_space<vmem>>, vector<128x128xf32>
    %c0_2 = arith.constant 0 : index
    %c0_3 = arith.constant 0 : index
    %4 = vector.load %arg3[%c0_2, %c0_3] : memref<128x128xbf16, #tpu.memory_space<vmem>>, vector<128x128xbf16>
    %c0_4 = arith.constant 0 : index
    %c0_5 = arith.constant 0 : index
    %5 = vector.load %arg4[%c0_4, %c0_5] : memref<128x128xbf16, #tpu.memory_space<vmem>>, vector<128x128xbf16>
    %cst = arith.constant dense<0.000000e+00> : vector<128x128xf32>
    %6 = tpu.matmul %4, %5, %cst {dimension_numbers = #tpu.dot_dimension_numbers<[1], [0], [0], [1], [0, 0, 1, 1], [], []>} : vector<128x128xbf16>, vector<128x128xbf16>, vector<128x128xf32> -> vector<128x128xf32>
    %7 = arith.addf %3, %6 : vector<128x128xf32>
    %c0_6 = arith.constant 0 : index
    %c0_7 = arith.constant 0 : index
    %8 = vector.load %arg7[%c0_6, %c0_7] : memref<128x128xf32, #tpu.memory_space<vmem>>, vector<128x128xf32>
    tpu.vector_store %arg7[%c0_6, %c0_7], %7 {strides = array<i32>} : memref<128x128xf32, #tpu.memory_space<vmem>>, vector<128x128xf32>,
    %c0_i32_8 = arith.constant 0 : i32
    %9 = arith.cmpi eq, %arg2, %c0_i32_8 : i32
    %10 = arith.extui %9 : i1 to i32
    %c0_i32_9 = arith.constant 0 : i32
    %11 = arith.cmpi ne, %10, %c0_i32_9 : i32
    scf.if %11 {
      %c0_10 = arith.constant 0 : index
      %c0_11 = arith.constant 0 : index
      %12 = vector.load %arg7[%c0_10, %c0_11] : memref<128x128xf32, #tpu.memory_space<vmem>>, vector<128x128xf32>
      %c0_12 = arith.constant 0 : index
      %c0_13 = arith.constant 0 : index
      %13 = vector.load %arg5[%c0_12, %c0_13] : memref<1x128xf32, #tpu.memory_space<vmem>>, vector<1x128xf32>
      %14 = vector.broadcast %13 : vector<1x128xf32> to vector<128x128xf32>
      %15 = arith.addf %12, %14 : vector<128x128xf32>
      %c0_14 = arith.constant 0 : index
      %c0_15 = arith.constant 0 : index
      %16 = vector.load %arg6[%c0_14, %c0_15] : memref<128x128xf32, #tpu.memory_space<vmem>>, vector<128x128xf32>
      tpu.vector_store %arg6[%c0_14, %c0_15], %15 {strides = array<i32>} : memref<128x128xf32, #tpu.memory_space<vmem>>, vector<128x128xf32>,
    } else {
    }
    return
  }
  func.func @transform_0(%arg0: i32, %arg1: i32, %arg2: i32) -> (i32, i32) {
    %c0_i32 = arith.constant 0 : i32
    return %arg0, %arg2 : i32, i32
  }
  func.func @transform_1(%arg0: i32, %arg1: i32, %arg2: i32) -> (i32, i32) {
    %c0_i32 = arith.constant 0 : i32
    return %arg2, %arg1 : i32, i32
  }
  func.func @transform_2(%arg0: i32, %arg1: i32, %arg2: i32) -> (i32, i32) {
    %c0_i32 = arith.constant 0 : i32
    %c0_i32_0 = arith.constant 0 : i32
    return %c0_i32, %arg1 : i32, i32
  }
  func.func @transform_3(%arg0: i32, %arg1: i32, %arg2: i32) -> (i32, i32) {
    %c0_i32 = arith.constant 0 : i32
    return %arg0, %arg1 : i32, i32
  }
}

module attributes {stable_mosaic.version = 11 : i64} {
  func.func @_rownorm_kernel(%arg0: i32, %arg1: i32, %arg2: memref<1x128x128xf32, #tpu.memory_space<vmem>>, %arg3: memref<1x1x128xf32, #tpu.memory_space<vmem>>, %arg4: memref<1x1x128xf32, #tpu.memory_space<vmem>>, %arg5: memref<1x128x128xf32, #tpu.memory_space<vmem>>) attributes {dimension_semantics = [#tpu.dimension_semantics<parallel>, #tpu.dimension_semantics<parallel>], iteration_bounds = array<i64: 1, 1>, scalar_prefetch = 0 : i64, scratch_operands = 0 : i64, tpu.core_type = #tpu.core_type<tc>, window_params = [{transform_indices = @transform_0, window_bounds = array<i64: 1, 128, 128>}, {transform_indices = @transform_1, window_bounds = array<i64: 1, 1, 128>}, {transform_indices = @transform_2, window_bounds = array<i64: 1, 1, 128>}, {transform_indices = @transform_3, window_bounds = array<i64: 1, 128, 128>}]} {
    %c0 = arith.constant 0 : index
    %c0_0 = arith.constant 0 : index
    %c0_1 = arith.constant 0 : index
    %0 = vector.load %arg2[%c0, %c0_0, %c0_1] : memref<1x128x128xf32, #tpu.memory_space<vmem>>, vector<1x128x128xf32>
    %1 = vector.shape_cast %0 : vector<1x128x128xf32> to vector<128x128xf32>
    %c0_2 = arith.constant 0 : index
    %c0_3 = arith.constant 0 : index
    %c0_4 = arith.constant 0 : index
    %2 = vector.load %arg3[%c0_2, %c0_3, %c0_4] : memref<1x1x128xf32, #tpu.memory_space<vmem>>, vector<1x1x128xf32>
    %3 = vector.shape_cast %2 : vector<1x1x128xf32> to vector<1x128xf32>
    %c0_5 = arith.constant 0 : index
    %c0_6 = arith.constant 0 : index
    %c0_7 = arith.constant 0 : index
    %4 = vector.load %arg4[%c0_5, %c0_6, %c0_7] : memref<1x1x128xf32, #tpu.memory_space<vmem>>, vector<1x1x128xf32>
    %5 = vector.shape_cast %4 : vector<1x1x128xf32> to vector<1x128xf32>
    %6 = tpu.iota {dimensions = array<i32: 1>} : vector<128x128xi32>
    %c16_i32 = arith.constant 16 : i32
    %7 = vector.broadcast %c16_i32 : i32 to vector<128x128xi32>
    %8 = arith.cmpi slt, %6, %7 : vector<128x128xi32>
    %cst = arith.constant 0.000000e+00 : f32
    %9 = vector.broadcast %cst : f32 to vector<128x128xf32>
    %10 = arith.select %8, %1, %9 : vector<128x128xi1>, vector<128x128xf32>
    %cst_8 = arith.constant dense<0.000000e+00> : vector<128xf32>
    %11 = vector.multi_reduction <add>, %10, %cst_8 [1] : vector<128x128xf32> to vector<128xf32>
    %12 = vector.shape_cast %11 : vector<128xf32> to vector<128x1xf32>
    %cst_9 = arith.constant 6.250000e-02 : f32
    %13 = vector.broadcast %cst_9 : f32 to vector<128x1xf32>
    %14 = arith.mulf %12, %13 : vector<128x1xf32>
    %15 = vector.broadcast %14 : vector<128x1xf32> to vector<128x128xf32>
    %16 = arith.subf %1, %15 : vector<128x128xf32>
    %cst_10 = arith.constant 0.000000e+00 : f32
    %17 = vector.broadcast %cst_10 : f32 to vector<128x128xf32>
    %18 = arith.select %8, %16, %17 : vector<128x128xi1>, vector<128x128xf32>
    %19 = arith.mulf %18, %18 : vector<128x128xf32>
    %cst_11 = arith.constant dense<0.000000e+00> : vector<128xf32>
    %20 = vector.multi_reduction <add>, %19, %cst_11 [1] : vector<128x128xf32> to vector<128xf32>
    %21 = vector.shape_cast %20 : vector<128xf32> to vector<128x1xf32>
    %cst_12 = arith.constant 6.250000e-02 : f32
    %22 = vector.broadcast %cst_12 : f32 to vector<128x1xf32>
    %23 = arith.mulf %21, %22 : vector<128x1xf32>
    %24 = vector.broadcast %14 : vector<128x1xf32> to vector<128x128xf32>
    %25 = arith.subf %1, %24 : vector<128x128xf32>
    %cst_13 = arith.constant 9.99999974E-6 : f32
    %26 = vector.broadcast %cst_13 : f32 to vector<128x1xf32>
    %27 = arith.addf %23, %26 : vector<128x1xf32>
    %28 = math.rsqrt %27 : vector<128x1xf32>
    %29 = vector.broadcast %28 : vector<128x1xf32> to vector<128x128xf32>
    %30 = arith.mulf %25, %29 : vector<128x128xf32>
    %31 = vector.broadcast %3 : vector<1x128xf32> to vector<128x128xf32>
    %32 = arith.mulf %30, %31 : vector<128x128xf32>
    %33 = vector.broadcast %5 : vector<1x128xf32> to vector<128x128xf32>
    %34 = arith.addf %32, %33 : vector<128x128xf32>
    %c0_14 = arith.constant 0 : index
    %c0_15 = arith.constant 0 : index
    %c0_16 = arith.constant 0 : index
    %35 = vector.load %arg5[%c0_14, %c0_15, %c0_16] : memref<1x128x128xf32, #tpu.memory_space<vmem>>, vector<1x128x128xf32>
    %36 = vector.shape_cast %35 : vector<1x128x128xf32> to vector<128x128xf32>
    %37 = vector.shape_cast %34 : vector<128x128xf32> to vector<1x128x128xf32>
    tpu.vector_store %arg5[%c0_14, %c0_15, %c0_16], %37 {strides = array<i32>} : memref<1x128x128xf32, #tpu.memory_space<vmem>>, vector<1x128x128xf32>,
    return
  }
  func.func @transform_0(%arg0: i32, %arg1: i32) -> (i32, i32, i32) {
    %c0_i32 = arith.constant 0 : i32
    %c0_i32_0 = arith.constant 0 : i32
    return %arg0, %arg1, %c0_i32 : i32, i32, i32
  }
  func.func @transform_1(%arg0: i32, %arg1: i32) -> (i32, i32, i32) {
    %c0_i32 = arith.constant 0 : i32
    %c0_i32_0 = arith.constant 0 : i32
    %c0_i32_1 = arith.constant 0 : i32
    return %arg0, %c0_i32, %c0_i32_0 : i32, i32, i32
  }
  func.func @transform_2(%arg0: i32, %arg1: i32) -> (i32, i32, i32) {
    %c0_i32 = arith.constant 0 : i32
    %c0_i32_0 = arith.constant 0 : i32
    %c0_i32_1 = arith.constant 0 : i32
    return %arg0, %c0_i32, %c0_i32_0 : i32, i32, i32
  }
  func.func @transform_3(%arg0: i32, %arg1: i32) -> (i32, i32, i32) {
    %c0_i32 = arith.constant 0 : i32
    %c0_i32_0 = arith.constant 0 : i32
    return %arg0, %arg1, %c0_i32 : i32, i32, i32
  }
}

module attributes {stable_mosaic.version = 11 : i64} {
  func.func @_rownorm_kernel(%arg0: i32, %arg1: i32, %arg2: memref<1x8x128xf32, #tpu.memory_space<vmem>>, %arg3: memref<1x1x128xf32, #tpu.memory_space<vmem>>, %arg4: memref<1x1x128xf32, #tpu.memory_space<vmem>>, %arg5: memref<1x8x128xf32, #tpu.memory_space<vmem>>) attributes {dimension_semantics = [#tpu.dimension_semantics<parallel>, #tpu.dimension_semantics<parallel>], iteration_bounds = array<i64: 2, 1>, scalar_prefetch = 0 : i64, scratch_operands = 0 : i64, tpu.core_type = #tpu.core_type<tc>, window_params = [{transform_indices = @transform_0, window_bounds = array<i64: 1, 8, 128>}, {transform_indices = @transform_1, window_bounds = array<i64: 1, 1, 128>}, {transform_indices = @transform_2, window_bounds = array<i64: 1, 1, 128>}, {transform_indices = @transform_3, window_bounds = array<i64: 1, 8, 128>}]} {
    %c0 = arith.constant 0 : index
    %c0_0 = arith.constant 0 : index
    %c0_1 = arith.constant 0 : index
    %0 = vector.load %arg2[%c0, %c0_0, %c0_1] : memref<1x8x128xf32, #tpu.memory_space<vmem>>, vector<1x8x128xf32>
    %1 = vector.shape_cast %0 : vector<1x8x128xf32> to vector<8x128xf32>
    %c0_2 = arith.constant 0 : index
    %c0_3 = arith.constant 0 : index
    %c0_4 = arith.constant 0 : index
    %2 = vector.load %arg3[%c0_2, %c0_3, %c0_4] : memref<1x1x128xf32, #tpu.memory_space<vmem>>, vector<1x1x128xf32>
    %3 = vector.shape_cast %2 : vector<1x1x128xf32> to vector<1x128xf32>
    %c0_5 = arith.constant 0 : index
    %c0_6 = arith.constant 0 : index
    %c0_7 = arith.constant 0 : index
    %4 = vector.load %arg4[%c0_5, %c0_6, %c0_7] : memref<1x1x128xf32, #tpu.memory_space<vmem>>, vector<1x1x128xf32>
    %5 = vector.shape_cast %4 : vector<1x1x128xf32> to vector<1x128xf32>
    %6 = tpu.iota {dimensions = array<i32: 1>} : vector<8x128xi32>
    %c128_i32 = arith.constant 128 : i32
    %7 = vector.broadcast %c128_i32 : i32 to vector<8x128xi32>
    %8 = arith.cmpi slt, %6, %7 : vector<8x128xi32>
    %cst = arith.constant 0.000000e+00 : f32
    %9 = vector.broadcast %cst : f32 to vector<8x128xf32>
    %10 = arith.select %8, %1, %9 : vector<8x128xi1>, vector<8x128xf32>
    %cst_8 = arith.constant dense<0.000000e+00> : vector<8xf32>
    %11 = vector.multi_reduction <add>, %10, %cst_8 [1] : vector<8x128xf32> to vector<8xf32>
    %12 = vector.shape_cast %11 : vector<8xf32> to vector<8x1xf32>
    %cst_9 = arith.constant 7.812500e-03 : f32
    %13 = vector.broadcast %cst_9 : f32 to vector<8x1xf32>
    %14 = arith.mulf %12, %13 : vector<8x1xf32>
    %15 = vector.broadcast %14 : vector<8x1xf32> to vector<8x128xf32>
    %16 = arith.subf %1, %15 : vector<8x128xf32>
    %cst_10 = arith.constant 0.000000e+00 : f32
    %17 = vector.broadcast %cst_10 : f32 to vector<8x128xf32>
    %18 = arith.select %8, %16, %17 : vector<8x128xi1>, vector<8x128xf32>
    %19 = arith.mulf %18, %18 : vector<8x128xf32>
    %cst_11 = arith.constant dense<0.000000e+00> : vector<8xf32>
    %20 = vector.multi_reduction <add>, %19, %cst_11 [1] : vector<8x128xf32> to vector<8xf32>
    %21 = vector.shape_cast %20 : vector<8xf32> to vector<8x1xf32>
    %cst_12 = arith.constant 7.812500e-03 : f32
    %22 = vector.broadcast %cst_12 : f32 to vector<8x1xf32>
    %23 = arith.mulf %21, %22 : vector<8x1xf32>
    %24 = vector.broadcast %14 : vector<8x1xf32> to vector<8x128xf32>
    %25 = arith.subf %1, %24 : vector<8x128xf32>
    %cst_13 = arith.constant 9.99999974E-6 : f32
    %26 = vector.broadcast %cst_13 : f32 to vector<8x1xf32>
    %27 = arith.addf %23, %26 : vector<8x1xf32>
    %28 = math.rsqrt %27 : vector<8x1xf32>
    %29 = vector.broadcast %28 : vector<8x1xf32> to vector<8x128xf32>
    %30 = arith.mulf %25, %29 : vector<8x128xf32>
    %31 = vector.broadcast %3 : vector<1x128xf32> to vector<8x128xf32>
    %32 = arith.mulf %30, %31 : vector<8x128xf32>
    %33 = vector.broadcast %5 : vector<1x128xf32> to vector<8x128xf32>
    %34 = arith.addf %32, %33 : vector<8x128xf32>
    %cst_14 = arith.constant 0.000000e+00 : f32
    %35 = vector.broadcast %cst_14 : f32 to vector<8x128xf32>
    %36 = arith.subf %35, %34 : vector<8x128xf32>
    %37 = math.exp %36 : vector<8x128xf32>
    %cst_15 = arith.constant 1.000000e+00 : f32
    %38 = vector.broadcast %cst_15 : f32 to vector<8x128xf32>
    %39 = arith.addf %38, %37 : vector<8x128xf32>
    %40 = tpu.reciprocal %39 {approx = true} : vector<8x128xf32> -> vector<8x128xf32>
    %41 = arith.mulf %34, %40 : vector<8x128xf32>
    %c0_16 = arith.constant 0 : index
    %c0_17 = arith.constant 0 : index
    %c0_18 = arith.constant 0 : index
    %42 = vector.load %arg5[%c0_16, %c0_17, %c0_18] : memref<1x8x128xf32, #tpu.memory_space<vmem>>, vector<1x8x128xf32>
    %43 = vector.shape_cast %42 : vector<1x8x128xf32> to vector<8x128xf32>
    %44 = vector.shape_cast %41 : vector<8x128xf32> to vector<1x8x128xf32>
    tpu.vector_store %arg5[%c0_16, %c0_17, %c0_18], %44 {strides = array<i32>} : memref<1x8x128xf32, #tpu.memory_space<vmem>>, vector<1x8x128xf32>,
    return
  }
  func.func @transform_0(%arg0: i32, %arg1: i32) -> (i32, i32, i32) {
    %c0_i32 = arith.constant 0 : i32
    %c0_i32_0 = arith.constant 0 : i32
    return %arg0, %arg1, %c0_i32 : i32, i32, i32
  }
  func.func @transform_1(%arg0: i32, %arg1: i32) -> (i32, i32, i32) {
    %c0_i32 = arith.constant 0 : i32
    %c0_i32_0 = arith.constant 0 : i32
    %c0_i32_1 = arith.constant 0 : i32
    return %arg0, %c0_i32, %c0_i32_0 : i32, i32, i32
  }
  func.func @transform_2(%arg0: i32, %arg1: i32) -> (i32, i32, i32) {
    %c0_i32 = arith.constant 0 : i32
    %c0_i32_0 = arith.constant 0 : i32
    %c0_i32_1 = arith.constant 0 : i32
    return %arg0, %c0_i32, %c0_i32_0 : i32, i32, i32
  }
  func.func @transform_3(%arg0: i32, %arg1: i32) -> (i32, i32, i32) {
    %c0_i32 = arith.constant 0 : i32
    %c0_i32_0 = arith.constant 0 : i32
    return %arg0, %arg1, %c0_i32 : i32, i32, i32
  }
}

module attributes {stable_mosaic.version = 11 : i64} {
  func.func @_mm_kernel(%arg0: i32, %arg1: i32, %arg2: i32, %arg3: memref<32x128xbf16, #tpu.memory_space<vmem>>, %arg4: memref<128x128xbf16, #tpu.memory_space<vmem>>, %arg5: memref<1x128xf32, #tpu.memory_space<vmem>>, %arg6: memref<32x128xf32, #tpu.memory_space<vmem>>, %arg7: memref<32x128xf32, #tpu.memory_space<vmem>>) attributes {dimension_semantics = [#tpu.dimension_semantics<parallel>, #tpu.dimension_semantics<parallel>, #tpu.dimension_semantics<arbitrary>], iteration_bounds = array<i64: 1, 1, 1>, scalar_prefetch = 0 : i64, scratch_operands = 1 : i64, tpu.core_type = #tpu.core_type<tc>, window_params = [{transform_indices = @transform_0, window_bounds = array<i64: 32, 128>}, {transform_indices = @transform_1, window_bounds = array<i64: 128, 128>}, {transform_indices = @transform_2, window_bounds = array<i64: 1, 128>}, {transform_indices = @transform_3, window_bounds = array<i64: 32, 128>}]} {
    %c0_i32 = arith.constant 0 : i32
    %0 = arith.cmpi eq, %arg2, %c0_i32 : i32
    %1 = arith.extui %0 : i1 to i32
    %c0_i32_0 = arith.constant 0 : i32
    %2 = arith.cmpi ne, %1, %c0_i32_0 : i32
    scf.if %2 {
      %cst_10 = arith.constant 0.000000e+00 : f32
      %12 = vector.broadcast %cst_10 : f32 to vector<32x128xf32>
      %c0_11 = arith.constant 0 : index
      %c0_12 = arith.constant 0 : index
      %13 = vector.load %arg7[%c0_11, %c0_12] : memref<32x128xf32, #tpu.memory_space<vmem>>, vector<32x128xf32>
      tpu.vector_store %arg7[%c0_11, %c0_12], %12 {strides = array<i32>} : memref<32x128xf32, #tpu.memory_space<vmem>>, vector<32x128xf32>,
    } else {
    }
    %c0 = arith.constant 0 : index
    %c0_1 = arith.constant 0 : index
    %3 = vector.load %arg7[%c0, %c0_1] : memref<32x128xf32, #tpu.memory_space<vmem>>, vector<32x128xf32>
    %c0_2 = arith.constant 0 : index
    %c0_3 = arith.constant 0 : index
    %4 = vector.load %arg3[%c0_2, %c0_3] : memref<32x128xbf16, #tpu.memory_space<vmem>>, vector<32x128xbf16>
    %c0_4 = arith.constant 0 : index
    %c0_5 = arith.constant 0 : index
    %5 = vector.load %arg4[%c0_4, %c0_5] : memref<128x128xbf16, #tpu.memory_space<vmem>>, vector<128x128xbf16>
    %cst = arith.constant dense<0.000000e+00> : vector<32x128xf32>
    %6 = tpu.matmul %4, %5, %cst {dimension_numbers = #tpu.dot_dimension_numbers<[1], [0], [0], [1], [0, 0, 1, 1], [], []>} : vector<32x128xbf16>, vector<128x128xbf16>, vector<32x128xf32> -> vector<32x128xf32>
    %7 = arith.addf %3, %6 : vector<32x128xf32>
    %c0_6 = arith.constant 0 : index
    %c0_7 = arith.constant 0 : index
    %8 = vector.load %arg7[%c0_6, %c0_7] : memref<32x128xf32, #tpu.memory_space<vmem>>, vector<32x128xf32>
    tpu.vector_store %arg7[%c0_6, %c0_7], %7 {strides = array<i32>} : memref<32x128xf32, #tpu.memory_space<vmem>>, vector<32x128xf32>,
    %c0_i32_8 = arith.constant 0 : i32
    %9 = arith.cmpi eq, %arg2, %c0_i32_8 : i32
    %10 = arith.extui %9 : i1 to i32
    %c0_i32_9 = arith.constant 0 : i32
    %11 = arith.cmpi ne, %10, %c0_i32_9 : i32
    scf.if %11 {
      %c0_10 = arith.constant 0 : index
      %c0_11 = arith.constant 0 : index
      %12 = vector.load %arg7[%c0_10, %c0_11] : memref<32x128xf32, #tpu.memory_space<vmem>>, vector<32x128xf32>
      %c0_12 = arith.constant 0 : index
      %c0_13 = arith.constant 0 : index
      %13 = vector.load %arg5[%c0_12, %c0_13] : memref<1x128xf32, #tpu.memory_space<vmem>>, vector<1x128xf32>
      %14 = vector.broadcast %13 : vector<1x128xf32> to vector<32x128xf32>
      %15 = arith.addf %12, %14 : vector<32x128xf32>
      %c0_14 = arith.constant 0 : index
      %c0_15 = arith.constant 0 : index
      %16 = vector.load %arg6[%c0_14, %c0_15] : memref<32x128xf32, #tpu.memory_space<vmem>>, vector<32x128xf32>
      tpu.vector_store %arg6[%c0_14, %c0_15], %15 {strides = array<i32>} : memref<32x128xf32, #tpu.memory_space<vmem>>, vector<32x128xf32>,
    } else {
    }
    return
  }
  func.func @transform_0(%arg0: i32, %arg1: i32, %arg2: i32) -> (i32, i32) {
    %c0_i32 = arith.constant 0 : i32
    return %arg0, %arg2 : i32, i32
  }
  func.func @transform_1(%arg0: i32, %arg1: i32, %arg2: i32) -> (i32, i32) {
    %c0_i32 = arith.constant 0 : i32
    return %arg2, %arg1 : i32, i32
  }
  func.func @transform_2(%arg0: i32, %arg1: i32, %arg2: i32) -> (i32, i32) {
    %c0_i32 = arith.constant 0 : i32
    %c0_i32_0 = arith.constant 0 : i32
    return %c0_i32, %arg1 : i32, i32
  }
  func.func @transform_3(%arg0: i32, %arg1: i32, %arg2: i32) -> (i32, i32) {
    %c0_i32 = arith.constant 0 : i32
    return %arg0, %arg1 : i32, i32
  }
}

module attributes {stable_mosaic.version = 11 : i64} {
  func.func @_attn_kernel(%arg0: i32, %arg1: memref<1x4x64x4xf32, #tpu.memory_space<vmem>>, %arg2: memref<1x4x64x4xf32, #tpu.memory_space<vmem>>, %arg3: memref<1x4x64x4xf32, #tpu.memory_space<vmem>>, %arg4: memref<1x4x64x64xf32, #tpu.memory_space<vmem>>, %arg5: memref<1x4x64x4xf32, #tpu.memory_space<vmem>>) attributes {dimension_semantics = [#tpu.dimension_semantics<parallel>], iteration_bounds = array<i64: 2>, scalar_prefetch = 0 : i64, scratch_operands = 0 : i64, tpu.core_type = #tpu.core_type<tc>, window_params = [{transform_indices = @transform_0, window_bounds = array<i64: 1, 4, 64, 4>}, {transform_indices = @transform_1, window_bounds = array<i64: 1, 4, 64, 4>}, {transform_indices = @transform_2, window_bounds = array<i64: 1, 4, 64, 4>}, {transform_indices = @transform_3, window_bounds = array<i64: 1, 4, 64, 64>}, {transform_indices = @transform_4, window_bounds = array<i64: 1, 4, 64, 4>}]} {
    %c0 = arith.constant 0 : index
    %c0_0 = arith.constant 0 : index
    %c0_1 = arith.constant 0 : index
    %c0_2 = arith.constant 0 : index
    %0 = vector.load %arg1[%c0, %c0_0, %c0_1, %c0_2] : memref<1x4x64x4xf32, #tpu.memory_space<vmem>>, vector<1x4x64x4xf32>
    %1 = vector.shape_cast %0 : vector<1x4x64x4xf32> to vector<4x64x4xf32>
    %c0_3 = arith.constant 0 : index
    %c0_4 = arith.constant 0 : index
    %c0_5 = arith.constant 0 : index
    %c0_6 = arith.constant 0 : index
    %2 = vector.load %arg2[%c0_3, %c0_4, %c0_5, %c0_6] : memref<1x4x64x4xf32, #tpu.memory_space<vmem>>, vector<1x4x64x4xf32>
    %3 = vector.shape_cast %2 : vector<1x4x64x4xf32> to vector<4x64x4xf32>
    %c0_7 = arith.constant 0 : index
    %c0_8 = arith.constant 0 : index
    %c0_9 = arith.constant 0 : index
    %c0_10 = arith.constant 0 : index
    %4 = vector.load %arg3[%c0_7, %c0_8, %c0_9, %c0_10] : memref<1x4x64x4xf32, #tpu.memory_space<vmem>>, vector<1x4x64x4xf32>
    %5 = vector.shape_cast %4 : vector<1x4x64x4xf32> to vector<4x64x4xf32>
    "tpu.trace_start"() <{level = 10 : i32, message = "hqd,hkd->hqk"}> : () -> ()
    %cst = arith.constant dense<0.000000e+00> : vector<4x64x64xf32>
    %6 = tpu.matmul %1, %3, %cst {dimension_numbers = #tpu.dot_dimension_numbers<[2], [2], [1], [1], [0, 0, 0, 1, 1, 1], [0], [0]>} : vector<4x64x4xf32>, vector<4x64x4xf32>, vector<4x64x64xf32> -> vector<4x64x64xf32>
    "tpu.trace_stop"() : () -> ()
    %c0_11 = arith.constant 0 : index
    %c0_12 = arith.constant 0 : index
    %c0_13 = arith.constant 0 : index
    %c0_14 = arith.constant 0 : index
    %7 = vector.load %arg4[%c0_11, %c0_12, %c0_13, %c0_14] : memref<1x4x64x64xf32, #tpu.memory_space<vmem>>, vector<1x4x64x64xf32>
    %8 = vector.shape_cast %7 : vector<1x4x64x64xf32> to vector<4x64x64xf32>
    %9 = arith.addf %6, %8 : vector<4x64x64xf32>
    %cst_15 = arith.constant dense<0xFF800000> : vector<4x64xf32>
    %10 = vector.multi_reduction <maximumf>, %9, %cst_15 [2] : vector<4x64x64xf32> to vector<4x64xf32>
    %11 = vector.shape_cast %10 : vector<4x64xf32> to vector<4x64x1xf32>
    %12 = vector.broadcast %11 : vector<4x64x1xf32> to vector<4x64x64xf32>
    %13 = arith.subf %9, %12 : vector<4x64x64xf32>
    %14 = math.exp %13 : vector<4x64x64xf32>
    %cst_16 = arith.constant dense<0.000000e+00> : vector<4x64xf32>
    %15 = vector.multi_reduction <add>, %14, %cst_16 [2] : vector<4x64x64xf32> to vector<4x64xf32>
    %16 = vector.shape_cast %15 : vector<4x64xf32> to vector<4x64x1xf32>
    "tpu.trace_start"() <{level = 10 : i32, message = "hqk,hkd->hqd"}> : () -> ()
    %cst_17 = arith.constant dense<0.000000e+00> : vector<4x64x4xf32>
    %17 = tpu.matmul %14, %5, %cst_17 {dimension_numbers = #tpu.dot_dimension_numbers<[2], [1], [1], [2], [0, 0, 0, 1, 1, 2], [0], [0]>} : vector<4x64x64xf32>, vector<4x64x4xf32>, vector<4x64x4xf32> -> vector<4x64x4xf32>
    "tpu.trace_stop"() : () -> ()
    %18 = tpu.reciprocal %16 {approx = true} : vector<4x64x1xf32> -> vector<4x64x1xf32>
    %19 = vector.broadcast %18 : vector<4x64x1xf32> to vector<4x64x4xf32>
    %20 = arith.mulf %17, %19 : vector<4x64x4xf32>
    %c0_18 = arith.constant 0 : index
    %c0_19 = arith.constant 0 : index
    %c0_20 = arith.constant 0 : index
    %c0_21 = arith.constant 0 : index
    %21 = vector.load %arg5[%c0_18, %c0_19, %c0_20, %c0_21] : memref<1x4x64x4xf32, #tpu.memory_space<vmem>>, vector<1x4x64x4xf32>
    %22 = vector.shape_cast %21 : vector<1x4x64x4xf32> to vector<4x64x4xf32>
    %23 = vector.shape_cast %20 : vector<4x64x4xf32> to vector<1x4x64x4xf32>
    tpu.vector_store %arg5[%c0_18, %c0_19, %c0_20, %c0_21], %23 {strides = array<i32>} : memref<1x4x64x4xf32, #tpu.memory_space<vmem>>, vector<1x4x64x4xf32>,
    return
  }
  func.func @transform_0(%arg0: i32) -> (i32, i32, i32, i32) {
    %c0_i32 = arith.constant 0 : i32
    %c0_i32_0 = arith.constant 0 : i32
    %c0_i32_1 = arith.constant 0 : i32
    %c0_i32_2 = arith.constant 0 : i32
    return %arg0, %c0_i32, %c0_i32_0, %c0_i32_1 : i32, i32, i32, i32
  }
  func.func @transform_1(%arg0: i32) -> (i32, i32, i32, i32) {
    %c0_i32 = arith.constant 0 : i32
    %c0_i32_0 = arith.constant 0 : i32
    %c0_i32_1 = arith.constant 0 : i32
    %c0_i32_2 = arith.constant 0 : i32
    return %arg0, %c0_i32, %c0_i32_0, %c0_i32_1 : i32, i32, i32, i32
  }
  func.func @transform_2(%arg0: i32) -> (i32, i32, i32, i32) {
    %c0_i32 = arith.constant 0 : i32
    %c0_i32_0 = arith.constant 0 : i32
    %c0_i32_1 = arith.constant 0 : i32
    %c0_i32_2 = arith.constant 0 : i32
    return %arg0, %c0_i32, %c0_i32_0, %c0_i32_1 : i32, i32, i32, i32
  }
  func.func @transform_3(%arg0: i32) -> (i32, i32, i32, i32) {
    %c1_i32 = arith.constant 1 : i32
    %c0_i32 = arith.constant 0 : i32
    %0 = arith.cmpi eq, %c1_i32, %c0_i32 : i32
    %c1_i32_0 = arith.constant 1 : i32
    %1 = arith.select %0, %c1_i32_0, %c1_i32 : i32
    %2 = arith.remsi %arg0, %1 : i32
    %c0_i32_1 = arith.constant 0 : i32
    %3 = arith.cmpi ne, %2, %c0_i32_1 : i32
    %c0_i32_2 = arith.constant 0 : i32
    %4 = arith.cmpi slt, %2, %c0_i32_2 : i32
    %c0_i32_3 = arith.constant 0 : i32
    %5 = arith.cmpi slt, %1, %c0_i32_3 : i32
    %6 = arith.xori %4, %5 : i1
    %7 = arith.andi %6, %3 : i1
    %8 = arith.addi %2, %1 : i32
    %9 = arith.select %7, %8, %2 : i32
    %c0_i32_4 = arith.constant 0 : i32
    %c0_i32_5 = arith.constant 0 : i32
    %c0_i32_6 = arith.constant 0 : i32
    %c0_i32_7 = arith.constant 0 : i32
    return %9, %c0_i32_4, %c0_i32_5, %c0_i32_6 : i32, i32, i32, i32
  }
  func.func @transform_4(%arg0: i32) -> (i32, i32, i32, i32) {
    %c0_i32 = arith.constant 0 : i32
    %c0_i32_0 = arith.constant 0 : i32
    %c0_i32_1 = arith.constant 0 : i32
    %c0_i32_2 = arith.constant 0 : i32
    return %arg0, %c0_i32, %c0_i32_0, %c0_i32_1 : i32, i32, i32, i32
  }
}

module attributes {stable_mosaic.version = 11 : i64} {
  func.func @_rownorm_kernel(%arg0: i32, %arg1: i32, %arg2: memref<1x32x128xf32, #tpu.memory_space<vmem>>, %arg3: memref<1x1x128xf32, #tpu.memory_space<vmem>>, %arg4: memref<1x1x128xf32, #tpu.memory_space<vmem>>, %arg5: memref<1x32x128xf32, #tpu.memory_space<vmem>>) attributes {dimension_semantics = [#tpu.dimension_semantics<parallel>, #tpu.dimension_semantics<parallel>], iteration_bounds = array<i64: 1, 1>, scalar_prefetch = 0 : i64, scratch_operands = 0 : i64, tpu.core_type = #tpu.core_type<tc>, window_params = [{transform_indices = @transform_0, window_bounds = array<i64: 1, 32, 128>}, {transform_indices = @transform_1, window_bounds = array<i64: 1, 1, 128>}, {transform_indices = @transform_2, window_bounds = array<i64: 1, 1, 128>}, {transform_indices = @transform_3, window_bounds = array<i64: 1, 32, 128>}]} {
    %c0 = arith.constant 0 : index
    %c0_0 = arith.constant 0 : index
    %c0_1 = arith.constant 0 : index
    %0 = vector.load %arg2[%c0, %c0_0, %c0_1] : memref<1x32x128xf32, #tpu.memory_space<vmem>>, vector<1x32x128xf32>
    %1 = vector.shape_cast %0 : vector<1x32x128xf32> to vector<32x128xf32>
    %c0_2 = arith.constant 0 : index
    %c0_3 = arith.constant 0 : index
    %c0_4 = arith.constant 0 : index
    %2 = vector.load %arg3[%c0_2, %c0_3, %c0_4] : memref<1x1x128xf32, #tpu.memory_space<vmem>>, vector<1x1x128xf32>
    %3 = vector.shape_cast %2 : vector<1x1x128xf32> to vector<1x128xf32>
    %c0_5 = arith.constant 0 : index
    %c0_6 = arith.constant 0 : index
    %c0_7 = arith.constant 0 : index
    %4 = vector.load %arg4[%c0_5, %c0_6, %c0_7] : memref<1x1x128xf32, #tpu.memory_space<vmem>>, vector<1x1x128xf32>
    %5 = vector.shape_cast %4 : vector<1x1x128xf32> to vector<1x128xf32>
    %6 = tpu.iota {dimensions = array<i32: 1>} : vector<32x128xi32>
    %c16_i32 = arith.constant 16 : i32
    %7 = vector.broadcast %c16_i32 : i32 to vector<32x128xi32>
    %8 = arith.cmpi slt, %6, %7 : vector<32x128xi32>
    %cst = arith.constant 0.000000e+00 : f32
    %9 = vector.broadcast %cst : f32 to vector<32x128xf32>
    %10 = arith.select %8, %1, %9 : vector<32x128xi1>, vector<32x128xf32>
    %cst_8 = arith.constant dense<0.000000e+00> : vector<32xf32>
    %11 = vector.multi_reduction <add>, %10, %cst_8 [1] : vector<32x128xf32> to vector<32xf32>
    %12 = vector.shape_cast %11 : vector<32xf32> to vector<32x1xf32>
    %cst_9 = arith.constant 6.250000e-02 : f32
    %13 = vector.broadcast %cst_9 : f32 to vector<32x1xf32>
    %14 = arith.mulf %12, %13 : vector<32x1xf32>
    %15 = vector.broadcast %14 : vector<32x1xf32> to vector<32x128xf32>
    %16 = arith.subf %1, %15 : vector<32x128xf32>
    %cst_10 = arith.constant 0.000000e+00 : f32
    %17 = vector.broadcast %cst_10 : f32 to vector<32x128xf32>
    %18 = arith.select %8, %16, %17 : vector<32x128xi1>, vector<32x128xf32>
    %19 = arith.mulf %18, %18 : vector<32x128xf32>
    %cst_11 = arith.constant dense<0.000000e+00> : vector<32xf32>
    %20 = vector.multi_reduction <add>, %19, %cst_11 [1] : vector<32x128xf32> to vector<32xf32>
    %21 = vector.shape_cast %20 : vector<32xf32> to vector<32x1xf32>
    %cst_12 = arith.constant 6.250000e-02 : f32
    %22 = vector.broadcast %cst_12 : f32 to vector<32x1xf32>
    %23 = arith.mulf %21, %22 : vector<32x1xf32>
    %24 = vector.broadcast %14 : vector<32x1xf32> to vector<32x128xf32>
    %25 = arith.subf %1, %24 : vector<32x128xf32>
    %cst_13 = arith.constant 9.99999974E-6 : f32
    %26 = vector.broadcast %cst_13 : f32 to vector<32x1xf32>
    %27 = arith.addf %23, %26 : vector<32x1xf32>
    %28 = math.rsqrt %27 : vector<32x1xf32>
    %29 = vector.broadcast %28 : vector<32x1xf32> to vector<32x128xf32>
    %30 = arith.mulf %25, %29 : vector<32x128xf32>
    %31 = vector.broadcast %3 : vector<1x128xf32> to vector<32x128xf32>
    %32 = arith.mulf %30, %31 : vector<32x128xf32>
    %33 = vector.broadcast %5 : vector<1x128xf32> to vector<32x128xf32>
    %34 = arith.addf %32, %33 : vector<32x128xf32>
    %c0_14 = arith.constant 0 : index
    %c0_15 = arith.constant 0 : index
    %c0_16 = arith.constant 0 : index
    %35 = vector.load %arg5[%c0_14, %c0_15, %c0_16] : memref<1x32x128xf32, #tpu.memory_space<vmem>>, vector<1x32x128xf32>
    %36 = vector.shape_cast %35 : vector<1x32x128xf32> to vector<32x128xf32>
    %37 = vector.shape_cast %34 : vector<32x128xf32> to vector<1x32x128xf32>
    tpu.vector_store %arg5[%c0_14, %c0_15, %c0_16], %37 {strides = array<i32>} : memref<1x32x128xf32, #tpu.memory_space<vmem>>, vector<1x32x128xf32>,
    return
  }
  func.func @transform_0(%arg0: i32, %arg1: i32) -> (i32, i32, i32) {
    %c0_i32 = arith.constant 0 : i32
    %c0_i32_0 = arith.constant 0 : i32
    return %arg0, %arg1, %c0_i32 : i32, i32, i32
  }
  func.func @transform_1(%arg0: i32, %arg1: i32) -> (i32, i32, i32) {
    %c0_i32 = arith.constant 0 : i32
    %c0_i32_0 = arith.constant 0 : i32
    %c0_i32_1 = arith.constant 0 : i32
    return %arg0, %c0_i32, %c0_i32_0 : i32, i32, i32
  }
  func.func @transform_2(%arg0: i32, %arg1: i32) -> (i32, i32, i32) {
    %c0_i32 = arith.constant 0 : i32
    %c0_i32_0 = arith.constant 0 : i32
    %c0_i32_1 = arith.constant 0 : i32
    return %arg0, %c0_i32, %c0_i32_0 : i32, i32, i32
  }
  func.func @transform_3(%arg0: i32, %arg1: i32) -> (i32, i32, i32) {
    %c0_i32 = arith.constant 0 : i32
    %c0_i32_0 = arith.constant 0 : i32
    return %arg0, %arg1, %c0_i32 : i32, i32, i32
  }
}

module attributes {stable_mosaic.version = 11 : i64} {
  func.func @_rownorm_kernel(%arg0: i32, %arg1: i32, %arg2: memref<1x8x512xf32, #tpu.memory_space<vmem>>, %arg3: memref<1x1x512xf32, #tpu.memory_space<vmem>>, %arg4: memref<1x1x512xf32, #tpu.memory_space<vmem>>, %arg5: memref<1x8x512xf32, #tpu.memory_space<vmem>>) attributes {dimension_semantics = [#tpu.dimension_semantics<parallel>, #tpu.dimension_semantics<parallel>], iteration_bounds = array<i64: 2, 1>, scalar_prefetch = 0 : i64, scratch_operands = 0 : i64, tpu.core_type = #tpu.core_type<tc>, window_params = [{transform_indices = @transform_0, window_bounds = array<i64: 1, 8, 512>}, {transform_indices = @transform_1, window_bounds = array<i64: 1, 1, 512>}, {transform_indices = @transform_2, window_bounds = array<i64: 1, 1, 512>}, {transform_indices = @transform_3, window_bounds = array<i64: 1, 8, 512>}]} {
    %c0 = arith.constant 0 : index
    %c0_0 = arith.constant 0 : index
    %c0_1 = arith.constant 0 : index
    %0 = vector.load %arg2[%c0, %c0_0, %c0_1] : memref<1x8x512xf32, #tpu.memory_space<vmem>>, vector<1x8x512xf32>
    %1 = vector.shape_cast %0 : vector<1x8x512xf32> to vector<8x512xf32>
    %c0_2 = arith.constant 0 : index
    %c0_3 = arith.constant 0 : index
    %c0_4 = arith.constant 0 : index
    %2 = vector.load %arg3[%c0_2, %c0_3, %c0_4] : memref<1x1x512xf32, #tpu.memory_space<vmem>>, vector<1x1x512xf32>
    %3 = vector.shape_cast %2 : vector<1x1x512xf32> to vector<1x512xf32>
    %c0_5 = arith.constant 0 : index
    %c0_6 = arith.constant 0 : index
    %c0_7 = arith.constant 0 : index
    %4 = vector.load %arg4[%c0_5, %c0_6, %c0_7] : memref<1x1x512xf32, #tpu.memory_space<vmem>>, vector<1x1x512xf32>
    %5 = vector.shape_cast %4 : vector<1x1x512xf32> to vector<1x512xf32>
    %6 = tpu.iota {dimensions = array<i32: 1>} : vector<8x512xi32>
    %c512_i32 = arith.constant 512 : i32
    %7 = vector.broadcast %c512_i32 : i32 to vector<8x512xi32>
    %8 = arith.cmpi slt, %6, %7 : vector<8x512xi32>
    %cst = arith.constant 0.000000e+00 : f32
    %9 = vector.broadcast %cst : f32 to vector<8x512xf32>
    %10 = arith.select %8, %1, %9 : vector<8x512xi1>, vector<8x512xf32>
    %cst_8 = arith.constant dense<0.000000e+00> : vector<8xf32>
    %11 = vector.multi_reduction <add>, %10, %cst_8 [1] : vector<8x512xf32> to vector<8xf32>
    %12 = vector.shape_cast %11 : vector<8xf32> to vector<8x1xf32>
    %cst_9 = arith.constant 0.001953125 : f32
    %13 = vector.broadcast %cst_9 : f32 to vector<8x1xf32>
    %14 = arith.mulf %12, %13 : vector<8x1xf32>
    %15 = vector.broadcast %14 : vector<8x1xf32> to vector<8x512xf32>
    %16 = arith.subf %1, %15 : vector<8x512xf32>
    %cst_10 = arith.constant 0.000000e+00 : f32
    %17 = vector.broadcast %cst_10 : f32 to vector<8x512xf32>
    %18 = arith.select %8, %16, %17 : vector<8x512xi1>, vector<8x512xf32>
    %19 = arith.mulf %18, %18 : vector<8x512xf32>
    %cst_11 = arith.constant dense<0.000000e+00> : vector<8xf32>
    %20 = vector.multi_reduction <add>, %19, %cst_11 [1] : vector<8x512xf32> to vector<8xf32>
    %21 = vector.shape_cast %20 : vector<8xf32> to vector<8x1xf32>
    %cst_12 = arith.constant 0.001953125 : f32
    %22 = vector.broadcast %cst_12 : f32 to vector<8x1xf32>
    %23 = arith.mulf %21, %22 : vector<8x1xf32>
    %24 = vector.broadcast %14 : vector<8x1xf32> to vector<8x512xf32>
    %25 = arith.subf %1, %24 : vector<8x512xf32>
    %cst_13 = arith.constant 9.99999974E-6 : f32
    %26 = vector.broadcast %cst_13 : f32 to vector<8x1xf32>
    %27 = arith.addf %23, %26 : vector<8x1xf32>
    %28 = math.rsqrt %27 : vector<8x1xf32>
    %29 = vector.broadcast %28 : vector<8x1xf32> to vector<8x512xf32>
    %30 = arith.mulf %25, %29 : vector<8x512xf32>
    %31 = vector.broadcast %3 : vector<1x512xf32> to vector<8x512xf32>
    %32 = arith.mulf %30, %31 : vector<8x512xf32>
    %33 = vector.broadcast %5 : vector<1x512xf32> to vector<8x512xf32>
    %34 = arith.addf %32, %33 : vector<8x512xf32>
    %cst_14 = arith.constant 0.000000e+00 : f32
    %35 = vector.broadcast %cst_14 : f32 to vector<8x512xf32>
    %36 = arith.subf %35, %34 : vector<8x512xf32>
    %37 = math.exp %36 : vector<8x512xf32>
    %cst_15 = arith.constant 1.000000e+00 : f32
    %38 = vector.broadcast %cst_15 : f32 to vector<8x512xf32>
    %39 = arith.addf %38, %37 : vector<8x512xf32>
    %40 = tpu.reciprocal %39 {approx = true} : vector<8x512xf32> -> vector<8x512xf32>
    %41 = arith.mulf %34, %40 : vector<8x512xf32>
    %c0_16 = arith.constant 0 : index
    %c0_17 = arith.constant 0 : index
    %c0_18 = arith.constant 0 : index
    %42 = vector.load %arg5[%c0_16, %c0_17, %c0_18] : memref<1x8x512xf32, #tpu.memory_space<vmem>>, vector<1x8x512xf32>
    %43 = vector.shape_cast %42 : vector<1x8x512xf32> to vector<8x512xf32>
    %44 = vector.shape_cast %41 : vector<8x512xf32> to vector<1x8x512xf32>
    tpu.vector_store %arg5[%c0_16, %c0_17, %c0_18], %44 {strides = array<i32>} : memref<1x8x512xf32, #tpu.memory_space<vmem>>, vector<1x8x512xf32>,
    return
  }
  func.func @transform_0(%arg0: i32, %arg1: i32) -> (i32, i32, i32) {
    %c0_i32 = arith.constant 0 : i32
    %c0_i32_0 = arith.constant 0 : i32
    return %arg0, %arg1, %c0_i32 : i32, i32, i32
  }
  func.func @transform_1(%arg0: i32, %arg1: i32) -> (i32, i32, i32) {
    %c0_i32 = arith.constant 0 : i32
    %c0_i32_0 = arith.constant 0 : i32
    %c0_i32_1 = arith.constant 0 : i32
    return %arg0, %c0_i32, %c0_i32_0 : i32, i32, i32
  }
  func.func @transform_2(%arg0: i32, %arg1: i32) -> (i32, i32, i32) {
    %c0_i32 = arith.constant 0 : i32
    %c0_i32_0 = arith.constant 0 : i32
    %c0_i32_1 = arith.constant 0 : i32
    return %arg0, %c0_i32, %c0_i32_0 : i32, i32, i32
  }
  func.func @transform_3(%arg0: i32, %arg1: i32) -> (i32, i32, i32) {
    %c0_i32 = arith.constant 0 : i32
    %c0_i32_0 = arith.constant 0 : i32
    return %arg0, %arg1, %c0_i32 : i32, i32, i32
  }
}

</mosaic_0001>

<llo_original>
// kernel: fuxi_forward.23
$region0: #{fuxi_forward.23}
  #allocation0 [shape = 'u32[]', space=smem, size = 0x4, offset = 0x4, fixed_abs, tag = 'smem constant byte address 0x4 - core index']
  #allocation1 [shape = 'u32[72,128]{1,0:T(1,128)}', space=vmem, size = 0x9000, scoped, tag = 'internal scratch']
  #allocation2 [shape = 'f32[128,128]{1,0:T(8,128)}', space=vmem, size = 0x10000, scoped, tag = 'scratch operand']
  %s0 = inlined_call_operand.vmem [shape: bf16[128,128], index: 0, kind: input, shape index: {}]
  %s1 = inlined_call_operand.vmem [shape: bf16[128,128], index: 1, kind: input, shape index: {}]
  %s2 = inlined_call_operand.vmem [shape: f32[1,128], index: 2, kind: input, shape index: {}]
  %s3 = inlined_call_operand.vmem [shape: f32[128,128], index: 3, kind: output, shape index: {}]
  %s4 = sld [smem:[#allocation0]]
  $region30: #{fuxi_forward.23} parent=0
    _
  %s6 = ssub.s32 1, %s4
  %s7 = scalar_select 0, %s6, %s4
  // Predicated region
  $region2: #{fuxi_forward.23} parent=0 // pred_check
    _
  $region3: #{fuxi_forward.23} parent=0 // pred_check_branch
    %9 = sbr.rel (0) target = $region5
  $region4: #{fuxi_forward.23} parent=0 // pred_region
    _
  $region5: #{fuxi_forward.23} parent=0 // pred_fallthru
    _
  // Predicated region
  $region6: #{fuxi_forward.23} parent=0 // pred_check
    _
  $region7: #{fuxi_forward.23} parent=0 // pred_check_branch
    %11 = sbr.rel (0) target = $region9
  $region8: #{fuxi_forward.23} parent=0 // pred_region
    _
  $region9: #{fuxi_forward.23} parent=0 // pred_fallthru
    _
  // Predicated region
  $region10: #{fuxi_forward.23} parent=0 // pred_check
    _
  $region11: #{fuxi_forward.23} parent=0 // pred_check_branch
    %13 = sbr.rel (0) target = $region13
  $region12: #{fuxi_forward.23} parent=0 // pred_region
    _
  $region13: #{fuxi_forward.23} parent=0 // pred_fallthru
    _
  %p14 = scmp.eq.s32.totalorder 0, 0
  // Predicated region
  $region14: #{fuxi_forward.23} parent=0 // pred_check
    %p15 = pneg %p14
  $region15: #{fuxi_forward.23} parent=0 // pred_check_branch
    %17 = sbr.rel (%p15) target = $region17
  $region16: #{fuxi_forward.23} parent=0 // pred_region
    %18 = vst [vmem:[#allocation2] sm:$0xff] 0.0
    %19 = vst [vmem:[#allocation2 + $0x8] sm:$0xff] 0.0
    %20 = vst [vmem:[#allocation2 + $0x10] sm:$0xff] 0.0
    %21 = vst [vmem:[#allocation2 + $0x18] sm:$0xff] 0.0
    %22 = vst [vmem:[#allocation2 + $0x20] sm:$0xff] 0.0
    %23 = vst [vmem:[#allocation2 + $0x28] sm:$0xff] 0.0
    %24 = vst [vmem:[#allocation2 + $0x30] sm:$0xff] 0.0
    %25 = vst [vmem:[#allocation2 + $0x38] sm:$0xff] 0.0
    %26 = vst [vmem:[#allocation2 + $0x40] sm:$0xff] 0.0
    %27 = vst [vmem:[#allocation2 + $0x48] sm:$0xff] 0.0
    %28 = vst [vmem:[#allocation2 + $0x50] sm:$0xff] 0.0
    %29 = vst [vmem:[#allocation2 + $0x58] sm:$0xff] 0.0
    %30 = vst [vmem:[#allocation2 + $0x60] sm:$0xff] 0.0
    %31 = vst [vmem:[#allocation2 + $0x68] sm:$0xff] 0.0
    %32 = vst [vmem:[#allocation2 + $0x70] sm:$0xff] 0.0
    %33 = vst [vmem:[#allocation2 + $0x78] sm:$0xff] 0.0
  $region17: #{fuxi_forward.23} parent=0 // pred_fallthru
    _
  %v34 = vld [vmem:[#allocation2] sm:$0xff]
  %v35 = vld [vmem:[#allocation2 + $0x8] sm:$0xff]
  %v36 = vld [vmem:[#allocation2 + $0x10] sm:$0xff]
  %v37 = vld [vmem:[#allocation2 + $0x18] sm:$0xff]
  %v38 = vld [vmem:[#allocation2 + $0x20] sm:$0xff]
  %v39 = vld [vmem:[#allocation2 + $0x28] sm:$0xff]
  %v40 = vld [vmem:[#allocation2 + $0x30] sm:$0xff]
  %v41 = vld [vmem:[#allocation2 + $0x38] sm:$0xff]
  %v42 = vld [vmem:[#allocation2 + $0x40] sm:$0xff]
  %v43 = vld [vmem:[#allocation2 + $0x48] sm:$0xff]
  %v44 = vld [vmem:[#allocation2 + $0x50] sm:$0xff]
  %v45 = vld [vmem:[#allocation2 + $0x58] sm:$0xff]
  %v46 = vld [vmem:[#allocation2 + $0x60] sm:$0xff]
  %v47 = vld [vmem:[#allocation2 + $0x68] sm:$0xff]
  %v48 = vld [vmem:[#allocation2 + $0x70] sm:$0xff]
  %v49 = vld [vmem:[#allocation2 + $0x78] sm:$0xff]
  %v50 = vld [vmem:[%s0] sm:$0xf]
  %v51 = vld [vmem:[%s0 + $0x4] sm:$0xf]
  %v52 = vld [vmem:[%s0 + $0x8] sm:$0xf]
  %v53 = vld [vmem:[%s0 + $0xc] sm:$0xf]
  %v54 = vld [vmem:[%s0 + $0x10] sm:$0xf]
  %v55 = vld [vmem:[%s0 + $0x14] sm:$0xf]
  %v56 = vld [vmem:[%s0 + $0x18] sm:$0xf]
  %v57 = vld [vmem:[%s0 + $0x1c] sm:$0xf]
  %v58 = vld [vmem:[%s0 + $0x20] sm:$0xf]
  %v59 = vld [vmem:[%s0 + $0x24] sm:$0xf]
  %v60 = vld [vmem:[%s0 + $0x28] sm:$0xf]
  %v61 = vld [vmem:[%s0 + $0x2c] sm:$0xf]
  %v62 = vld [vmem:[%s0 + $0x30] sm:$0xf]
  %v63 = vld [vmem:[%s0 + $0x34] sm:$0xf]
  %v64 = vld [vmem:[%s0 + $0x38] sm:$0xf]
  %v65 = vld [vmem:[%s0 + $0x3c] sm:$0xf]
  %v66 = vld [vmem:[%s1] sm:$0xf]
  %v67 = vld [vmem:[%s1 + $0x4] sm:$0xf]
  %v68 = vld [vmem:[%s1 + $0x8] sm:$0xf]
  %v69 = vld [vmem:[%s1 + $0xc] sm:$0xf]
  %v70 = vld [vmem:[%s1 + $0x10] sm:$0xf]
  %v71 = vld [vmem:[%s1 + $0x14] sm:$0xf]
  %v72 = vld [vmem:[%s1 + $0x18] sm:$0xf]
  %v73 = vld [vmem:[%s1 + $0x1c] sm:$0xf]
  %v74 = vld [vmem:[%s1 + $0x20] sm:$0xf]
  %v75 = vld [vmem:[%s1 + $0x24] sm:$0xf]
  %v76 = vld [vmem:[%s1 + $0x28] sm:$0xf]
  %v77 = vld [vmem:[%s1 + $0x2c] sm:$0xf]
  %v78 = vld [vmem:[%s1 + $0x30] sm:$0xf]
  %v79 = vld [vmem:[%s1 + $0x34] sm:$0xf]
  %v80 = vld [vmem:[%s1 + $0x38] sm:$0xf]
  %v81 = vld [vmem:[%s1 + $0x3c] sm:$0xf]
  %v98 = vunpack.c.l.b16 %v50
  %v99 = vunpack.c.l.b16 %v51
  %v100 = vunpack.c.l.b16 %v52
  %v101 = vunpack.c.l.b16 %v53
  %v102 = vunpack.c.l.b16 %v54
  %v103 = vunpack.c.l.b16 %v55
  %v104 = vunpack.c.l.b16 %v56
  %v105 = vunpack.c.l.b16 %v57
  %v106 = vunpack.c.l.b16 %v58
  %v107 = vunpack.c.l.b16 %v59
  %v108 = vunpack.c.l.b16 %v60
  %v109 = vunpack.c.l.b16 %v61
  %v110 = vunpack.c.l.b16 %v62
  %v111 = vunpack.c.l.b16 %v63
  %v112 = vunpack.c.l.b16 %v64
  %v113 = vunpack.c.l.b16 %v65
  %v114 = vpack.c.b16 %v99, %v98
  %v115 = vpack.c.b16 %v101, %v100
  %v116 = vpack.c.b16 %v103, %v102
  %v117 = vpack.c.b16 %v105, %v104
  %v118 = vpack.c.b16 %v107, %v106
  %v119 = vpack.c.b16 %v109, %v108
  %v120 = vpack.c.b16 %v111, %v110
  %v121 = vpack.c.b16 %v113, %v112
  %v146 = vunpack.c.l.b16 %v66
  %v147 = vunpack.c.l.b16 %v67
  %v148 = vunpack.c.l.b16 %v68
  %v149 = vunpack.c.l.b16 %v69
  %v150 = vunpack.c.l.b16 %v70
  %v151 = vunpack.c.l.b16 %v71
  %v152 = vunpack.c.l.b16 %v72
  %v153 = vunpack.c.l.b16 %v73
  %v154 = vunpack.c.l.b16 %v74
  %v155 = vunpack.c.l.b16 %v75
  %v156 = vunpack.c.l.b16 %v76
  %v157 = vunpack.c.l.b16 %v77
  %v158 = vunpack.c.l.b16 %v78
  %v159 = vunpack.c.l.b16 %v79
  %v160 = vunpack.c.l.b16 %v80
  %v161 = vunpack.c.l.b16 %v81
  %v162 = vpack.c.b16 %v147, %v146
  %v163 = vpack.c.b16 %v149, %v148
  %v164 = vpack.c.b16 %v151, %v150
  %v165 = vpack.c.b16 %v153, %v152
  %v166 = vpack.c.b16 %v155, %v154
  %v167 = vpack.c.b16 %v157, %v156
  %v168 = vpack.c.b16 %v159, %v158
  %v169 = vpack.c.b16 %v161, %v160
  %178 = vmatpush.bf16.msra.mxu0 %v169
  %179 = vmatpush.bf16.msra.mxu0 %v168
  %180 = vmatpush.bf16.msra.mxu0 %v167
  %181 = vmatpush.bf16.msra.mxu0 %v166
  %182 = vmatpush.bf16.msra.mxu0 %v165
  %183 = vmatpush.bf16.msra.mxu0 %v164
  %184 = vmatpush.bf16.msra.mxu0 %v163
  %185 = vmatpush.bf16.msra.mxu0 %v162
  %186 = vmatmul.bf16.gmra.mxu0 %v114
  %v187 = vpop.f32.mrf.mxu0
  %v188 = vadd.f32 0.0, %v187
  %v189 = vpop.f32.mrf.mxu0
  %v190 = vadd.f32 0.0, %v189
  %191 = vmatmul.bf16.gmra.mxu0 %v115
  %v192 = vpop.f32.mrf.mxu0
  %v193 = vadd.f32 0.0, %v192
  %v194 = vpop.f32.mrf.mxu0
  %v195 = vadd.f32 0.0, %v194
  %196 = vmatmul.bf16.gmra.mxu0 %v116
  %v197 = vpop.f32.mrf.mxu0
  %v198 = vadd.f32 0.0, %v197
  %v199 = vpop.f32.mrf.mxu0
  %v200 = vadd.f32 0.0, %v199
  %201 = vmatmul.bf16.gmra.mxu0 %v117
  %v202 = vpop.f32.mrf.mxu0
  %v203 = vadd.f32 0.0, %v202
  %v204 = vpop.f32.mrf.mxu0
  %v205 = vadd.f32 0.0, %v204
  %206 = vmatmul.bf16.gmra.mxu0 %v118
  %v207 = vpop.f32.mrf.mxu0
  %v208 = vadd.f32 0.0, %v207
  %v209 = vpop.f32.mrf.mxu0
  %v210 = vadd.f32 0.0, %v209
  %211 = vmatmul.bf16.gmra.mxu0 %v119
  %v212 = vpop.f32.mrf.mxu0
  %v213 = vadd.f32 0.0, %v212
  %v214 = vpop.f32.mrf.mxu0
  %v215 = vadd.f32 0.0, %v214
  %216 = vmatmul.bf16.gmra.mxu0 %v120
  %v217 = vpop.f32.mrf.mxu0
  %v218 = vadd.f32 0.0, %v217
  %v219 = vpop.f32.mrf.mxu0
  %v220 = vadd.f32 0.0, %v219
  %221 = vmatmul.bf16.gmra.mxu0 %v121
  %v222 = vpop.f32.mrf.mxu0
  %v223 = vadd.f32 0.0, %v222
  %v224 = vpop.f32.mrf.mxu0
  %v225 = vadd.f32 0.0, %v224
  %226 = vdwg.mxu0
  %v227 = vadd.f32 %v34, %v188
  %v228 = vadd.f32 %v35, %v190
  %v229 = vadd.f32 %v36, %v193
  %v230 = vadd.f32 %v37, %v195
  %v231 = vadd.f32 %v38, %v198
  %v232 = vadd.f32 %v39, %v200
  %v233 = vadd.f32 %v40, %v203
  %v234 = vadd.f32 %v41, %v205
  %v235 = vadd.f32 %v42, %v208
  %v236 = vadd.f32 %v43, %v210
  %v237 = vadd.f32 %v44, %v213
  %v238 = vadd.f32 %v45, %v215
  %v239 = vadd.f32 %v46, %v218
  %v240 = vadd.f32 %v47, %v220
  %v241 = vadd.f32 %v48, %v223
  %v242 = vadd.f32 %v49, %v225
  %243 = vst [vmem:[#allocation2] sm:$0xff] %v227
  %244 = vst [vmem:[#allocation2 + $0x8] sm:$0xff] %v228
  %245 = vst [vmem:[#allocation2 + $0x10] sm:$0xff] %v229
  %246 = vst [vmem:[#allocation2 + $0x18] sm:$0xff] %v230
  %247 = vst [vmem:[#allocation2 + $0x20] sm:$0xff] %v231
  %248 = vst [vmem:[#allocation2 + $0x28] sm:$0xff] %v232
  %249 = vst [vmem:[#allocation2 + $0x30] sm:$0xff] %v233
  %250 = vst [vmem:[#allocation2 + $0x38] sm:$0xff] %v234
  %251 = vst [vmem:[#allocation2 + $0x40] sm:$0xff] %v235
  %252 = vst [vmem:[#allocation2 + $0x48] sm:$0xff] %v236
  %253 = vst [vmem:[#allocation2 + $0x50] sm:$0xff] %v237
  %254 = vst [vmem:[#allocation2 + $0x58] sm:$0xff] %v238
  %255 = vst [vmem:[#allocation2 + $0x60] sm:$0xff] %v239
  %256 = vst [vmem:[#allocation2 + $0x68] sm:$0xff] %v240
  %257 = vst [vmem:[#allocation2 + $0x70] sm:$0xff] %v241
  %258 = vst [vmem:[#allocation2 + $0x78] sm:$0xff] %v242
  // Predicated region
  $region18: #{fuxi_forward.23} parent=0 // pred_check
    %p259 = pneg %p14
  $region19: #{fuxi_forward.23} parent=0 // pred_check_branch
    %261 = sbr.rel (%p259) target = $region21
  $region20: #{fuxi_forward.23} parent=0 // pred_region
    %v262 = vld [vmem:[#allocation2] sm:$0xff]
    %v263 = vld [vmem:[#allocation2 + $0x8] sm:$0xff]
    %v264 = vld [vmem:[#allocation2 + $0x10] sm:$0xff]
    %v265 = vld [vmem:[#allocation2 + $0x18] sm:$0xff]
    %v266 = vld [vmem:[#allocation2 + $0x20] sm:$0xff]
    %v267 = vld [vmem:[#allocation2 + $0x28] sm:$0xff]
    %v268 = vld [vmem:[#allocation2 + $0x30] sm:$0xff]
    %v269 = vld [vmem:[#allocation2 + $0x38] sm:$0xff]
    %v270 = vld [vmem:[#allocation2 + $0x40] sm:$0xff]
    %v271 = vld [vmem:[#allocation2 + $0x48] sm:$0xff]
    %v272 = vld [vmem:[#allocation2 + $0x50] sm:$0xff]
    %v273 = vld [vmem:[#allocation2 + $0x58] sm:$0xff]
    %v274 = vld [vmem:[#allocation2 + $0x60] sm:$0xff]
    %v275 = vld [vmem:[#allocation2 + $0x68] sm:$0xff]
    %v276 = vld [vmem:[#allocation2 + $0x70] sm:$0xff]
    %v277 = vld [vmem:[#allocation2 + $0x78] sm:$0xff]
    %v278 = vld [vmem:[%s2] sm:$0x1]
    %v280 = vperm.slane %v278, 0
    %v282 = vadd.f32 %v262, %v280
    %v283 = vadd.f32 %v263, %v280
    %v284 = vadd.f32 %v264, %v280
    %v285 = vadd.f32 %v265, %v280
    %v286 = vadd.f32 %v266, %v280
    %v287 = vadd.f32 %v267, %v280
    %v288 = vadd.f32 %v268, %v280
    %v289 = vadd.f32 %v269, %v280
    %v290 = vadd.f32 %v270, %v280
    %v291 = vadd.f32 %v271, %v280
    %v292 = vadd.f32 %v272, %v280
    %v293 = vadd.f32 %v273, %v280
    %v294 = vadd.f32 %v274, %v280
    %v295 = vadd.f32 %v275, %v280
    %v296 = vadd.f32 %v276, %v280
    %v297 = vadd.f32 %v277, %v280
    %298 = vst [vmem:[%s3] sm:$0xff] %v282
    %299 = vst [vmem:[%s3 + $0x8] sm:$0xff] %v283
    %300 = vst [vmem:[%s3 + $0x10] sm:$0xff] %v284
    %301 = vst [vmem:[%s3 + $0x18] sm:$0xff] %v285
    %302 = vst [vmem:[%s3 + $0x20] sm:$0xff] %v286
    %303 = vst [vmem:[%s3 + $0x28] sm:$0xff] %v287
    %304 = vst [vmem:[%s3 + $0x30] sm:$0xff] %v288
    %305 = vst [vmem:[%s3 + $0x38] sm:$0xff] %v289
    %306 = vst [vmem:[%s3 + $0x40] sm:$0xff] %v290
    %307 = vst [vmem:[%s3 + $0x48] sm:$0xff] %v291
    %308 = vst [vmem:[%s3 + $0x50] sm:$0xff] %v292
    %309 = vst [vmem:[%s3 + $0x58] sm:$0xff] %v293
    %310 = vst [vmem:[%s3 + $0x60] sm:$0xff] %v294
    %311 = vst [vmem:[%s3 + $0x68] sm:$0xff] %v295
    %312 = vst [vmem:[%s3 + $0x70] sm:$0xff] %v296
    %313 = vst [vmem:[%s3 + $0x78] sm:$0xff] %v297
  $region21: #{fuxi_forward.23} parent=0 // pred_fallthru
    _
  // Predicated region
  $region22: #{fuxi_forward.23} parent=0 // pred_check
    _
  $region23: #{fuxi_forward.23} parent=0 // pred_check_branch
    %315 = sbr.rel (0) target = $region25
  $region24: #{fuxi_forward.23} parent=0 // pred_region
    _
  $region25: #{fuxi_forward.23} parent=0 // pred_fallthru
    _
  // Predicated region
  $region26: #{fuxi_forward.23} parent=0 // pred_check
    _
  $region27: #{fuxi_forward.23} parent=0 // pred_check_branch
    %317 = sbr.rel (0) target = $region29
  $region28: #{fuxi_forward.23} parent=0 // pred_region
    _
  $region29: #{fuxi_forward.23} parent=0 // pred_fallthru
    _

// kernel: fuxi_forward.24
$region0: #{fuxi_forward.24}
  #allocation0 [shape = 'u32[]', space=smem, size = 0x4, offset = 0x4, fixed_abs, tag = 'smem constant byte address 0x4 - core index']
  #allocation1 [shape = 'u32[72,128]{1,0:T(1,128)}', space=vmem, size = 0x9000, scoped, tag = 'internal scratch']
  %s0 = inlined_call_operand.vmem [shape: f32[1,128,128], index: 0, kind: input, shape index: {}]
  %s1 = inlined_call_operand.vmem [shape: f32[1,1,128], index: 1, kind: input, shape index: {}]
  %s2 = inlined_call_operand.vmem [shape: f32[1,1,128], index: 2, kind: input, shape index: {}]
  %s3 = inlined_call_operand.vmem [shape: f32[1,128,128], index: 3, kind: output, shape index: {}]
  %s4 = sld [smem:[#allocation0]]
  $region22: #{fuxi_forward.24} parent=0
    _
  %s6 = ssub.s32 1, %s4
  %s7 = scalar_select 0, %s6, %s4
  // Predicated region
  $region2: #{fuxi_forward.24} parent=0 // pred_check
    _
  $region3: #{fuxi_forward.24} parent=0 // pred_check_branch
    %9 = sbr.rel (0) target = $region5
  $region4: #{fuxi_forward.24} parent=0 // pred_region
    _
  $region5: #{fuxi_forward.24} parent=0 // pred_fallthru
    _
  // Predicated region
  $region6: #{fuxi_forward.24} parent=0 // pred_check
    _
  $region7: #{fuxi_forward.24} parent=0 // pred_check_branch
    %11 = sbr.rel (0) target = $region9
  $region8: #{fuxi_forward.24} parent=0 // pred_region
    _
  $region9: #{fuxi_forward.24} parent=0 // pred_fallthru
    _
  // Predicated region
  $region10: #{fuxi_forward.24} parent=0 // pred_check
    _
  $region11: #{fuxi_forward.24} parent=0 // pred_check_branch
    %13 = sbr.rel (0) target = $region13
  $region12: #{fuxi_forward.24} parent=0 // pred_region
    _
  $region13: #{fuxi_forward.24} parent=0 // pred_fallthru
    _
  %v14 = vld [vmem:[%s0] sm:$0xff]
  %v15 = vld [vmem:[%s0 + $0x8] sm:$0xff]
  %v16 = vld [vmem:[%s0 + $0x10] sm:$0xff]
  %v17 = vld [vmem:[%s0 + $0x18] sm:$0xff]
  %v18 = vld [vmem:[%s0 + $0x20] sm:$0xff]
  %v19 = vld [vmem:[%s0 + $0x28] sm:$0xff]
  %v20 = vld [vmem:[%s0 + $0x30] sm:$0xff]
  %v21 = vld [vmem:[%s0 + $0x38] sm:$0xff]
  %v22 = vld [vmem:[%s0 + $0x40] sm:$0xff]
  %v23 = vld [vmem:[%s0 + $0x48] sm:$0xff]
  %v24 = vld [vmem:[%s0 + $0x50] sm:$0xff]
  %v25 = vld [vmem:[%s0 + $0x58] sm:$0xff]
  %v26 = vld [vmem:[%s0 + $0x60] sm:$0xff]
  %v27 = vld [vmem:[%s0 + $0x68] sm:$0xff]
  %v28 = vld [vmem:[%s0 + $0x70] sm:$0xff]
  %v29 = vld [vmem:[%s0 + $0x78] sm:$0xff]
  %v30 = vld [vmem:[%s1] sm:$0x1]
  %v31 = vld [vmem:[%s2] sm:$0x1]
  %v32 = vlaneseq
  %v33 = vand.u32 %v32, 127
  %vm34 = vcmp.lt.s32.totalorder %v33, 16
  %v35 = vsel %vm34, %v14, 0.0
  %v36 = vsel %vm34, %v15, 0.0
  %v37 = vsel %vm34, %v16, 0.0
  %v38 = vsel %vm34, %v17, 0.0
  %v39 = vsel %vm34, %v18, 0.0
  %v40 = vsel %vm34, %v19, 0.0
  %v41 = vsel %vm34, %v20, 0.0
  %v42 = vsel %vm34, %v21, 0.0
  %v43 = vsel %vm34, %v22, 0.0
  %v44 = vsel %vm34, %v23, 0.0
  %v45 = vsel %vm34, %v24, 0.0
  %v46 = vsel %vm34, %v25, 0.0
  %v47 = vsel %vm34, %v26, 0.0
  %v48 = vsel %vm34, %v27, 0.0
  %v49 = vsel %vm34, %v28, 0.0
  %v50 = vsel %vm34, %v29, 0.0
  %51 = vadd.xlane.f32.xlu0 %v35
  %v52 = vpop.xlane.xlu0 %51
  %53 = vadd.xlane.f32.xlu0 %v36
  %v54 = vpop.xlane.xlu0 %53
  %55 = vadd.xlane.f32.xlu0 %v37
  %v56 = vpop.xlane.xlu0 %55
  %57 = vadd.xlane.f32.xlu0 %v38
  %v58 = vpop.xlane.xlu0 %57
  %59 = vadd.xlane.f32.xlu0 %v39
  %v60 = vpop.xlane.xlu0 %59
  %61 = vadd.xlane.f32.xlu0 %v40
  %v62 = vpop.xlane.xlu0 %61
  %63 = vadd.xlane.f32.xlu0 %v41
  %v64 = vpop.xlane.xlu0 %63
  %65 = vadd.xlane.f32.xlu0 %v42
  %v66 = vpop.xlane.xlu0 %65
  %67 = vadd.xlane.f32.xlu0 %v43
  %v68 = vpop.xlane.xlu0 %67
  %69 = vadd.xlane.f32.xlu0 %v44
  %v70 = vpop.xlane.xlu0 %69
  %71 = vadd.xlane.f32.xlu0 %v45
  %v72 = vpop.xlane.xlu0 %71
  %73 = vadd.xlane.f32.xlu0 %v46
  %v74 = vpop.xlane.xlu0 %73
  %75 = vadd.xlane.f32.xlu0 %v47
  %v76 = vpop.xlane.xlu0 %75
  %77 = vadd.xlane.f32.xlu0 %v48
  %v78 = vpop.xlane.xlu0 %77
  %79 = vadd.xlane.f32.xlu0 %v49
  %v80 = vpop.xlane.xlu0 %79
  %81 = vadd.xlane.f32.xlu0 %v50
  %v82 = vpop.xlane.xlu0 %81
  %v83 = vmul.f32 %v52, 0.0625
  %v84 = vmul.f32 %v54, 0.0625
  %v85 = vmul.f32 %v56, 0.0625
  %v86 = vmul.f32 %v58, 0.0625
  %v87 = vmul.f32 %v60, 0.0625
  %v88 = vmul.f32 %v62, 0.0625
  %v89 = vmul.f32 %v64, 0.0625
  %v90 = vmul.f32 %v66, 0.0625
  %v91 = vmul.f32 %v68, 0.0625
  %v92 = vmul.f32 %v70, 0.0625
  %v93 = vmul.f32 %v72, 0.0625
  %v94 = vmul.f32 %v74, 0.0625
  %v95 = vmul.f32 %v76, 0.0625
  %v96 = vmul.f32 %v78, 0.0625
  %v97 = vmul.f32 %v80, 0.0625
  %v98 = vmul.f32 %v82, 0.0625
  %v99 = vsub.f32 %v14, %v83
  %v100 = vsub.f32 %v15, %v84
  %v101 = vsub.f32 %v16, %v85
  %v102 = vsub.f32 %v17, %v86
  %v103 = vsub.f32 %v18, %v87
  %v104 = vsub.f32 %v19, %v88
  %v105 = vsub.f32 %v20, %v89
  %v106 = vsub.f32 %v21, %v90
  %v107 = vsub.f32 %v22, %v91
  %v108 = vsub.f32 %v23, %v92
  %v109 = vsub.f32 %v24, %v93
  %v110 = vsub.f32 %v25, %v94
  %v111 = vsub.f32 %v26, %v95
  %v112 = vsub.f32 %v27, %v96
  %v113 = vsub.f32 %v28, %v97
  %v114 = vsub.f32 %v29, %v98
  %v115 = vsel %vm34, %v99, 0.0
  %v116 = vsel %vm34, %v100, 0.0
  %v117 = vsel %vm34, %v101, 0.0
  %v118 = vsel %vm34, %v102, 0.0
  %v119 = vsel %vm34, %v103, 0.0
  %v120 = vsel %vm34, %v104, 0.0
  %v121 = vsel %vm34, %v105, 0.0
  %v122 = vsel %vm34, %v106, 0.0
  %v123 = vsel %vm34, %v107, 0.0
  %v124 = vsel %vm34, %v108, 0.0
  %v125 = vsel %vm34, %v109, 0.0
  %v126 = vsel %vm34, %v110, 0.0
  %v127 = vsel %vm34, %v111, 0.0
  %v128 = vsel %vm34, %v112, 0.0
  %v129 = vsel %vm34, %v113, 0.0
  %v130 = vsel %vm34, %v114, 0.0
  %v131 = vmul.f32 %v115, %v115
  %v132 = vmul.f32 %v116, %v116
  %v133 = vmul.f32 %v117, %v117
  %v134 = vmul.f32 %v118, %v118
  %v135 = vmul.f32 %v119, %v119
  %v136 = vmul.f32 %v120, %v120
  %v137 = vmul.f32 %v121, %v121
  %v138 = vmul.f32 %v122, %v122
  %v139 = vmul.f32 %v123, %v123
  %v140 = vmul.f32 %v124, %v124
  %v141 = vmul.f32 %v125, %v125
  %v142 = vmul.f32 %v126, %v126
  %v143 = vmul.f32 %v127, %v127
  %v144 = vmul.f32 %v128, %v128
  %v145 = vmul.f32 %v129, %v129
  %v146 = vmul.f32 %v130, %v130
  %147 = vadd.xlane.f32.xlu0 %v131
  %v148 = vpop.xlane.xlu0 %147
  %149 = vadd.xlane.f32.xlu0 %v132
  %v150 = vpop.xlane.xlu0 %149
  %151 = vadd.xlane.f32.xlu0 %v133
  %v152 = vpop.xlane.xlu0 %151
  %153 = vadd.xlane.f32.xlu0 %v134
  %v154 = vpop.xlane.xlu0 %153
  %155 = vadd.xlane.f32.xlu0 %v135
  %v156 = vpop.xlane.xlu0 %155
  %157 = vadd.xlane.f32.xlu0 %v136
  %v158 = vpop.xlane.xlu0 %157
  %159 = vadd.xlane.f32.xlu0 %v137
  %v160 = vpop.xlane.xlu0 %159
  %161 = vadd.xlane.f32.xlu0 %v138
  %v162 = vpop.xlane.xlu0 %161
  %163 = vadd.xlane.f32.xlu0 %v139
  %v164 = vpop.xlane.xlu0 %163
  %165 = vadd.xlane.f32.xlu0 %v140
  %v166 = vpop.xlane.xlu0 %165
  %167 = vadd.xlane.f32.xlu0 %v141
  %v168 = vpop.xlane.xlu0 %167
  %169 = vadd.xlane.f32.xlu0 %v142
  %v170 = vpop.xlane.xlu0 %169
  %171 = vadd.xlane.f32.xlu0 %v143
  %v172 = vpop.xlane.xlu0 %171
  %173 = vadd.xlane.f32.xlu0 %v144
  %v174 = vpop.xlane.xlu0 %173
  %175 = vadd.xlane.f32.xlu0 %v145
  %v176 = vpop.xlane.xlu0 %175
  %177 = vadd.xlane.f32.xlu0 %v146
  %v178 = vpop.xlane.xlu0 %177
  %v179 = vmul.f32 %v148, 0.0625
  %v180 = vmul.f32 %v150, 0.0625
  %v181 = vmul.f32 %v152, 0.0625
  %v182 = vmul.f32 %v154, 0.0625
  %v183 = vmul.f32 %v156, 0.0625
  %v184 = vmul.f32 %v158, 0.0625
  %v185 = vmul.f32 %v160, 0.0625
  %v186 = vmul.f32 %v162, 0.0625
  %v187 = vmul.f32 %v164, 0.0625
  %v188 = vmul.f32 %v166, 0.0625
  %v189 = vmul.f32 %v168, 0.0625
  %v190 = vmul.f32 %v170, 0.0625
  %v191 = vmul.f32 %v172, 0.0625
  %v192 = vmul.f32 %v174, 0.0625
  %v193 = vmul.f32 %v176, 0.0625
  %v194 = vmul.f32 %v178, 0.0625
  %v195 = vadd.f32 %v179, 1e-05
  %v196 = vadd.f32 %v180, 1e-05
  %v197 = vadd.f32 %v181, 1e-05
  %v198 = vadd.f32 %v182, 1e-05
  %v199 = vadd.f32 %v183, 1e-05
  %v200 = vadd.f32 %v184, 1e-05
  %v201 = vadd.f32 %v185, 1e-05
  %v202 = vadd.f32 %v186, 1e-05
  %v203 = vadd.f32 %v187, 1e-05
  %v204 = vadd.f32 %v188, 1e-05
  %v205 = vadd.f32 %v189, 1e-05
  %v206 = vadd.f32 %v190, 1e-05
  %v207 = vadd.f32 %v191, 1e-05
  %v208 = vadd.f32 %v192, 1e-05
  %v209 = vadd.f32 %v193, 1e-05
  %v210 = vadd.f32 %v194, 1e-05
  %v211 = vrsqrt.pop %v195
  %v212 = vmul.f32 %v211, %v195
  %v213 = vmul.f32 %v212, %v211
  %v214 = vmul.f32 0.5, %v213
  %v215 = vsub.f32 1.5, %v214
  %v216 = vmul.f32 %v211, %v215
  %vm217 = vweird.f32 %v195
  %vm218 = vweird.f32 %v211
  %vm219 = vmor %vm217, %vm218
  %v220 = vsel %vm219, %v211, %v216
  %v221 = vrsqrt.pop %v196
  %v222 = vmul.f32 %v221, %v196
  %v223 = vmul.f32 %v222, %v221
  %v224 = vmul.f32 0.5, %v223
  %v225 = vsub.f32 1.5, %v224
  %v226 = vmul.f32 %v221, %v225
  %vm227 = vweird.f32 %v196
  %vm228 = vweird.f32 %v221
  %vm229 = vmor %vm227, %vm228
  %v230 = vsel %vm229, %v221, %v226
  %v231 = vrsqrt.pop %v197
  %v232 = vmul.f32 %v231, %v197
  %v233 = vmul.f32 %v232, %v231
  %v234 = vmul.f32 0.5, %v233
  %v235 = vsub.f32 1.5, %v234
  %v236 = vmul.f32 %v231, %v235
  %vm237 = vweird.f32 %v197
  %vm238 = vweird.f32 %v231
  %vm239 = vmor %vm237, %vm238
  %v240 = vsel %vm239, %v231, %v236
  %v241 = vrsqrt.pop %v198
  %v242 = vmul.f32 %v241, %v198
  %v243 = vmul.f32 %v242, %v241
  %v244 = vmul.f32 0.5, %v243
  %v245 = vsub.f32 1.5, %v244
  %v246 = vmul.f32 %v241, %v245
  %vm247 = vweird.f32 %v198
  %vm248 = vweird.f32 %v241
  %vm249 = vmor %vm247, %vm248
  %v250 = vsel %vm249, %v241, %v246
  %v251 = vrsqrt.pop %v199
  %v252 = vmul.f32 %v251, %v199
  %v253 = vmul.f32 %v252, %v251
  %v254 = vmul.f32 0.5, %v253
  %v255 = vsub.f32 1.5, %v254
  %v256 = vmul.f32 %v251, %v255
  %vm257 = vweird.f32 %v199
  %vm258 = vweird.f32 %v251
  %vm259 = vmor %vm257, %vm258
  %v260 = vsel %vm259, %v251, %v256
  %v261 = vrsqrt.pop %v200
  %v262 = vmul.f32 %v261, %v200
  %v263 = vmul.f32 %v262, %v261
  %v264 = vmul.f32 0.5, %v263
  %v265 = vsub.f32 1.5, %v264
  %v266 = vmul.f32 %v261, %v265
  %vm267 = vweird.f32 %v200
  %vm268 = vweird.f32 %v261
  %vm269 = vmor %vm267, %vm268
  %v270 = vsel %vm269, %v261, %v266
  %v271 = vrsqrt.pop %v201
  %v272 = vmul.f32 %v271, %v201
  %v273 = vmul.f32 %v272, %v271
  %v274 = vmul.f32 0.5, %v273
  %v275 = vsub.f32 1.5, %v274
  %v276 = vmul.f32 %v271, %v275
  %vm277 = vweird.f32 %v201
  %vm278 = vweird.f32 %v271
  %vm279 = vmor %vm277, %vm278
  %v280 = vsel %vm279, %v271, %v276
  %v281 = vrsqrt.pop %v202
  %v282 = vmul.f32 %v281, %v202
  %v283 = vmul.f32 %v282, %v281
  %v284 = vmul.f32 0.5, %v283
  %v285 = vsub.f32 1.5, %v284
  %v286 = vmul.f32 %v281, %v285
  %vm287 = vweird.f32 %v202
  %vm288 = vweird.f32 %v281
  %vm289 = vmor %vm287, %vm288
  %v290 = vsel %vm289, %v281, %v286
  %v291 = vrsqrt.pop %v203
  %v292 = vmul.f32 %v291, %v203
  %v293 = vmul.f32 %v292, %v291
  %v294 = vmul.f32 0.5, %v293
  %v295 = vsub.f32 1.5, %v294
  %v296 = vmul.f32 %v291, %v295
  %vm297 = vweird.f32 %v203
  %vm298 = vweird.f32 %v291
  %vm299 = vmor %vm297, %vm298
  %v300 = vsel %vm299, %v291, %v296
  %v301 = vrsqrt.pop %v204
  %v302 = vmul.f32 %v301, %v204
  %v303 = vmul.f32 %v302, %v301
  %v304 = vmul.f32 0.5, %v303
  %v305 = vsub.f32 1.5, %v304
  %v306 = vmul.f32 %v301, %v305
  %vm307 = vweird.f32 %v204
  %vm308 = vweird.f32 %v301
  %vm309 = vmor %vm307, %vm308
  %v310 = vsel %vm309, %v301, %v306
  %v311 = vrsqrt.pop %v205
  %v312 = vmul.f32 %v311, %v205
  %v313 = vmul.f32 %v312, %v311
  %v314 = vmul.f32 0.5, %v313
  %v315 = vsub.f32 1.5, %v314
  %v316 = vmul.f32 %v311, %v315
  %vm317 = vweird.f32 %v205
  %vm318 = vweird.f32 %v311
  %vm319 = vmor %vm317, %vm318
  %v320 = vsel %vm319, %v311, %v316
  %v321 = vrsqrt.pop %v206
  %v322 = vmul.f32 %v321, %v206
  %v323 = vmul.f32 %v322, %v321
  %v324 = vmul.f32 0.5, %v323
  %v325 = vsub.f32 1.5, %v324
  %v326 = vmul.f32 %v321, %v325
  %vm327 = vweird.f32 %v206
  %vm328 = vweird.f32 %v321
  %vm329 = vmor %vm327, %vm328
  %v330 = vsel %vm329, %v321, %v326
  %v331 = vrsqrt.pop %v207
  %v332 = vmul.f32 %v331, %v207
  %v333 = vmul.f32 %v332, %v331
  %v334 = vmul.f32 0.5, %v333
  %v335 = vsub.f32 1.5, %v334
  %v336 = vmul.f32 %v331, %v335
  %vm337 = vweird.f32 %v207
  %vm338 = vweird.f32 %v331
  %vm339 = vmor %vm337, %vm338
  %v340 = vsel %vm339, %v331, %v336
  %v341 = vrsqrt.pop %v208
  %v342 = vmul.f32 %v341, %v208
  %v343 = vmul.f32 %v342, %v341
  %v344 = vmul.f32 0.5, %v343
  %v345 = vsub.f32 1.5, %v344
  %v346 = vmul.f32 %v341, %v345
  %vm347 = vweird.f32 %v208
  %vm348 = vweird.f32 %v341
  %vm349 = vmor %vm347, %vm348
  %v350 = vsel %vm349, %v341, %v346
  %v351 = vrsqrt.pop %v209
  %v352 = vmul.f32 %v351, %v209
  %v353 = vmul.f32 %v352, %v351
  %v354 = vmul.f32 0.5, %v353
  %v355 = vsub.f32 1.5, %v354
  %v356 = vmul.f32 %v351, %v355
  %vm357 = vweird.f32 %v209
  %vm358 = vweird.f32 %v351
  %vm359 = vmor %vm357, %vm358
  %v360 = vsel %vm359, %v351, %v356
  %v361 = vrsqrt.pop %v210
  %v362 = vmul.f32 %v361, %v210
  %v363 = vmul.f32 %v362, %v361
  %v364 = vmul.f32 0.5, %v363
  %v365 = vsub.f32 1.5, %v364
  %v366 = vmul.f32 %v361, %v365
  %vm367 = vweird.f32 %v210
  %vm368 = vweird.f32 %v361
  %vm369 = vmor %vm367, %vm368
  %v370 = vsel %vm369, %v361, %v366
  %v371 = vmul.f32 %v99, %v220
  %v372 = vmul.f32 %v100, %v230
  %v373 = vmul.f32 %v101, %v240
  %v374 = vmul.f32 %v102, %v250
  %v375 = vmul.f32 %v103, %v260
  %v376 = vmul.f32 %v104, %v270
  %v377 = vmul.f32 %v105, %v280
  %v378 = vmul.f32 %v106, %v290
  %v379 = vmul.f32 %v107, %v300
  %v380 = vmul.f32 %v108, %v310
  %v381 = vmul.f32 %v109, %v320
  %v382 = vmul.f32 %v110, %v330
  %v383 = vmul.f32 %v111, %v340
  %v384 = vmul.f32 %v112, %v350
  %v385 = vmul.f32 %v113, %v360
  %v386 = vmul.f32 %v114, %v370
  %v388 = vperm.slane %v30, 0
  %v390 = vmul.f32 %v371, %v388
  %v391 = vmul.f32 %v372, %v388
  %v392 = vmul.f32 %v373, %v388
  %v393 = vmul.f32 %v374, %v388
  %v394 = vmul.f32 %v375, %v388
  %v395 = vmul.f32 %v376, %v388
  %v396 = vmul.f32 %v377, %v388
  %v397 = vmul.f32 %v378, %v388
  %v398 = vmul.f32 %v379, %v388
  %v399 = vmul.f32 %v380, %v388
  %v400 = vmul.f32 %v381, %v388
  %v401 = vmul.f32 %v382, %v388
  %v402 = vmul.f32 %v383, %v388
  %v403 = vmul.f32 %v384, %v388
  %v404 = vmul.f32 %v385, %v388
  %v405 = vmul.f32 %v386, %v388
  %v407 = vperm.slane %v31, 0
  %v409 = vadd.f32 %v390, %v407
  %v410 = vadd.f32 %v391, %v407
  %v411 = vadd.f32 %v392, %v407
  %v412 = vadd.f32 %v393, %v407
  %v413 = vadd.f32 %v394, %v407
  %v414 = vadd.f32 %v395, %v407
  %v415 = vadd.f32 %v396, %v407
  %v416 = vadd.f32 %v397, %v407
  %v417 = vadd.f32 %v398, %v407
  %v418 = vadd.f32 %v399, %v407
  %v419 = vadd.f32 %v400, %v407
  %v420 = vadd.f32 %v401, %v407
  %v421 = vadd.f32 %v402, %v407
  %v422 = vadd.f32 %v403, %v407
  %v423 = vadd.f32 %v404, %v407
  %v424 = vadd.f32 %v405, %v407
  %425 = vst [vmem:[%s3] sm:$0xff] %v409
  %426 = vst [vmem:[%s3 + $0x8] sm:$0xff] %v410
  %427 = vst [vmem:[%s3 + $0x10] sm:$0xff] %v411
  %428 = vst [vmem:[%s3 + $0x18] sm:$0xff] %v412
  %429 = vst [vmem:[%s3 + $0x20] sm:$0xff] %v413
  %430 = vst [vmem:[%s3 + $0x28] sm:$0xff] %v414
  %431 = vst [vmem:[%s3 + $0x30] sm:$0xff] %v415
  %432 = vst [vmem:[%s3 + $0x38] sm:$0xff] %v416
  %433 = vst [vmem:[%s3 + $0x40] sm:$0xff] %v417
  %434 = vst [vmem:[%s3 + $0x48] sm:$0xff] %v418
  %435 = vst [vmem:[%s3 + $0x50] sm:$0xff] %v419
  %436 = vst [vmem:[%s3 + $0x58] sm:$0xff] %v420
  %437 = vst [vmem:[%s3 + $0x60] sm:$0xff] %v421
  %438 = vst [vmem:[%s3 + $0x68] sm:$0xff] %v422
  %439 = vst [vmem:[%s3 + $0x70] sm:$0xff] %v423
  %440 = vst [vmem:[%s3 + $0x78] sm:$0xff] %v424
  // Predicated region
  $region14: #{fuxi_forward.24} parent=0 // pred_check
    _
  $region15: #{fuxi_forward.24} parent=0 // pred_check_branch
    %442 = sbr.rel (0) target = $region17
  $region16: #{fuxi_forward.24} parent=0 // pred_region
    _
  $region17: #{fuxi_forward.24} parent=0 // pred_fallthru
    _
  // Predicated region
  $region18: #{fuxi_forward.24} parent=0 // pred_check
    _
  $region19: #{fuxi_forward.24} parent=0 // pred_check_branch
    %444 = sbr.rel (0) target = $region21
  $region20: #{fuxi_forward.24} parent=0 // pred_region
    _
  $region21: #{fuxi_forward.24} parent=0 // pred_fallthru
    _

// kernel: fuxi_forward.25
$region0: #{fuxi_forward.25}
  #allocation0 [shape = 'u32[]', space=smem, size = 0x4, offset = 0x4, fixed_abs, tag = 'smem constant byte address 0x4 - core index']
  #allocation1 [shape = 'u32[72,128]{1,0:T(1,128)}', space=vmem, size = 0x9000, scoped, tag = 'internal scratch']
  %s0 = inlined_call_operand.vmem [shape: f32[2,8,128], index: 0, kind: input, shape index: {}]
  %s1 = inlined_call_operand.vmem [shape: f32[2,1,128], index: 1, kind: input, shape index: {}]
  %s2 = inlined_call_operand.vmem [shape: f32[2,1,128], index: 2, kind: input, shape index: {}]
  %s3 = inlined_call_operand.vmem [shape: f32[2,8,128], index: 3, kind: output, shape index: {}]
  %s4 = sld [smem:[#allocation0]]
  $region45: #{fuxi_forward.25} parent=0
    _
  %s6 = ssub.s32 1, %s4
  %s7 = scalar_select 0, %s6, %s4
  loop: start=0, step=1, limit=4
  $region2: #{fuxi_forward.25} parent=0 // loop_pre_header
    _
  $region3: #{fuxi_forward.25} parent=0 // loop_header
    %s9 = sphi 0, %s13
    %p10 = scmp.ge.s32.totalorder %s9, 4
    %s16 = sphi 0, %s28
    %s17 = sphi 0, %s24
    %s18 = sphi 0, %s16
    %s19 = sphi 0, %s17
    %s20 = sphi 0, %s18
    %s21 = sphi 0, %s19
    %s33 = sphi 0, %s35
    %s36 = sphi 0, %s33
    %s37 = sphi 0, %s36
    %s53 = sphi 0, %s37
    %s59 = sphi 0, %s61
    %s62 = sphi 0, %s59
    %s63 = sphi 0, %s62
    %s79 = sphi 0, %s63
    %s85 = sphi 0, %s87
    %s88 = sphi 0, %s85
    %s89 = sphi 0, %s88
    %s105 = sphi 0, %s89
    %s113 = sphi 0, %s115
    %s116 = sphi 0, %s113
    %s117 = sphi 0, %s116
    %s133 = sphi 0, %s117
  $region4: #{fuxi_forward.25} parent=0 // loop_header_branch
    %12 = sbr.rel (%p10) target = $region8
  $region5: #{fuxi_forward.25} parent=0 // loop_body
    %s14 = ssub.s32 %s9, 1
    %s15 = ssub.s32 %s9, 2
    %s22 = sadd.s32 1, %s17
    %p23 = scmp.ge.s32.totalorder %s22, 1
    %s24 = scalar_select %p23, 0, %s22
    %s25 = sadd.s32 1, %s16
    %s26 = scalar_select %p23, %s25, %s16
    %p27 = scmp.ge.s32.totalorder %s26, 2
    %s28 = scalar_select %p27, 0, %s26
    %s29 = ssub.s32 %s16, %s28
    %s30 = ssub.s32 %s17, %s24
    %s31 = sor.u32 %s29, %s30
    %p32 = scmp.eq.s32.totalorder %s31, 0
    %s34 = sadd.s32 %s33, 1
    %s35 = scalar_select %p32, %s33, %s34
    %p38 = pneg %p32
    %p39 = scmp.eq.s32.totalorder %s9, 1
    %p40 = por %p38, %p39
    %p41 = scmp.ne.s32.totalorder %s33, %s36
    %p42 = scmp.eq.s32.totalorder %s9, 0
    %p43 = por %p41, %p42
    %p44 = scmp.ne.s32.totalorder %s33, %s36
    %p45 = scmp.eq.s32.totalorder %s14, 1
    %p46 = por %p44, %p45
    %p47 = scmp.ne.s32.totalorder %s36, %s37
    %p48 = scmp.eq.s32.totalorder %s14, 0
    %p49 = por %p47, %p48
    %p50 = scmp.ne.s32.totalorder %s36, %s37
    %p51 = scmp.eq.s32.totalorder %s15, 1
    %p52 = por %p50, %p51
    %p54 = scmp.ne.s32.totalorder %s37, %s53
    %p55 = scmp.eq.s32.totalorder %s15, 0
    %p56 = por %p54, %p55
    %s57 = ssub.s32 %s16, %s28
    %p58 = scmp.eq.s32.totalorder %s57, 0
    %s60 = sadd.s32 %s59, 1
    %s61 = scalar_select %p58, %s59, %s60
    %p64 = pneg %p58
    %p65 = scmp.eq.s32.totalorder %s9, 1
    %p66 = por %p64, %p65
    %p67 = scmp.ne.s32.totalorder %s59, %s62
    %p68 = scmp.eq.s32.totalorder %s9, 0
    %p69 = por %p67, %p68
    %p70 = scmp.ne.s32.totalorder %s59, %s62
    %p71 = scmp.eq.s32.totalorder %s14, 1
    %p72 = por %p70, %p71
    %p73 = scmp.ne.s32.totalorder %s62, %s63
    %p74 = scmp.eq.s32.totalorder %s14, 0
    %p75 = por %p73, %p74
    %p76 = scmp.ne.s32.totalorder %s62, %s63
    %p77 = scmp.eq.s32.totalorder %s15, 1
    %p78 = por %p76, %p77
    %p80 = scmp.ne.s32.totalorder %s63, %s79
    %p81 = scmp.eq.s32.totalorder %s15, 0
    %p82 = por %p80, %p81
    %s83 = ssub.s32 %s16, %s28
    %p84 = scmp.eq.s32.totalorder %s83, 0
    %s86 = sadd.s32 %s85, 1
    %s87 = scalar_select %p84, %s85, %s86
    %p90 = pneg %p84
    %p91 = scmp.eq.s32.totalorder %s9, 1
    %p92 = por %p90, %p91
    %p93 = scmp.ne.s32.totalorder %s85, %s88
    %p94 = scmp.eq.s32.totalorder %s9, 0
    %p95 = por %p93, %p94
    %p96 = scmp.ne.s32.totalorder %s85, %s88
    %p97 = scmp.eq.s32.totalorder %s14, 1
    %p98 = por %p96, %p97
    %p99 = scmp.ne.s32.totalorder %s88, %s89
    %p100 = scmp.eq.s32.totalorder %s14, 0
    %p101 = por %p99, %p100
    %p102 = scmp.ne.s32.totalorder %s88, %s89
    %p103 = scmp.eq.s32.totalorder %s15, 1
    %p104 = por %p102, %p103
    %p106 = scmp.ne.s32.totalorder %s89, %s105
    %p107 = scmp.eq.s32.totalorder %s15, 0
    %p108 = por %p106, %p107
    %s109 = ssub.s32 %s16, %s28
    %s110 = ssub.s32 %s17, %s24
    %s111 = sor.u32 %s109, %s110
    %p112 = scmp.eq.s32.totalorder %s111, 0
    %s114 = sadd.s32 %s113, 1
    %s115 = scalar_select %p112, %s113, %s114
    %p118 = pneg %p112
    %p119 = scmp.eq.s32.totalorder %s9, 1
    %p120 = por %p118, %p119
    %p121 = scmp.ne.s32.totalorder %s113, %s116
    %p122 = scmp.eq.s32.totalorder %s9, 0
    %p123 = por %p121, %p122
    %p124 = scmp.ne.s32.totalorder %s113, %s116
    %p125 = scmp.eq.s32.totalorder %s14, 1
    %p126 = por %p124, %p125
    %p127 = scmp.ne.s32.totalorder %s116, %s117
    %p128 = scmp.eq.s32.totalorder %s14, 0
    %p129 = por %p127, %p128
    %p130 = scmp.ne.s32.totalorder %s116, %s117
    %p131 = scmp.eq.s32.totalorder %s15, 1
    %p132 = por %p130, %p131
    %p134 = scmp.ne.s32.totalorder %s117, %s133
    %p135 = scmp.eq.s32.totalorder %s15, 0
    %p136 = por %p134, %p135
    %p137 = scmp.le.s32.totalorder 1, %s9
    %p138 = scmp.lt.s32.totalorder %s9, 3
    %p139 = pnand %p137, %p138
    %p140 = pneg %p139
    // Predicated region
    $region9: #{fuxi_forward.25} parent=5 // pred_check
      _
    $region10: #{fuxi_forward.25} parent=5 // pred_check_branch
      %142 = sbr.rel (%p139) target = $region12
    $region11: #{fuxi_forward.25} parent=5 // pred_region
      %s143 = ssub.s32 %s9, 1
    $region12: #{fuxi_forward.25} parent=5 // pred_fallthru
      _
    %p144 = scmp.lt.s32.totalorder %s9, 2
    // Predicated region
    $region13: #{fuxi_forward.25} parent=5 // pred_check
      %p145 = pneg %p144
    $region14: #{fuxi_forward.25} parent=5 // pred_check_branch
      %147 = sbr.rel (%p145) target = $region16
    $region15: #{fuxi_forward.25} parent=5 // pred_region
      // Predicated region
      $region17: #{fuxi_forward.25} parent=15 // pred_check
        %p148 = pneg %p43
      $region18: #{fuxi_forward.25} parent=15 // pred_check_branch
        %150 = sbr.rel (%p148) target = $region20
      $region19: #{fuxi_forward.25} parent=15 // pred_region
        %p151 = scmp.lt.s32.totalorder %s16, 1
        %s152 = scalar_select %p151, %s16, 1
        %p153 = scmp.lt.s32.totalorder %s17, 0
        %s154 = scalar_select %p153, %s17, 0
        %s155 = sadd.s32 %s154, %s152
        %s156 = smul.addr %s155, 8
        %s157 = scalar_lea.vmem %s0, %s156
      $region20: #{fuxi_forward.25} parent=15 // pred_fallthru
        _
      // Predicated region
      $region21: #{fuxi_forward.25} parent=15 // pred_check
        %p158 = pneg %p69
      $region22: #{fuxi_forward.25} parent=15 // pred_check_branch
        %160 = sbr.rel (%p158) target = $region24
      $region23: #{fuxi_forward.25} parent=15 // pred_region
        %p161 = scmp.lt.s32.totalorder %s16, 1
        %s162 = scalar_select %p161, %s16, 1
        %s163 = scalar_lea.vmem %s1, %s162
      $region24: #{fuxi_forward.25} parent=15 // pred_fallthru
        _
      // Predicated region
      $region25: #{fuxi_forward.25} parent=15 // pred_check
        %p164 = pneg %p95
      $region26: #{fuxi_forward.25} parent=15 // pred_check_branch
        %166 = sbr.rel (%p164) target = $region28
      $region27: #{fuxi_forward.25} parent=15 // pred_region
        %p167 = scmp.lt.s32.totalorder %s16, 1
        %s168 = scalar_select %p167, %s16, 1
        %s169 = scalar_lea.vmem %s2, %s168
      $region28: #{fuxi_forward.25} parent=15 // pred_fallthru
        _
    $region16: #{fuxi_forward.25} parent=5 // pred_fallthru
      _
    %p170 = scmp.le.s32.totalorder 1, %s9
    %p171 = scmp.lt.s32.totalorder %s9, 3
    %p172 = pnand %p170, %p171
    %p173 = pneg %p172
    // Predicated region
    $region29: #{fuxi_forward.25} parent=5 // pred_check
      _
    $region30: #{fuxi_forward.25} parent=5 // pred_check_branch
      %175 = sbr.rel (%p172) target = $region32
    $region31: #{fuxi_forward.25} parent=5 // pred_region
      %s176 = ssub.s32 %s9, 1
      %p177 = scmp.lt.s32.totalorder %s18, 1
      %s178 = scalar_select %p177, %s18, 1
      %p179 = scmp.lt.s32.totalorder %s19, 0
      %s180 = scalar_select %p179, %s19, 0
      %s181 = sadd.s32 %s180, %s178
      %s182 = smul.addr %s181, 8
      %s183 = scalar_lea.vmem %s0, %s182
      %p184 = pneg %p49
      %p185 = pneg %p46
      %p186 = scmp.lt.s32.totalorder %s18, 1
      %s187 = scalar_select %p186, %s18, 1
      %s188 = scalar_lea.vmem %s1, %s187
      %p189 = pneg %p75
      %p190 = pneg %p72
      %p191 = scmp.lt.s32.totalorder %s18, 1
      %s192 = scalar_select %p191, %s18, 1
      %s193 = scalar_lea.vmem %s2, %s192
      %p194 = pneg %p101
      %p195 = pneg %p98
      %p196 = pneg %p129
      %p197 = pneg %p126
      %p198 = scmp.lt.s32.totalorder %s18, 1
      %s199 = scalar_select %p198, %s18, 1
      %p200 = scmp.lt.s32.totalorder %s19, 0
      %s201 = scalar_select %p200, %s19, 0
      %s202 = sadd.s32 %s201, %s199
      %s203 = smul.addr %s202, 8
      %s204 = scalar_lea.vmem %s3, %s203
      %p205 = scmp.lt.s32.totalorder %s18, 1
      %s206 = scalar_select %p205, %s18, 1
      %p207 = scmp.lt.s32.totalorder %s19, 0
      %s208 = scalar_select %p207, %s19, 0
      %s209 = sadd.s32 %s208, %s206
      %s210 = smul.addr %s209, 8
      %s211 = scalar_lea.vmem %s0, %s210
      %p212 = scmp.lt.s32.totalorder %s18, 1
      %s213 = scalar_select %p212, %s18, 1
      %s214 = scalar_lea.vmem %s1, %s213
      %p215 = scmp.lt.s32.totalorder %s18, 1
      %s216 = scalar_select %p215, %s18, 1
      %s217 = scalar_lea.vmem %s2, %s216
      %p218 = scmp.lt.s32.totalorder %s18, 1
      %s219 = scalar_select %p218, %s18, 1
      %p220 = scmp.lt.s32.totalorder %s19, 0
      %s221 = scalar_select %p220, %s19, 0
      %s222 = sadd.s32 %s221, %s219
      %s223 = smul.addr %s222, 8
      %s224 = scalar_lea.vmem %s3, %s223
      %v225 = vld [vmem:[%s211] sm:$0xff]
      %v226 = vld [vmem:[%s214] sm:$0x1]
      %v227 = vld [vmem:[%s217] sm:$0x1]
      %v228 = vlaneseq
      %v229 = vand.u32 %v228, 127
      %vm230 = vcmp.lt.s32.totalorder %v229, 128
      %v231 = vsel %vm230, %v225, 0.0
      %232 = vadd.xlane.f32.xlu0 %v231
      %v233 = vpop.xlane.xlu0 %232
      %v234 = vmul.f32 %v233, 0.0078125
      %v235 = vsub.f32 %v225, %v234
      %v236 = vsel %vm230, %v235, 0.0
      %v237 = vmul.f32 %v236, %v236
      %238 = vadd.xlane.f32.xlu0 %v237
      %v239 = vpop.xlane.xlu0 %238
      %v240 = vmul.f32 %v239, 0.0078125
      %v241 = vadd.f32 %v240, 1e-05
      %v242 = vrsqrt.pop %v241
      %v243 = vmul.f32 %v242, %v241
      %v244 = vmul.f32 %v243, %v242
      %v245 = vmul.f32 0.5, %v244
      %v246 = vsub.f32 1.5, %v245
      %v247 = vmul.f32 %v242, %v246
      %vm248 = vweird.f32 %v241
      %vm249 = vweird.f32 %v242
      %vm250 = vmor %vm248, %vm249
      %v251 = vsel %vm250, %v242, %v247
      %v252 = vmul.f32 %v235, %v251
      %v254 = vperm.slane %v226, 0
      %v256 = vmul.f32 %v252, %v254
      %v258 = vperm.slane %v227, 0
      %v260 = vadd.f32 %v256, %v258
      %v261 = vsub.f32 0.0, %v260
      %v262 = vmul.f32 %v261, 1.442695
      %v263 = vpow.pop %v262
      %v264 = vadd.f32 %v263, 1.0
      %v265 = vrcp.pop %v264
      %v266 = vmul.f32 %v260, %v265
      %267 = vst [vmem:[%s224] sm:$0xff] %v266
      %p268 = scmp.lt.s32.totalorder %s18, 1
      %s269 = scalar_select %p268, %s18, 1
      %p270 = scmp.lt.s32.totalorder %s19, 0
      %s271 = scalar_select %p270, %s19, 0
      %s272 = sadd.s32 %s271, %s269
      %s273 = smul.addr %s272, 8
      %s274 = scalar_lea.vmem %s3, %s273
      // Predicated region
      $region33: #{fuxi_forward.25} parent=31 // pred_check
        %p275 = pneg %p126
      $region34: #{fuxi_forward.25} parent=31 // pred_check_branch
        %277 = sbr.rel (%p275) target = $region36
      $region35: #{fuxi_forward.25} parent=31 // pred_region
        _
      $region36: #{fuxi_forward.25} parent=31 // pred_fallthru
        _
    $region32: #{fuxi_forward.25} parent=5 // pred_fallthru
      _
    %p278 = scmp.le.s32.totalorder 2, %s9
    // Predicated region
    $region37: #{fuxi_forward.25} parent=5 // pred_check
      %p279 = pneg %p278
    $region38: #{fuxi_forward.25} parent=5 // pred_check_branch
      %281 = sbr.rel (%p279) target = $region40
    $region39: #{fuxi_forward.25} parent=5 // pred_region
      %s282 = ssub.s32 %s9, 2
      // Predicated region
      $region41: #{fuxi_forward.25} parent=39 // pred_check
        %p283 = pneg %p132
      $region42: #{fuxi_forward.25} parent=39 // pred_check_branch
        %285 = sbr.rel (%p283) target = $region44
      $region43: #{fuxi_forward.25} parent=39 // pred_region
        %p286 = scmp.lt.s32.totalorder %s20, 1
        %s287 = scalar_select %p286, %s20, 1
        %p288 = scmp.lt.s32.totalorder %s21, 0
        %s289 = scalar_select %p288, %s21, 0
        %s290 = sadd.s32 %s289, %s287
        %s291 = smul.addr %s290, 8
        %s292 = scalar_lea.vmem %s3, %s291
      $region44: #{fuxi_forward.25} parent=39 // pred_fallthru
        _
    $region40: #{fuxi_forward.25} parent=5 // pred_fallthru
      _
  $region6: #{fuxi_forward.25} parent=0 // loop_footer
    %s13 = sadd.s32 1, %s9
  $region7: #{fuxi_forward.25} parent=0 // loop_footer_branch
    %8 = sbr.rel target = $region3
  $region8: #{fuxi_forward.25} parent=0 // loop_exit
    _

// kernel: fuxi_forward.27
$region0: #{fuxi_forward.27}
  #allocation0 [shape = 'u32[]', space=smem, size = 0x4, offset = 0x4, fixed_abs, tag = 'smem constant byte address 0x4 - core index']
  #allocation1 [shape = 'u32[72,128]{1,0:T(1,128)}', space=vmem, size = 0x9000, scoped, tag = 'internal scratch']
  #allocation2 [shape = 'f32[32,128]{1,0:T(8,128)}', space=vmem, size = 0x4000, scoped, tag = 'scratch operand']
  %s0 = inlined_call_operand.vmem [shape: bf16[32,128], index: 0, kind: input, shape index: {}]
  %s1 = inlined_call_operand.vmem [shape: bf16[128,128], index: 1, kind: input, shape index: {}]
  %s2 = inlined_call_operand.vmem [shape: f32[1,128], index: 2, kind: input, shape index: {}]
  %s3 = inlined_call_operand.vmem [shape: f32[32,128], index: 3, kind: output, shape index: {}]
  %s4 = sld [smem:[#allocation0]]
  $region30: #{fuxi_forward.27} parent=0
    _
  %s6 = ssub.s32 1, %s4
  %s7 = scalar_select 0, %s6, %s4
  // Predicated region
  $region2: #{fuxi_forward.27} parent=0 // pred_check
    _
  $region3: #{fuxi_forward.27} parent=0 // pred_check_branch
    %9 = sbr.rel (0) target = $region5
  $region4: #{fuxi_forward.27} parent=0 // pred_region
    _
  $region5: #{fuxi_forward.27} parent=0 // pred_fallthru
    _
  // Predicated region
  $region6: #{fuxi_forward.27} parent=0 // pred_check
    _
  $region7: #{fuxi_forward.27} parent=0 // pred_check_branch
    %11 = sbr.rel (0) target = $region9
  $region8: #{fuxi_forward.27} parent=0 // pred_region
    _
  $region9: #{fuxi_forward.27} parent=0 // pred_fallthru
    _
  // Predicated region
  $region10: #{fuxi_forward.27} parent=0 // pred_check
    _
  $region11: #{fuxi_forward.27} parent=0 // pred_check_branch
    %13 = sbr.rel (0) target = $region13
  $region12: #{fuxi_forward.27} parent=0 // pred_region
    _
  $region13: #{fuxi_forward.27} parent=0 // pred_fallthru
    _
  %p14 = scmp.eq.s32.totalorder 0, 0
  // Predicated region
  $region14: #{fuxi_forward.27} parent=0 // pred_check
    %p15 = pneg %p14
  $region15: #{fuxi_forward.27} parent=0 // pred_check_branch
    %17 = sbr.rel (%p15) target = $region17
  $region16: #{fuxi_forward.27} parent=0 // pred_region
    %18 = vst [vmem:[#allocation2] sm:$0xff] 0.0
    %19 = vst [vmem:[#allocation2 + $0x8] sm:$0xff] 0.0
    %20 = vst [vmem:[#allocation2 + $0x10] sm:$0xff] 0.0
    %21 = vst [vmem:[#allocation2 + $0x18] sm:$0xff] 0.0
  $region17: #{fuxi_forward.27} parent=0 // pred_fallthru
    _
  %v22 = vld [vmem:[#allocation2] sm:$0xff]
  %v23 = vld [vmem:[#allocation2 + $0x8] sm:$0xff]
  %v24 = vld [vmem:[#allocation2 + $0x10] sm:$0xff]
  %v25 = vld [vmem:[#allocation2 + $0x18] sm:$0xff]
  %v26 = vld [vmem:[%s0] sm:$0xf]
  %v27 = vld [vmem:[%s0 + $0x4] sm:$0xf]
  %v28 = vld [vmem:[%s0 + $0x8] sm:$0xf]
  %v29 = vld [vmem:[%s0 + $0xc] sm:$0xf]
  %v30 = vld [vmem:[%s1] sm:$0xf]
  %v31 = vld [vmem:[%s1 + $0x4] sm:$0xf]
  %v32 = vld [vmem:[%s1 + $0x8] sm:$0xf]
  %v33 = vld [vmem:[%s1 + $0xc] sm:$0xf]
  %v34 = vld [vmem:[%s1 + $0x10] sm:$0xf]
  %v35 = vld [vmem:[%s1 + $0x14] sm:$0xf]
  %v36 = vld [vmem:[%s1 + $0x18] sm:$0xf]
  %v37 = vld [vmem:[%s1 + $0x1c] sm:$0xf]
  %v38 = vld [vmem:[%s1 + $0x20] sm:$0xf]
  %v39 = vld [vmem:[%s1 + $0x24] sm:$0xf]
  %v40 = vld [vmem:[%s1 + $0x28] sm:$0xf]
  %v41 = vld [vmem:[%s1 + $0x2c] sm:$0xf]
  %v42 = vld [vmem:[%s1 + $0x30] sm:$0xf]
  %v43 = vld [vmem:[%s1 + $0x34] sm:$0xf]
  %v44 = vld [vmem:[%s1 + $0x38] sm:$0xf]
  %v45 = vld [vmem:[%s1 + $0x3c] sm:$0xf]
  %v50 = vunpack.c.l.b16 %v26
  %v51 = vunpack.c.l.b16 %v27
  %v52 = vunpack.c.l.b16 %v28
  %v53 = vunpack.c.l.b16 %v29
  %v54 = vpack.c.b16 %v51, %v50
  %v55 = vpack.c.b16 %v53, %v52
  %v74 = vunpack.c.l.b16 %v30
  %v75 = vunpack.c.l.b16 %v31
  %v76 = vunpack.c.l.b16 %v32
  %v77 = vunpack.c.l.b16 %v33
  %v78 = vunpack.c.l.b16 %v34
  %v79 = vunpack.c.l.b16 %v35
  %v80 = vunpack.c.l.b16 %v36
  %v81 = vunpack.c.l.b16 %v37
  %v82 = vunpack.c.l.b16 %v38
  %v83 = vunpack.c.l.b16 %v39
  %v84 = vunpack.c.l.b16 %v40
  %v85 = vunpack.c.l.b16 %v41
  %v86 = vunpack.c.l.b16 %v42
  %v87 = vunpack.c.l.b16 %v43
  %v88 = vunpack.c.l.b16 %v44
  %v89 = vunpack.c.l.b16 %v45
  %v90 = vpack.c.b16 %v75, %v74
  %v91 = vpack.c.b16 %v77, %v76
  %v92 = vpack.c.b16 %v79, %v78
  %v93 = vpack.c.b16 %v81, %v80
  %v94 = vpack.c.b16 %v83, %v82
  %v95 = vpack.c.b16 %v85, %v84
  %v96 = vpack.c.b16 %v87, %v86
  %v97 = vpack.c.b16 %v89, %v88
  %106 = vmatpush.bf16.msra.mxu0 %v97
  %107 = vmatpush.bf16.msra.mxu0 %v96
  %108 = vmatpush.bf16.msra.mxu0 %v95
  %109 = vmatpush.bf16.msra.mxu0 %v94
  %110 = vmatpush.bf16.msra.mxu0 %v93
  %111 = vmatpush.bf16.msra.mxu0 %v92
  %112 = vmatpush.bf16.msra.mxu0 %v91
  %113 = vmatpush.bf16.msra.mxu0 %v90
  %114 = vmatmul.bf16.gmra.mxu0 %v54
  %v115 = vpop.f32.mrf.mxu0
  %v116 = vadd.f32 0.0, %v115
  %v117 = vpop.f32.mrf.mxu0
  %v118 = vadd.f32 0.0, %v117
  %119 = vmatmul.bf16.gmra.mxu0 %v55
  %v120 = vpop.f32.mrf.mxu0
  %v121 = vadd.f32 0.0, %v120
  %v122 = vpop.f32.mrf.mxu0
  %v123 = vadd.f32 0.0, %v122
  %124 = vdwg.mxu0
  %v125 = vadd.f32 %v22, %v116
  %v126 = vadd.f32 %v23, %v118
  %v127 = vadd.f32 %v24, %v121
  %v128 = vadd.f32 %v25, %v123
  %129 = vst [vmem:[#allocation2] sm:$0xff] %v125
  %130 = vst [vmem:[#allocation2 + $0x8] sm:$0xff] %v126
  %131 = vst [vmem:[#allocation2 + $0x10] sm:$0xff] %v127
  %132 = vst [vmem:[#allocation2 + $0x18] sm:$0xff] %v128
  // Predicated region
  $region18: #{fuxi_forward.27} parent=0 // pred_check
    %p133 = pneg %p14
  $region19: #{fuxi_forward.27} parent=0 // pred_check_branch
    %135 = sbr.rel (%p133) target = $region21
  $region20: #{fuxi_forward.27} parent=0 // pred_region
    %v136 = vld [vmem:[#allocation2] sm:$0xff]
    %v137 = vld [vmem:[#allocation2 + $0x8] sm:$0xff]
    %v138 = vld [vmem:[#allocation2 + $0x10] sm:$0xff]
    %v139 = vld [vmem:[#allocation2 + $0x18] sm:$0xff]
    %v140 = vld [vmem:[%s2] sm:$0x1]
    %v142 = vperm.slane %v140, 0
    %v144 = vadd.f32 %v136, %v142
    %v145 = vadd.f32 %v137, %v142
    %v146 = vadd.f32 %v138, %v142
    %v147 = vadd.f32 %v139, %v142
    %148 = vst [vmem:[%s3] sm:$0xff] %v144
    %149 = vst [vmem:[%s3 + $0x8] sm:$0xff] %v145
    %150 = vst [vmem:[%s3 + $0x10] sm:$0xff] %v146
    %151 = vst [vmem:[%s3 + $0x18] sm:$0xff] %v147
  $region21: #{fuxi_forward.27} parent=0 // pred_fallthru
    _
  // Predicated region
  $region22: #{fuxi_forward.27} parent=0 // pred_check
    _
  $region23: #{fuxi_forward.27} parent=0 // pred_check_branch
    %153 = sbr.rel (0) target = $region25
  $region24: #{fuxi_forward.27} parent=0 // pred_region
    _
  $region25: #{fuxi_forward.27} parent=0 // pred_fallthru
    _
  // Predicated region
  $region26: #{fuxi_forward.27} parent=0 // pred_check
    _
  $region27: #{fuxi_forward.27} parent=0 // pred_check_branch
    %155 = sbr.rel (0) target = $region29
  $region28: #{fuxi_forward.27} parent=0 // pred_region
    _
  $region29: #{fuxi_forward.27} parent=0 // pred_fallthru
    _

// kernel: fuxi_forward.31
$region0: #{fuxi_forward.31}
  #allocation0 [shape = 'u32[]', space=smem, size = 0x4, offset = 0x4, fixed_abs, tag = 'smem constant byte address 0x4 - core index']
  #allocation1 [shape = 'u32[72,128]{1,0:T(1,128)}', space=vmem, size = 0x9000, scoped, tag = 'internal scratch']
  %s0 = inlined_call_operand.vmem [shape: f32[1,32,128], index: 0, kind: input, shape index: {}]
  %s1 = inlined_call_operand.vmem [shape: f32[1,1,128], index: 1, kind: input, shape index: {}]
  %s2 = inlined_call_operand.vmem [shape: f32[1,1,128], index: 2, kind: input, shape index: {}]
  %s3 = inlined_call_operand.vmem [shape: f32[1,32,128], index: 3, kind: output, shape index: {}]
  %s4 = sld [smem:[#allocation0]]
  $region22: #{fuxi_forward.31} parent=0
    _
  %s6 = ssub.s32 1, %s4
  %s7 = scalar_select 0, %s6, %s4
  // Predicated region
  $region2: #{fuxi_forward.31} parent=0 // pred_check
    _
  $region3: #{fuxi_forward.31} parent=0 // pred_check_branch
    %9 = sbr.rel (0) target = $region5
  $region4: #{fuxi_forward.31} parent=0 // pred_region
    _
  $region5: #{fuxi_forward.31} parent=0 // pred_fallthru
    _
  // Predicated region
  $region6: #{fuxi_forward.31} parent=0 // pred_check
    _
  $region7: #{fuxi_forward.31} parent=0 // pred_check_branch
    %11 = sbr.rel (0) target = $region9
  $region8: #{fuxi_forward.31} parent=0 // pred_region
    _
  $region9: #{fuxi_forward.31} parent=0 // pred_fallthru
    _
  // Predicated region
  $region10: #{fuxi_forward.31} parent=0 // pred_check
    _
  $region11: #{fuxi_forward.31} parent=0 // pred_check_branch
    %13 = sbr.rel (0) target = $region13
  $region12: #{fuxi_forward.31} parent=0 // pred_region
    _
  $region13: #{fuxi_forward.31} parent=0 // pred_fallthru
    _
  %v14 = vld [vmem:[%s0] sm:$0xff]
  %v15 = vld [vmem:[%s0 + $0x8] sm:$0xff]
  %v16 = vld [vmem:[%s0 + $0x10] sm:$0xff]
  %v17 = vld [vmem:[%s0 + $0x18] sm:$0xff]
  %v18 = vld [vmem:[%s1] sm:$0x1]
  %v19 = vld [vmem:[%s2] sm:$0x1]
  %v20 = vlaneseq
  %v21 = vand.u32 %v20, 127
  %vm22 = vcmp.lt.s32.totalorder %v21, 16
  %v23 = vsel %vm22, %v14, 0.0
  %v24 = vsel %vm22, %v15, 0.0
  %v25 = vsel %vm22, %v16, 0.0
  %v26 = vsel %vm22, %v17, 0.0
  %27 = vadd.xlane.f32.xlu0 %v23
  %v28 = vpop.xlane.xlu0 %27
  %29 = vadd.xlane.f32.xlu0 %v24
  %v30 = vpop.xlane.xlu0 %29
  %31 = vadd.xlane.f32.xlu0 %v25
  %v32 = vpop.xlane.xlu0 %31
  %33 = vadd.xlane.f32.xlu0 %v26
  %v34 = vpop.xlane.xlu0 %33
  %v35 = vmul.f32 %v28, 0.0625
  %v36 = vmul.f32 %v30, 0.0625
  %v37 = vmul.f32 %v32, 0.0625
  %v38 = vmul.f32 %v34, 0.0625
  %v39 = vsub.f32 %v14, %v35
  %v40 = vsub.f32 %v15, %v36
  %v41 = vsub.f32 %v16, %v37
  %v42 = vsub.f32 %v17, %v38
  %v43 = vsel %vm22, %v39, 0.0
  %v44 = vsel %vm22, %v40, 0.0
  %v45 = vsel %vm22, %v41, 0.0
  %v46 = vsel %vm22, %v42, 0.0
  %v47 = vmul.f32 %v43, %v43
  %v48 = vmul.f32 %v44, %v44
  %v49 = vmul.f32 %v45, %v45
  %v50 = vmul.f32 %v46, %v46
  %51 = vadd.xlane.f32.xlu0 %v47
  %v52 = vpop.xlane.xlu0 %51
  %53 = vadd.xlane.f32.xlu0 %v48
  %v54 = vpop.xlane.xlu0 %53
  %55 = vadd.xlane.f32.xlu0 %v49
  %v56 = vpop.xlane.xlu0 %55
  %57 = vadd.xlane.f32.xlu0 %v50
  %v58 = vpop.xlane.xlu0 %57
  %v59 = vmul.f32 %v52, 0.0625
  %v60 = vmul.f32 %v54, 0.0625
  %v61 = vmul.f32 %v56, 0.0625
  %v62 = vmul.f32 %v58, 0.0625
  %v63 = vadd.f32 %v59, 1e-05
  %v64 = vadd.f32 %v60, 1e-05
  %v65 = vadd.f32 %v61, 1e-05
  %v66 = vadd.f32 %v62, 1e-05
  %v67 = vrsqrt.pop %v63
  %v68 = vmul.f32 %v67, %v63
  %v69 = vmul.f32 %v68, %v67
  %v70 = vmul.f32 0.5, %v69
  %v71 = vsub.f32 1.5, %v70
  %v72 = vmul.f32 %v67, %v71
  %vm73 = vweird.f32 %v63
  %vm74 = vweird.f32 %v67
  %vm75 = vmor %vm73, %vm74
  %v76 = vsel %vm75, %v67, %v72
  %v77 = vrsqrt.pop %v64
  %v78 = vmul.f32 %v77, %v64
  %v79 = vmul.f32 %v78, %v77
  %v80 = vmul.f32 0.5, %v79
  %v81 = vsub.f32 1.5, %v80
  %v82 = vmul.f32 %v77, %v81
  %vm83 = vweird.f32 %v64
  %vm84 = vweird.f32 %v77
  %vm85 = vmor %vm83, %vm84
  %v86 = vsel %vm85, %v77, %v82
  %v87 = vrsqrt.pop %v65
  %v88 = vmul.f32 %v87, %v65
  %v89 = vmul.f32 %v88, %v87
  %v90 = vmul.f32 0.5, %v89
  %v91 = vsub.f32 1.5, %v90
  %v92 = vmul.f32 %v87, %v91
  %vm93 = vweird.f32 %v65
  %vm94 = vweird.f32 %v87
  %vm95 = vmor %vm93, %vm94
  %v96 = vsel %vm95, %v87, %v92
  %v97 = vrsqrt.pop %v66
  %v98 = vmul.f32 %v97, %v66
  %v99 = vmul.f32 %v98, %v97
  %v100 = vmul.f32 0.5, %v99
  %v101 = vsub.f32 1.5, %v100
  %v102 = vmul.f32 %v97, %v101
  %vm103 = vweird.f32 %v66
  %vm104 = vweird.f32 %v97
  %vm105 = vmor %vm103, %vm104
  %v106 = vsel %vm105, %v97, %v102
  %v107 = vmul.f32 %v39, %v76
  %v108 = vmul.f32 %v40, %v86
  %v109 = vmul.f32 %v41, %v96
  %v110 = vmul.f32 %v42, %v106
  %v112 = vperm.slane %v18, 0
  %v114 = vmul.f32 %v107, %v112
  %v115 = vmul.f32 %v108, %v112
  %v116 = vmul.f32 %v109, %v112
  %v117 = vmul.f32 %v110, %v112
  %v119 = vperm.slane %v19, 0
  %v121 = vadd.f32 %v114, %v119
  %v122 = vadd.f32 %v115, %v119
  %v123 = vadd.f32 %v116, %v119
  %v124 = vadd.f32 %v117, %v119
  %125 = vst [vmem:[%s3] sm:$0xff] %v121
  %126 = vst [vmem:[%s3 + $0x8] sm:$0xff] %v122
  %127 = vst [vmem:[%s3 + $0x10] sm:$0xff] %v123
  %128 = vst [vmem:[%s3 + $0x18] sm:$0xff] %v124
  // Predicated region
  $region14: #{fuxi_forward.31} parent=0 // pred_check
    _
  $region15: #{fuxi_forward.31} parent=0 // pred_check_branch
    %130 = sbr.rel (0) target = $region17
  $region16: #{fuxi_forward.31} parent=0 // pred_region
    _
  $region17: #{fuxi_forward.31} parent=0 // pred_fallthru
    _
  // Predicated region
  $region18: #{fuxi_forward.31} parent=0 // pred_check
    _
  $region19: #{fuxi_forward.31} parent=0 // pred_check_branch
    %132 = sbr.rel (0) target = $region21
  $region20: #{fuxi_forward.31} parent=0 // pred_region
    _
  $region21: #{fuxi_forward.31} parent=0 // pred_fallthru
    _

// kernel: fuxi_forward.29
$region0: #{fuxi_forward.29}
  #allocation0 [shape = 'u32[]', space=smem, size = 0x4, offset = 0x4, fixed_abs, tag = 'smem constant byte address 0x4 - core index']
  #allocation1 [shape = 'u32[72,128]{1,0:T(1,128)}', space=vmem, size = 0x9000, scoped, tag = 'internal scratch']
  %s0 = inlined_call_operand.vmem [shape: f32[2,4,64,4], index: 0, kind: input, shape index: {}]
  %s1 = inlined_call_operand.vmem [shape: f32[2,4,64,4], index: 1, kind: input, shape index: {}]
  %s2 = inlined_call_operand.vmem [shape: f32[2,4,64,4], index: 2, kind: input, shape index: {}]
  %s3 = inlined_call_operand.vmem [shape: f32[1,4,64,64], index: 3, kind: input, shape index: {}]
  %s4 = inlined_call_operand.vmem [shape: f32[2,4,64,4], index: 4, kind: output, shape index: {}]
  %s5 = sld [smem:[#allocation0]]
  $region49: #{fuxi_forward.29} parent=0
    _
  %s7 = ssub.s32 1, %s5
  %s8 = scalar_select 0, %s7, %s5
  loop: start=0, step=1, limit=4
  $region2: #{fuxi_forward.29} parent=0 // loop_pre_header
    _
  $region3: #{fuxi_forward.29} parent=0 // loop_header
    %s10 = sphi 0, %s14
    %p11 = scmp.ge.s32.totalorder %s10, 4
    %s20 = sphi 0, %s22
    %s23 = sphi 0, %s20
    %s24 = sphi 0, %s23
    %s40 = sphi 0, %s24
    %s46 = sphi 0, %s48
    %s49 = sphi 0, %s46
    %s50 = sphi 0, %s49
    %s66 = sphi 0, %s50
    %s72 = sphi 0, %s74
    %s75 = sphi 0, %s72
    %s76 = sphi 0, %s75
    %s92 = sphi 0, %s76
    %s96 = sphi 0, %s96
    %s98 = sphi 0, %s96
    %s99 = sphi 0, %s98
    %s113 = sphi 0, %s99
    %s119 = sphi 0, %s121
    %s122 = sphi 0, %s119
    %s123 = sphi 0, %s122
    %s139 = sphi 0, %s123
  $region4: #{fuxi_forward.29} parent=0 // loop_header_branch
    %13 = sbr.rel (%p11) target = $region8
  $region5: #{fuxi_forward.29} parent=0 // loop_body
    %s15 = ssub.s32 %s10, 1
    %s16 = ssub.s32 %s10, 2
    %s17 = sadd.s32 %s10, 1
    %s18 = ssub.s32 %s10, %s17
    %p19 = scmp.eq.s32.totalorder %s18, 0
    %s21 = sadd.s32 %s20, 1
    %s22 = scalar_select %p19, %s20, %s21
    %p25 = pneg %p19
    %p26 = scmp.eq.s32.totalorder %s10, 1
    %p27 = por %p25, %p26
    %p28 = scmp.ne.s32.totalorder %s20, %s23
    %p29 = scmp.eq.s32.totalorder %s10, 0
    %p30 = por %p28, %p29
    %p31 = scmp.ne.s32.totalorder %s20, %s23
    %p32 = scmp.eq.s32.totalorder %s15, 1
    %p33 = por %p31, %p32
    %p34 = scmp.ne.s32.totalorder %s23, %s24
    %p35 = scmp.eq.s32.totalorder %s15, 0
    %p36 = por %p34, %p35
    %p37 = scmp.ne.s32.totalorder %s23, %s24
    %p38 = scmp.eq.s32.totalorder %s16, 1
    %p39 = por %p37, %p38
    %p41 = scmp.ne.s32.totalorder %s24, %s40
    %p42 = scmp.eq.s32.totalorder %s16, 0
    %p43 = por %p41, %p42
    %s44 = ssub.s32 %s10, %s17
    %p45 = scmp.eq.s32.totalorder %s44, 0
    %s47 = sadd.s32 %s46, 1
    %s48 = scalar_select %p45, %s46, %s47
    %p51 = pneg %p45
    %p52 = scmp.eq.s32.totalorder %s10, 1
    %p53 = por %p51, %p52
    %p54 = scmp.ne.s32.totalorder %s46, %s49
    %p55 = scmp.eq.s32.totalorder %s10, 0
    %p56 = por %p54, %p55
    %p57 = scmp.ne.s32.totalorder %s46, %s49
    %p58 = scmp.eq.s32.totalorder %s15, 1
    %p59 = por %p57, %p58
    %p60 = scmp.ne.s32.totalorder %s49, %s50
    %p61 = scmp.eq.s32.totalorder %s15, 0
    %p62 = por %p60, %p61
    %p63 = scmp.ne.s32.totalorder %s49, %s50
    %p64 = scmp.eq.s32.totalorder %s16, 1
    %p65 = por %p63, %p64
    %p67 = scmp.ne.s32.totalorder %s50, %s66
    %p68 = scmp.eq.s32.totalorder %s16, 0
    %p69 = por %p67, %p68
    %s70 = ssub.s32 %s10, %s17
    %p71 = scmp.eq.s32.totalorder %s70, 0
    %s73 = sadd.s32 %s72, 1
    %s74 = scalar_select %p71, %s72, %s73
    %p77 = pneg %p71
    %p78 = scmp.eq.s32.totalorder %s10, 1
    %p79 = por %p77, %p78
    %p80 = scmp.ne.s32.totalorder %s72, %s75
    %p81 = scmp.eq.s32.totalorder %s10, 0
    %p82 = por %p80, %p81
    %p83 = scmp.ne.s32.totalorder %s72, %s75
    %p84 = scmp.eq.s32.totalorder %s15, 1
    %p85 = por %p83, %p84
    %p86 = scmp.ne.s32.totalorder %s75, %s76
    %p87 = scmp.eq.s32.totalorder %s15, 0
    %p88 = por %p86, %p87
    %p89 = scmp.ne.s32.totalorder %s75, %s76
    %p90 = scmp.eq.s32.totalorder %s16, 1
    %p91 = por %p89, %p90
    %p93 = scmp.ne.s32.totalorder %s76, %s92
    %p94 = scmp.eq.s32.totalorder %s16, 0
    %p95 = por %p93, %p94
    %s97 = sadd.s32 %s96, 1
    %p100 = scmp.eq.s32.totalorder %s10, 1
    %p101 = scmp.ne.s32.totalorder %s96, %s98
    %p102 = scmp.eq.s32.totalorder %s10, 0
    %p103 = por %p101, %p102
    %p104 = scmp.ne.s32.totalorder %s96, %s98
    %p105 = scmp.eq.s32.totalorder %s15, 1
    %p106 = por %p104, %p105
    %p107 = scmp.ne.s32.totalorder %s98, %s99
    %p108 = scmp.eq.s32.totalorder %s15, 0
    %p109 = por %p107, %p108
    %p110 = scmp.ne.s32.totalorder %s98, %s99
    %p111 = scmp.eq.s32.totalorder %s16, 1
    %p112 = por %p110, %p111
    %p114 = scmp.ne.s32.totalorder %s99, %s113
    %p115 = scmp.eq.s32.totalorder %s16, 0
    %p116 = por %p114, %p115
    %s117 = ssub.s32 %s10, %s17
    %p118 = scmp.eq.s32.totalorder %s117, 0
    %s120 = sadd.s32 %s119, 1
    %s121 = scalar_select %p118, %s119, %s120
    %p124 = pneg %p118
    %p125 = scmp.eq.s32.totalorder %s10, 1
    %p126 = por %p124, %p125
    %p127 = scmp.ne.s32.totalorder %s119, %s122
    %p128 = scmp.eq.s32.totalorder %s10, 0
    %p129 = por %p127, %p128
    %p130 = scmp.ne.s32.totalorder %s119, %s122
    %p131 = scmp.eq.s32.totalorder %s15, 1
    %p132 = por %p130, %p131
    %p133 = scmp.ne.s32.totalorder %s122, %s123
    %p134 = scmp.eq.s32.totalorder %s15, 0
    %p135 = por %p133, %p134
    %p136 = scmp.ne.s32.totalorder %s122, %s123
    %p137 = scmp.eq.s32.totalorder %s16, 1
    %p138 = por %p136, %p137
    %p140 = scmp.ne.s32.totalorder %s123, %s139
    %p141 = scmp.eq.s32.totalorder %s16, 0
    %p142 = por %p140, %p141
    %p143 = scmp.le.s32.totalorder 1, %s10
    %p144 = scmp.lt.s32.totalorder %s10, 3
    %p145 = pnand %p143, %p144
    %p146 = pneg %p145
    // Predicated region
    $region9: #{fuxi_forward.29} parent=5 // pred_check
      _
    $region10: #{fuxi_forward.29} parent=5 // pred_check_branch
      %148 = sbr.rel (%p145) target = $region12
    $region11: #{fuxi_forward.29} parent=5 // pred_region
      %s149 = ssub.s32 %s10, 1
      // Predicated region
      $region13: #{fuxi_forward.29} parent=11 // pred_check
        %p150 = pneg %p109
      $region14: #{fuxi_forward.29} parent=11 // pred_check_branch
        %152 = sbr.rel (%p150) target = $region16
      $region15: #{fuxi_forward.29} parent=11 // pred_region
        _
      $region16: #{fuxi_forward.29} parent=11 // pred_fallthru
        _
    $region12: #{fuxi_forward.29} parent=5 // pred_fallthru
      _
    %p153 = scmp.lt.s32.totalorder %s10, 2
    // Predicated region
    $region17: #{fuxi_forward.29} parent=5 // pred_check
      %p154 = pneg %p153
    $region18: #{fuxi_forward.29} parent=5 // pred_check_branch
      %156 = sbr.rel (%p154) target = $region20
    $region19: #{fuxi_forward.29} parent=5 // pred_region
      // Predicated region
      $region21: #{fuxi_forward.29} parent=19 // pred_check
        %p157 = pneg %p30
      $region22: #{fuxi_forward.29} parent=19 // pred_check_branch
        %159 = sbr.rel (%p157) target = $region24
      $region23: #{fuxi_forward.29} parent=19 // pred_region
        %p160 = scmp.lt.s32.totalorder %s10, 1
        %s161 = scalar_select %p160, %s10, 1
        %s162 = smul.addr %s161, 32
        %s163 = smul.addr %s162, 8
        %s164 = scalar_lea.vmem %s0, %s163
      $region24: #{fuxi_forward.29} parent=19 // pred_fallthru
        _
      // Predicated region
      $region25: #{fuxi_forward.29} parent=19 // pred_check
        %p165 = pneg %p56
      $region26: #{fuxi_forward.29} parent=19 // pred_check_branch
        %167 = sbr.rel (%p165) target = $region28
      $region27: #{fuxi_forward.29} parent=19 // pred_region
        %p168 = scmp.lt.s32.totalorder %s10, 1
        %s169 = scalar_select %p168, %s10, 1
        %s170 = smul.addr %s169, 32
        %s171 = smul.addr %s170, 8
        %s172 = scalar_lea.vmem %s1, %s171
      $region28: #{fuxi_forward.29} parent=19 // pred_fallthru
        _
      // Predicated region
      $region29: #{fuxi_forward.29} parent=19 // pred_check
        %p173 = pneg %p82
      $region30: #{fuxi_forward.29} parent=19 // pred_check_branch
        %175 = sbr.rel (%p173) target = $region32
      $region31: #{fuxi_forward.29} parent=19 // pred_region
        %p176 = scmp.lt.s32.totalorder %s10, 1
        %s177 = scalar_select %p176, %s10, 1
        %s178 = smul.addr %s177, 32
        %s179 = smul.addr %s178, 8
        %s180 = scalar_lea.vmem %s2, %s179
      $region32: #{fuxi_forward.29} parent=19 // pred_fallthru
        _
    $region20: #{fuxi_forward.29} parent=5 // pred_fallthru
      _
    %p181 = scmp.le.s32.totalorder 1, %s10
    %p182 = scmp.lt.s32.totalorder %s10, 3
    %p183 = pnand %p181, %p182
    %p184 = pneg %p183
    // Predicated region
    $region33: #{fuxi_forward.29} parent=5 // pred_check
      _
    $region34: #{fuxi_forward.29} parent=5 // pred_check_branch
      %186 = sbr.rel (%p183) target = $region36
    $region35: #{fuxi_forward.29} parent=5 // pred_region
      %s187 = ssub.s32 %s10, 1
      %p188 = scmp.lt.s32.totalorder %s15, 1
      %s189 = scalar_select %p188, %s15, 1
      %s190 = smul.addr %s189, 32
      %s191 = smul.addr %s190, 8
      %s192 = scalar_lea.vmem %s0, %s191
      %p193 = pneg %p36
      %p194 = pneg %p33
      %p195 = scmp.lt.s32.totalorder %s15, 1
      %s196 = scalar_select %p195, %s15, 1
      %s197 = smul.addr %s196, 32
      %s198 = smul.addr %s197, 8
      %s199 = scalar_lea.vmem %s1, %s198
      %p200 = pneg %p62
      %p201 = pneg %p59
      %p202 = scmp.lt.s32.totalorder %s15, 1
      %s203 = scalar_select %p202, %s15, 1
      %s204 = smul.addr %s203, 32
      %s205 = smul.addr %s204, 8
      %s206 = scalar_lea.vmem %s2, %s205
      %p207 = pneg %p88
      %p208 = pneg %p85
      %p209 = pneg %p109
      %p210 = pneg %p106
      %p211 = pneg %p135
      %p212 = pneg %p132
      %p213 = scmp.lt.s32.totalorder %s15, 1
      %s214 = scalar_select %p213, %s15, 1
      %s215 = smul.addr %s214, 32
      %s216 = smul.addr %s215, 8
      %s217 = scalar_lea.vmem %s4, %s216
      %p218 = scmp.lt.s32.totalorder %s15, 1
      %s219 = scalar_select %p218, %s15, 1
      %s220 = smul.addr %s219, 32
      %s221 = smul.addr %s220, 8
      %s222 = scalar_lea.vmem %s0, %s221
      %p223 = scmp.lt.s32.totalorder %s15, 1
      %s224 = scalar_select %p223, %s15, 1
      %s225 = smul.addr %s224, 32
      %s226 = smul.addr %s225, 8
      %s227 = scalar_lea.vmem %s1, %s226
      %p228 = scmp.lt.s32.totalorder %s15, 1
      %s229 = scalar_select %p228, %s15, 1
      %s230 = smul.addr %s229, 32
      %s231 = smul.addr %s230, 8
      %s232 = scalar_lea.vmem %s2, %s231
      %p233 = scmp.lt.s32.totalorder %s15, 1
      %s234 = scalar_select %p233, %s15, 1
      %s235 = smul.addr %s234, 32
      %s236 = smul.addr %s235, 8
      %s237 = scalar_lea.vmem %s4, %s236
      %v238 = vld [vmem:[%s222] sm:$0xff]
      %v239 = vld [vmem:[%s222 + $0x8] sm:$0xff]
      %v240 = vld [vmem:[%s222 + $0x10] sm:$0xff]
      %v241 = vld [vmem:[%s222 + $0x18] sm:$0xff]
      %v242 = vld [vmem:[%s222 + $0x20] sm:$0xff]
      %v243 = vld [vmem:[%s222 + $0x28] sm:$0xff]
      %v244 = vld [vmem:[%s222 + $0x30] sm:$0xff]
      %v245 = vld [vmem:[%s222 + $0x38] sm:$0xff]
      %v246 = vld [vmem:[%s222 + $0x40] sm:$0xff]
      %v247 = vld [vmem:[%s222 + $0x48] sm:$0xff]
      %v248 = vld [vmem:[%s222 + $0x50] sm:$0xff]
      %v249 = vld [vmem:[%s222 + $0x58] sm:$0xff]
      %v250 = vld [vmem:[%s222 + $0x60] sm:$0xff]
      %v251 = vld [vmem:[%s222 + $0x68] sm:$0xff]
      %v252 = vld [vmem:[%s222 + $0x70] sm:$0xff]
      %v253 = vld [vmem:[%s222 + $0x78] sm:$0xff]
      %v254 = vld [vmem:[%s222 + $0x80] sm:$0xff]
      %v255 = vld [vmem:[%s222 + $0x88] sm:$0xff]
      %v256 = vld [vmem:[%s222 + $0x90] sm:$0xff]
      %v257 = vld [vmem:[%s222 + $0x98] sm:$0xff]
      %v258 = vld [vmem:[%s222 + $0xa0] sm:$0xff]
      %v259 = vld [vmem:[%s222 + $0xa8] sm:$0xff]
      %v260 = vld [vmem:[%s222 + $0xb0] sm:$0xff]
      %v261 = vld [vmem:[%s222 + $0xb8] sm:$0xff]
      %v262 = vld [vmem:[%s222 + $0xc0] sm:$0xff]
      %v263 = vld [vmem:[%s222 + $0xc8] sm:$0xff]
      %v264 = vld [vmem:[%s222 + $0xd0] sm:$0xff]
      %v265 = vld [vmem:[%s222 + $0xd8] sm:$0xff]
      %v266 = vld [vmem:[%s222 + $0xe0] sm:$0xff]
      %v267 = vld [vmem:[%s222 + $0xe8] sm:$0xff]
      %v268 = vld [vmem:[%s222 + $0xf0] sm:$0xff]
      %v269 = vld [vmem:[%s222 + $0xf8] sm:$0xff]
      %v270 = vld [vmem:[%s227] sm:$0xff]
      %v271 = vld [vmem:[%s227 + $0x8] sm:$0xff]
      %v272 = vld [vmem:[%s227 + $0x10] sm:$0xff]
      %v273 = vld [vmem:[%s227 + $0x18] sm:$0xff]
      %v274 = vld [vmem:[%s227 + $0x20] sm:$0xff]
      %v275 = vld [vmem:[%s227 + $0x28] sm:$0xff]
      %v276 = vld [vmem:[%s227 + $0x30] sm:$0xff]
      %v277 = vld [vmem:[%s227 + $0x38] sm:$0xff]
      %v278 = vld [vmem:[%s227 + $0x40] sm:$0xff]
      %v279 = vld [vmem:[%s227 + $0x48] sm:$0xff]
      %v280 = vld [vmem:[%s227 + $0x50] sm:$0xff]
      %v281 = vld [vmem:[%s227 + $0x58] sm:$0xff]
      %v282 = vld [vmem:[%s227 + $0x60] sm:$0xff]
      %v283 = vld [vmem:[%s227 + $0x68] sm:$0xff]
      %v284 = vld [vmem:[%s227 + $0x70] sm:$0xff]
      %v285 = vld [vmem:[%s227 + $0x78] sm:$0xff]
      %v286 = vld [vmem:[%s227 + $0x80] sm:$0xff]
      %v287 = vld [vmem:[%s227 + $0x88] sm:$0xff]
      %v288 = vld [vmem:[%s227 + $0x90] sm:$0xff]
      %v289 = vld [vmem:[%s227 + $0x98] sm:$0xff]
      %v290 = vld [vmem:[%s227 + $0xa0] sm:$0xff]
      %v291 = vld [vmem:[%s227 + $0xa8] sm:$0xff]
      %v292 = vld [vmem:[%s227 + $0xb0] sm:$0xff]
      %v293 = vld [vmem:[%s227 + $0xb8] sm:$0xff]
      %v294 = vld [vmem:[%s227 + $0xc0] sm:$0xff]
      %v295 = vld [vmem:[%s227 + $0xc8] sm:$0xff]
      %v296 = vld [vmem:[%s227 + $0xd0] sm:$0xff]
      %v297 = vld [vmem:[%s227 + $0xd8] sm:$0xff]
      %v298 = vld [vmem:[%s227 + $0xe0] sm:$0xff]
      %v299 = vld [vmem:[%s227 + $0xe8] sm:$0xff]
      %v300 = vld [vmem:[%s227 + $0xf0] sm:$0xff]
      %v301 = vld [vmem:[%s227 + $0xf8] sm:$0xff]
      %v302 = vld [vmem:[%s232] sm:$0xff]
      %v303 = vld [vmem:[%s232 + $0x8] sm:$0xff]
      %v304 = vld [vmem:[%s232 + $0x10] sm:$0xff]
      %v305 = vld [vmem:[%s232 + $0x18] sm:$0xff]
      %v306 = vld [vmem:[%s232 + $0x20] sm:$0xff]
      %v307 = vld [vmem:[%s232 + $0x28] sm:$0xff]
      %v308 = vld [vmem:[%s232 + $0x30] sm:$0xff]
      %v309 = vld [vmem:[%s232 + $0x38] sm:$0xff]
      %v310 = vld [vmem:[%s232 + $0x40] sm:$0xff]
      %v311 = vld [vmem:[%s232 + $0x48] sm:$0xff]
      %v312 = vld [vmem:[%s232 + $0x50] sm:$0xff]
      %v313 = vld [vmem:[%s232 + $0x58] sm:$0xff]
      %v314 = vld [vmem:[%s232 + $0x60] sm:$0xff]
      %v315 = vld [vmem:[%s232 + $0x68] sm:$0xff]
      %v316 = vld [vmem:[%s232 + $0x70] sm:$0xff]
      %v317 = vld [vmem:[%s232 + $0x78] sm:$0xff]
      %v318 = vld [vmem:[%s232 + $0x80] sm:$0xff]
      %v319 = vld [vmem:[%s232 + $0x88] sm:$0xff]
      %v320 = vld [vmem:[%s232 + $0x90] sm:$0xff]
      %v321 = vld [vmem:[%s232 + $0x98] sm:$0xff]
      %v322 = vld [vmem:[%s232 + $0xa0] sm:$0xff]
      %v323 = vld [vmem:[%s232 + $0xa8] sm:$0xff]
      %v324 = vld [vmem:[%s232 + $0xb0] sm:$0xff]
      %v325 = vld [vmem:[%s232 + $0xb8] sm:$0xff]
      %v326 = vld [vmem:[%s232 + $0xc0] sm:$0xff]
      %v327 = vld [vmem:[%s232 + $0xc8] sm:$0xff]
      %v328 = vld [vmem:[%s232 + $0xd0] sm:$0xff]
      %v329 = vld [vmem:[%s232 + $0xd8] sm:$0xff]
      %v330 = vld [vmem:[%s232 + $0xe0] sm:$0xff]
      %v331 = vld [vmem:[%s232 + $0xe8] sm:$0xff]
      %v332 = vld [vmem:[%s232 + $0xf0] sm:$0xff]
      %v333 = vld [vmem:[%s232 + $0xf8] sm:$0xff]
      %v334 = vld [vmem:[%s3] sm:$0xff]
      %v335 = vld [vmem:[%s3 + $0x8] sm:$0xff]
      %v336 = vld [vmem:[%s3 + $0x10] sm:$0xff]
      %v337 = vld [vmem:[%s3 + $0x18] sm:$0xff]
      %v338 = vld [vmem:[%s3 + $0x20] sm:$0xff]
      %v339 = vld [vmem:[%s3 + $0x28] sm:$0xff]
      %v340 = vld [vmem:[%s3 + $0x30] sm:$0xff]
      %v341 = vld [vmem:[%s3 + $0x38] sm:$0xff]
      %v342 = vld [vmem:[%s3 + $0x40] sm:$0xff]
      %v343 = vld [vmem:[%s3 + $0x48] sm:$0xff]
      %v344 = vld [vmem:[%s3 + $0x50] sm:$0xff]
      %v345 = vld [vmem:[%s3 + $0x58] sm:$0xff]
      %v346 = vld [vmem:[%s3 + $0x60] sm:$0xff]
      %v347 = vld [vmem:[%s3 + $0x68] sm:$0xff]
      %v348 = vld [vmem:[%s3 + $0x70] sm:$0xff]
      %v349 = vld [vmem:[%s3 + $0x78] sm:$0xff]
      %v350 = vld [vmem:[%s3 + $0x80] sm:$0xff]
      %v351 = vld [vmem:[%s3 + $0x88] sm:$0xff]
      %v352 = vld [vmem:[%s3 + $0x90] sm:$0xff]
      %v353 = vld [vmem:[%s3 + $0x98] sm:$0xff]
      %v354 = vld [vmem:[%s3 + $0xa0] sm:$0xff]
      %v355 = vld [vmem:[%s3 + $0xa8] sm:$0xff]
      %v356 = vld [vmem:[%s3 + $0xb0] sm:$0xff]
      %v357 = vld [vmem:[%s3 + $0xb8] sm:$0xff]
      %v358 = vld [vmem:[%s3 + $0xc0] sm:$0xff]
      %v359 = vld [vmem:[%s3 + $0xc8] sm:$0xff]
      %v360 = vld [vmem:[%s3 + $0xd0] sm:$0xff]
      %v361 = vld [vmem:[%s3 + $0xd8] sm:$0xff]
      %v362 = vld [vmem:[%s3 + $0xe0] sm:$0xff]
      %v363 = vld [vmem:[%s3 + $0xe8] sm:$0xff]
      %v364 = vld [vmem:[%s3 + $0xf0] sm:$0xff]
      %v365 = vld [vmem:[%s3 + $0xf8] sm:$0xff]
      %vm366 = vcmask 31744
      %v368 = vsel %vm366, %v238, 0
      %v371 = vsel %vm366, %v239, 0
      %v374 = vsel %vm366, %v240, 0
      %v377 = vsel %vm366, %v241, 0
      %v380 = vsel %vm366, %v242, 0
      %v383 = vsel %vm366, %v243, 0
      %v386 = vsel %vm366, %v244, 0
      %v389 = vsel %vm366, %v245, 0
      %v392 = vsel %vm366, %v270, 0
      %v395 = vsel %vm366, %v271, 0
      %v398 = vsel %vm366, %v272, 0
      %v401 = vsel %vm366, %v273, 0
      %v404 = vsel %vm366, %v274, 0
      %v407 = vsel %vm366, %v275, 0
      %v410 = vsel %vm366, %v276, 0
      %v413 = vsel %vm366, %v277, 0
      %415 = vmatpush.xpose.msra.mxu0 0.0
      %416 = vmatpush.xpose.msra.mxu0 0.0
      %417 = vmatpush.xpose.msra.mxu0 0.0
      %418 = vmatpush.xpose.msra.mxu0 0.0
      %419 = vmatpush.xpose.msra.mxu0 0.0
      %420 = vmatpush.xpose.msra.mxu0 0.0
      %421 = vmatpush.xpose.msra.mxu0 0.0
      %422 = vmatpush.xpose.msra.mxu0 0.0
      %423 = vmatpush.xpose.msra.mxu0 %v413
      %424 = vmatpush.xpose.msra.mxu0 %v410
      %425 = vmatpush.xpose.msra.mxu0 %v407
      %426 = vmatpush.xpose.msra.mxu0 %v404
      %427 = vmatpush.xpose.msra.mxu0 %v401
      %428 = vmatpush.xpose.msra.mxu0 %v398
      %429 = vmatpush.xpose.msra.mxu0 %v395
      %430 = vmatpush.xpose.msra.mxu0 %v392
      %431 = vmatmul.f32.gmra.mxu0 %v368
      %v432 = vpop.f32.mrf.mxu0
      %v433 = vadd.f32 %v334, %v432
      %434 = vmatmul.f32.gmra.mxu0 %v371
      %v435 = vpop.f32.mrf.mxu0
      %v436 = vadd.f32 %v335, %v435
      %437 = vmatmul.f32.gmra.mxu0 %v374
      %v438 = vpop.f32.mrf.mxu0
      %v439 = vadd.f32 %v336, %v438
      %440 = vmatmul.f32.gmra.mxu0 %v377
      %v441 = vpop.f32.mrf.mxu0
      %v442 = vadd.f32 %v337, %v441
      %443 = vmatmul.f32.gmra.mxu0 %v380
      %v444 = vpop.f32.mrf.mxu0
      %v445 = vadd.f32 %v338, %v444
      %446 = vmatmul.f32.gmra.mxu0 %v383
      %v447 = vpop.f32.mrf.mxu0
      %v448 = vadd.f32 %v339, %v447
      %449 = vmatmul.f32.gmra.mxu0 %v386
      %v450 = vpop.f32.mrf.mxu0
      %v451 = vadd.f32 %v340, %v450
      %452 = vmatmul.f32.gmra.mxu0 %v389
      %v453 = vpop.f32.mrf.mxu0
      %v454 = vadd.f32 %v341, %v453
      %455 = vdwg.mxu0
      %v457 = vsel %vm366, %v246, 0
      %v460 = vsel %vm366, %v247, 0
      %v463 = vsel %vm366, %v248, 0
      %v466 = vsel %vm366, %v249, 0
      %v469 = vsel %vm366, %v250, 0
      %v472 = vsel %vm366, %v251, 0
      %v475 = vsel %vm366, %v252, 0
      %v478 = vsel %vm366, %v253, 0
      %v481 = vsel %vm366, %v278, 0
      %v484 = vsel %vm366, %v279, 0
      %v487 = vsel %vm366, %v280, 0
      %v490 = vsel %vm366, %v281, 0
      %v493 = vsel %vm366, %v282, 0
      %v496 = vsel %vm366, %v283, 0
      %v499 = vsel %vm366, %v284, 0
      %v502 = vsel %vm366, %v285, 0
      %504 = vmatpush.xpose.msra.mxu0 0.0
      %505 = vmatpush.xpose.msra.mxu0 0.0
      %506 = vmatpush.xpose.msra.mxu0 0.0
      %507 = vmatpush.xpose.msra.mxu0 0.0
      %508 = vmatpush.xpose.msra.mxu0 0.0
      %509 = vmatpush.xpose.msra.mxu0 0.0
      %510 = vmatpush.xpose.msra.mxu0 0.0
      %511 = vmatpush.xpose.msra.mxu0 0.0
      %512 = vmatpush.xpose.msra.mxu0 %v502
      %513 = vmatpush.xpose.msra.mxu0 %v499
      %514 = vmatpush.xpose.msra.mxu0 %v496
      %515 = vmatpush.xpose.msra.mxu0 %v493
      %516 = vmatpush.xpose.msra.mxu0 %v490
      %517 = vmatpush.xpose.msra.mxu0 %v487
      %518 = vmatpush.xpose.msra.mxu0 %v484
      %519 = vmatpush.xpose.msra.mxu0 %v481
      %520 = vmatmul.f32.gmra.mxu0 %v457
      %v521 = vpop.f32.mrf.mxu0
      %v522 = vadd.f32 %v342, %v521
      %523 = vmatmul.f32.gmra.mxu0 %v460
      %v524 = vpop.f32.mrf.mxu0
      %v525 = vadd.f32 %v343, %v524
      %526 = vmatmul.f32.gmra.mxu0 %v463
      %v527 = vpop.f32.mrf.mxu0
      %v528 = vadd.f32 %v344, %v527
      %529 = vmatmul.f32.gmra.mxu0 %v466
      %v530 = vpop.f32.mrf.mxu0
      %v531 = vadd.f32 %v345, %v530
      %532 = vmatmul.f32.gmra.mxu0 %v469
      %v533 = vpop.f32.mrf.mxu0
      %v534 = vadd.f32 %v346, %v533
      %535 = vmatmul.f32.gmra.mxu0 %v472
      %v536 = vpop.f32.mrf.mxu0
      %v537 = vadd.f32 %v347, %v536
      %538 = vmatmul.f32.gmra.mxu0 %v475
      %v539 = vpop.f32.mrf.mxu0
      %v540 = vadd.f32 %v348, %v539
      %541 = vmatmul.f32.gmra.mxu0 %v478
      %v542 = vpop.f32.mrf.mxu0
      %v543 = vadd.f32 %v349, %v542
      %544 = vdwg.mxu0
      %v546 = vsel %vm366, %v254, 0
      %v549 = vsel %vm366, %v255, 0
      %v552 = vsel %vm366, %v256, 0
      %v555 = vsel %vm366, %v257, 0
      %v558 = vsel %vm366, %v258, 0
      %v561 = vsel %vm366, %v259, 0
      %v564 = vsel %vm366, %v260, 0
      %v567 = vsel %vm366, %v261, 0
      %v570 = vsel %vm366, %v286, 0
      %v573 = vsel %vm366, %v287, 0
      %v576 = vsel %vm366, %v288, 0
      %v579 = vsel %vm366, %v289, 0
      %v582 = vsel %vm366, %v290, 0
      %v585 = vsel %vm366, %v291, 0
      %v588 = vsel %vm366, %v292, 0
      %v591 = vsel %vm366, %v293, 0
      %593 = vmatpush.xpose.msra.mxu0 0.0
      %594 = vmatpush.xpose.msra.mxu0 0.0
      %595 = vmatpush.xpose.msra.mxu0 0.0
      %596 = vmatpush.xpose.msra.mxu0 0.0
      %597 = vmatpush.xpose.msra.mxu0 0.0
      %598 = vmatpush.xpose.msra.mxu0 0.0
      %599 = vmatpush.xpose.msra.mxu0 0.0
      %600 = vmatpush.xpose.msra.mxu0 0.0
      %601 = vmatpush.xpose.msra.mxu0 %v591
      %602 = vmatpush.xpose.msra.mxu0 %v588
      %603 = vmatpush.xpose.msra.mxu0 %v585
      %604 = vmatpush.xpose.msra.mxu0 %v582
      %605 = vmatpush.xpose.msra.mxu0 %v579
      %606 = vmatpush.xpose.msra.mxu0 %v576
      %607 = vmatpush.xpose.msra.mxu0 %v573
      %608 = vmatpush.xpose.msra.mxu0 %v570
      %609 = vmatmul.f32.gmra.mxu0 %v546
      %v610 = vpop.f32.mrf.mxu0
      %v611 = vadd.f32 %v350, %v610
      %612 = vmatmul.f32.gmra.mxu0 %v549
      %v613 = vpop.f32.mrf.mxu0
      %v614 = vadd.f32 %v351, %v613
      %615 = vmatmul.f32.gmra.mxu0 %v552
      %v616 = vpop.f32.mrf.mxu0
      %v617 = vadd.f32 %v352, %v616
      %618 = vmatmul.f32.gmra.mxu0 %v555
      %v619 = vpop.f32.mrf.mxu0
      %v620 = vadd.f32 %v353, %v619
      %621 = vmatmul.f32.gmra.mxu0 %v558
      %v622 = vpop.f32.mrf.mxu0
      %v623 = vadd.f32 %v354, %v622
      %624 = vmatmul.f32.gmra.mxu0 %v561
      %v625 = vpop.f32.mrf.mxu0
      %v626 = vadd.f32 %v355, %v625
      %627 = vmatmul.f32.gmra.mxu0 %v564
      %v628 = vpop.f32.mrf.mxu0
      %v629 = vadd.f32 %v356, %v628
      %630 = vmatmul.f32.gmra.mxu0 %v567
      %v631 = vpop.f32.mrf.mxu0
      %v632 = vadd.f32 %v357, %v631
      %633 = vdwg.mxu0
      %v635 = vsel %vm366, %v262, 0
      %v638 = vsel %vm366, %v263, 0
      %v641 = vsel %vm366, %v264, 0
      %v644 = vsel %vm366, %v265, 0
      %v647 = vsel %vm366, %v266, 0
      %v650 = vsel %vm366, %v267, 0
      %v653 = vsel %vm366, %v268, 0
      %v656 = vsel %vm366, %v269, 0
      %v659 = vsel %vm366, %v294, 0
      %v662 = vsel %vm366, %v295, 0
      %v665 = vsel %vm366, %v296, 0
      %v668 = vsel %vm366, %v297, 0
      %v671 = vsel %vm366, %v298, 0
      %v674 = vsel %vm366, %v299, 0
      %v677 = vsel %vm366, %v300, 0
      %v680 = vsel %vm366, %v301, 0
      %682 = vmatpush.xpose.msra.mxu0 0.0
      %683 = vmatpush.xpose.msra.mxu0 0.0
      %684 = vmatpush.xpose.msra.mxu0 0.0
      %685 = vmatpush.xpose.msra.mxu0 0.0
      %686 = vmatpush.xpose.msra.mxu0 0.0
      %687 = vmatpush.xpose.msra.mxu0 0.0
      %688 = vmatpush.xpose.msra.mxu0 0.0
      %689 = vmatpush.xpose.msra.mxu0 0.0
      %690 = vmatpush.xpose.msra.mxu0 %v680
      %691 = vmatpush.xpose.msra.mxu0 %v677
      %692 = vmatpush.xpose.msra.mxu0 %v674
      %693 = vmatpush.xpose.msra.mxu0 %v671
      %694 = vmatpush.xpose.msra.mxu0 %v668
      %695 = vmatpush.xpose.msra.mxu0 %v665
      %696 = vmatpush.xpose.msra.mxu0 %v662
      %697 = vmatpush.xpose.msra.mxu0 %v659
      %698 = vmatmul.f32.gmra.mxu0 %v635
      %v699 = vpop.f32.mrf.mxu0
      %v700 = vadd.f32 %v358, %v699
      %701 = vmatmul.f32.gmra.mxu0 %v638
      %v702 = vpop.f32.mrf.mxu0
      %v703 = vadd.f32 %v359, %v702
      %704 = vmatmul.f32.gmra.mxu0 %v641
      %v705 = vpop.f32.mrf.mxu0
      %v706 = vadd.f32 %v360, %v705
      %707 = vmatmul.f32.gmra.mxu0 %v644
      %v708 = vpop.f32.mrf.mxu0
      %v709 = vadd.f32 %v361, %v708
      %710 = vmatmul.f32.gmra.mxu0 %v647
      %v711 = vpop.f32.mrf.mxu0
      %v712 = vadd.f32 %v362, %v711
      %713 = vmatmul.f32.gmra.mxu0 %v650
      %v714 = vpop.f32.mrf.mxu0
      %v715 = vadd.f32 %v363, %v714
      %716 = vmatmul.f32.gmra.mxu0 %v653
      %v717 = vpop.f32.mrf.mxu0
      %v718 = vadd.f32 %v364, %v717
      %719 = vmatmul.f32.gmra.mxu0 %v656
      %v720 = vpop.f32.mrf.mxu0
      %v721 = vadd.f32 %v365, %v720
      %722 = vdwg.mxu0
      %vm723 = vcmask 523264
      %v724 = vsel %vm723, %v433, -inf
      %725 = vmax.xlane.f32.xlu0 %v724
      %v726 = vpop.xlane.xlu0 %725
      %v727 = vsel %vm723, %v436, -inf
      %728 = vmax.xlane.f32.xlu0 %v727
      %v729 = vpop.xlane.xlu0 %728
      %v730 = vsel %vm723, %v439, -inf
      %731 = vmax.xlane.f32.xlu0 %v730
      %v732 = vpop.xlane.xlu0 %731
      %v733 = vsel %vm723, %v442, -inf
      %734 = vmax.xlane.f32.xlu0 %v733
      %v735 = vpop.xlane.xlu0 %734
      %v736 = vsel %vm723, %v445, -inf
      %737 = vmax.xlane.f32.xlu0 %v736
      %v738 = vpop.xlane.xlu0 %737
      %v739 = vsel %vm723, %v448, -inf
      %740 = vmax.xlane.f32.xlu0 %v739
      %v741 = vpop.xlane.xlu0 %740
      %v742 = vsel %vm723, %v451, -inf
      %743 = vmax.xlane.f32.xlu0 %v742
      %v744 = vpop.xlane.xlu0 %743
      %v745 = vsel %vm723, %v454, -inf
      %746 = vmax.xlane.f32.xlu0 %v745
      %v747 = vpop.xlane.xlu0 %746
      %v748 = vsel %vm723, %v522, -inf
      %749 = vmax.xlane.f32.xlu0 %v748
      %v750 = vpop.xlane.xlu0 %749
      %v751 = vsel %vm723, %v525, -inf
      %752 = vmax.xlane.f32.xlu0 %v751
      %v753 = vpop.xlane.xlu0 %752
      %v754 = vsel %vm723, %v528, -inf
      %755 = vmax.xlane.f32.xlu0 %v754
      %v756 = vpop.xlane.xlu0 %755
      %v757 = vsel %vm723, %v531, -inf
      %758 = vmax.xlane.f32.xlu0 %v757
      %v759 = vpop.xlane.xlu0 %758
      %v760 = vsel %vm723, %v534, -inf
      %761 = vmax.xlane.f32.xlu0 %v760
      %v762 = vpop.xlane.xlu0 %761
      %v763 = vsel %vm723, %v537, -inf
      %764 = vmax.xlane.f32.xlu0 %v763
      %v765 = vpop.xlane.xlu0 %764
      %v766 = vsel %vm723, %v540, -inf
      %767 = vmax.xlane.f32.xlu0 %v766
      %v768 = vpop.xlane.xlu0 %767
      %v769 = vsel %vm723, %v543, -inf
      %770 = vmax.xlane.f32.xlu0 %v769
      %v771 = vpop.xlane.xlu0 %770
      %v772 = vsel %vm723, %v611, -inf
      %773 = vmax.xlane.f32.xlu0 %v772
      %v774 = vpop.xlane.xlu0 %773
      %v775 = vsel %vm723, %v614, -inf
      %776 = vmax.xlane.f32.xlu0 %v775
      %v777 = vpop.xlane.xlu0 %776
      %v778 = vsel %vm723, %v617, -inf
      %779 = vmax.xlane.f32.xlu0 %v778
      %v780 = vpop.xlane.xlu0 %779
      %v781 = vsel %vm723, %v620, -inf
      %782 = vmax.xlane.f32.xlu0 %v781
      %v783 = vpop.xlane.xlu0 %782
      %v784 = vsel %vm723, %v623, -inf
      %785 = vmax.xlane.f32.xlu0 %v784
      %v786 = vpop.xlane.xlu0 %785
      %v787 = vsel %vm723, %v626, -inf
      %788 = vmax.xlane.f32.xlu0 %v787
      %v789 = vpop.xlane.xlu0 %788
      %v790 = vsel %vm723, %v629, -inf
      %791 = vmax.xlane.f32.xlu0 %v790
      %v792 = vpop.xlane.xlu0 %791
      %v793 = vsel %vm723, %v632, -inf
      %794 = vmax.xlane.f32.xlu0 %v793
      %v795 = vpop.xlane.xlu0 %794
      %v796 = vsel %vm723, %v700, -inf
      %797 = vmax.xlane.f32.xlu0 %v796
      %v798 = vpop.xlane.xlu0 %797
      %v799 = vsel %vm723, %v703, -inf
      %800 = vmax.xlane.f32.xlu0 %v799
      %v801 = vpop.xlane.xlu0 %800
      %v802 = vsel %vm723, %v706, -inf
      %803 = vmax.xlane.f32.xlu0 %v802
      %v804 = vpop.xlane.xlu0 %803
      %v805 = vsel %vm723, %v709, -inf
      %806 = vmax.xlane.f32.xlu0 %v805
      %v807 = vpop.xlane.xlu0 %806
      %v808 = vsel %vm723, %v712, -inf
      %809 = vmax.xlane.f32.xlu0 %v808
      %v810 = vpop.xlane.xlu0 %809
      %v811 = vsel %vm723, %v715, -inf
      %812 = vmax.xlane.f32.xlu0 %v811
      %v813 = vpop.xlane.xlu0 %812
      %v814 = vsel %vm723, %v718, -inf
      %815 = vmax.xlane.f32.xlu0 %v814
      %v816 = vpop.xlane.xlu0 %815
      %v817 = vsel %vm723, %v721, -inf
      %818 = vmax.xlane.f32.xlu0 %v817
      %v819 = vpop.xlane.xlu0 %818
      %v820 = vsub.f32 %v433, %v726
      %v821 = vsub.f32 %v436, %v729
      %v822 = vsub.f32 %v439, %v732
      %v823 = vsub.f32 %v442, %v735
      %v824 = vsub.f32 %v445, %v738
      %v825 = vsub.f32 %v448, %v741
      %v826 = vsub.f32 %v451, %v744
      %v827 = vsub.f32 %v454, %v747
      %v828 = vsub.f32 %v522, %v750
      %v829 = vsub.f32 %v525, %v753
      %v830 = vsub.f32 %v528, %v756
      %v831 = vsub.f32 %v531, %v759
      %v832 = vsub.f32 %v534, %v762
      %v833 = vsub.f32 %v537, %v765
      %v834 = vsub.f32 %v540, %v768
      %v835 = vsub.f32 %v543, %v771
      %v836 = vsub.f32 %v611, %v774
      %v837 = vsub.f32 %v614, %v777
      %v838 = vsub.f32 %v617, %v780
      %v839 = vsub.f32 %v620, %v783
      %v840 = vsub.f32 %v623, %v786
      %v841 = vsub.f32 %v626, %v789
      %v842 = vsub.f32 %v629, %v792
      %v843 = vsub.f32 %v632, %v795
      %v844 = vsub.f32 %v700, %v798
      %v845 = vsub.f32 %v703, %v801
      %v846 = vsub.f32 %v706, %v804
      %v847 = vsub.f32 %v709, %v807
      %v848 = vsub.f32 %v712, %v810
      %v849 = vsub.f32 %v715, %v813
      %v850 = vsub.f32 %v718, %v816
      %v851 = vsub.f32 %v721, %v819
      %v852 = vmul.f32 %v820, 1.442695
      %v853 = vpow.pop %v852
      %v854 = vmul.f32 %v821, 1.442695
      %v855 = vpow.pop %v854
      %v856 = vmul.f32 %v822, 1.442695
      %v857 = vpow.pop %v856
      %v858 = vmul.f32 %v823, 1.442695
      %v859 = vpow.pop %v858
      %v860 = vmul.f32 %v824, 1.442695
      %v861 = vpow.pop %v860
      %v862 = vmul.f32 %v825, 1.442695
      %v863 = vpow.pop %v862
      %v864 = vmul.f32 %v826, 1.442695
      %v865 = vpow.pop %v864
      %v866 = vmul.f32 %v827, 1.442695
      %v867 = vpow.pop %v866
      %v868 = vmul.f32 %v828, 1.442695
      %v869 = vpow.pop %v868
      %v870 = vmul.f32 %v829, 1.442695
      %v871 = vpow.pop %v870
      %v872 = vmul.f32 %v830, 1.442695
      %v873 = vpow.pop %v872
      %v874 = vmul.f32 %v831, 1.442695
      %v875 = vpow.pop %v874
      %v876 = vmul.f32 %v832, 1.442695
      %v877 = vpow.pop %v876
      %v878 = vmul.f32 %v833, 1.442695
      %v879 = vpow.pop %v878
      %v880 = vmul.f32 %v834, 1.442695
      %v881 = vpow.pop %v880
      %v882 = vmul.f32 %v835, 1.442695
      %v883 = vpow.pop %v882
      %v884 = vmul.f32 %v836, 1.442695
      %v885 = vpow.pop %v884
      %v886 = vmul.f32 %v837, 1.442695
      %v887 = vpow.pop %v886
      %v888 = vmul.f32 %v838, 1.442695
      %v889 = vpow.pop %v888
      %v890 = vmul.f32 %v839, 1.442695
      %v891 = vpow.pop %v890
      %v892 = vmul.f32 %v840, 1.442695
      %v893 = vpow.pop %v892
      %v894 = vmul.f32 %v841, 1.442695
      %v895 = vpow.pop %v894
      %v896 = vmul.f32 %v842, 1.442695
      %v897 = vpow.pop %v896
      %v898 = vmul.f32 %v843, 1.442695
      %v899 = vpow.pop %v898
      %v900 = vmul.f32 %v844, 1.442695
      %v901 = vpow.pop %v900
      %v902 = vmul.f32 %v845, 1.442695
      %v903 = vpow.pop %v902
      %v904 = vmul.f32 %v846, 1.442695
      %v905 = vpow.pop %v904
      %v906 = vmul.f32 %v847, 1.442695
      %v907 = vpow.pop %v906
      %v908 = vmul.f32 %v848, 1.442695
      %v909 = vpow.pop %v908
      %v910 = vmul.f32 %v849, 1.442695
      %v911 = vpow.pop %v910
      %v912 = vmul.f32 %v850, 1.442695
      %v913 = vpow.pop %v912
      %v914 = vmul.f32 %v851, 1.442695
      %v915 = vpow.pop %v914
      %v916 = vsel %vm723, %v853, 0.0
      %917 = vadd.xlane.f32.xlu0 %v916
      %v918 = vpop.xlane.xlu0 %917
      %v919 = vsel %vm723, %v855, 0.0
      %920 = vadd.xlane.f32.xlu0 %v919
      %v921 = vpop.xlane.xlu0 %920
      %v922 = vsel %vm723, %v857, 0.0
      %923 = vadd.xlane.f32.xlu0 %v922
      %v924 = vpop.xlane.xlu0 %923
      %v925 = vsel %vm723, %v859, 0.0
      %926 = vadd.xlane.f32.xlu0 %v925
      %v927 = vpop.xlane.xlu0 %926
      %v928 = vsel %vm723, %v861, 0.0
      %929 = vadd.xlane.f32.xlu0 %v928
      %v930 = vpop.xlane.xlu0 %929
      %v931 = vsel %vm723, %v863, 0.0
      %932 = vadd.xlane.f32.xlu0 %v931
      %v933 = vpop.xlane.xlu0 %932
      %v934 = vsel %vm723, %v865, 0.0
      %935 = vadd.xlane.f32.xlu0 %v934
      %v936 = vpop.xlane.xlu0 %935
      %v937 = vsel %vm723, %v867, 0.0
      %938 = vadd.xlane.f32.xlu0 %v937
      %v939 = vpop.xlane.xlu0 %938
      %v940 = vsel %vm723, %v869, 0.0
      %941 = vadd.xlane.f32.xlu0 %v940
      %v942 = vpop.xlane.xlu0 %941
      %v943 = vsel %vm723, %v871, 0.0
      %944 = vadd.xlane.f32.xlu0 %v943
      %v945 = vpop.xlane.xlu0 %944
      %v946 = vsel %vm723, %v873, 0.0
      %947 = vadd.xlane.f32.xlu0 %v946
      %v948 = vpop.xlane.xlu0 %947
      %v949 = vsel %vm723, %v875, 0.0
      %950 = vadd.xlane.f32.xlu0 %v949
      %v951 = vpop.xlane.xlu0 %950
      %v952 = vsel %vm723, %v877, 0.0
      %953 = vadd.xlane.f32.xlu0 %v952
      %v954 = vpop.xlane.xlu0 %953
      %v955 = vsel %vm723, %v879, 0.0
      %956 = vadd.xlane.f32.xlu0 %v955
      %v957 = vpop.xlane.xlu0 %956
      %v958 = vsel %vm723, %v881, 0.0
      %959 = vadd.xlane.f32.xlu0 %v958
      %v960 = vpop.xlane.xlu0 %959
      %v961 = vsel %vm723, %v883, 0.0
      %962 = vadd.xlane.f32.xlu0 %v961
      %v963 = vpop.xlane.xlu0 %962
      %v964 = vsel %vm723, %v885, 0.0
      %965 = vadd.xlane.f32.xlu0 %v964
      %v966 = vpop.xlane.xlu0 %965
      %v967 = vsel %vm723, %v887, 0.0
      %968 = vadd.xlane.f32.xlu0 %v967
      %v969 = vpop.xlane.xlu0 %968
      %v970 = vsel %vm723, %v889, 0.0
      %971 = vadd.xlane.f32.xlu0 %v970
      %v972 = vpop.xlane.xlu0 %971
      %v973 = vsel %vm723, %v891, 0.0
      %974 = vadd.xlane.f32.xlu0 %v973
      %v975 = vpop.xlane.xlu0 %974
      %v976 = vsel %vm723, %v893, 0.0
      %977 = vadd.xlane.f32.xlu0 %v976
      %v978 = vpop.xlane.xlu0 %977
      %v979 = vsel %vm723, %v895, 0.0
      %980 = vadd.xlane.f32.xlu0 %v979
      %v981 = vpop.xlane.xlu0 %980
      %v982 = vsel %vm723, %v897, 0.0
      %983 = vadd.xlane.f32.xlu0 %v982
      %v984 = vpop.xlane.xlu0 %983
      %v985 = vsel %vm723, %v899, 0.0
      %986 = vadd.xlane.f32.xlu0 %v985
      %v987 = vpop.xlane.xlu0 %986
      %v988 = vsel %vm723, %v901, 0.0
      %989 = vadd.xlane.f32.xlu0 %v988
      %v990 = vpop.xlane.xlu0 %989
      %v991 = vsel %vm723, %v903, 0.0
      %992 = vadd.xlane.f32.xlu0 %v991
      %v993 = vpop.xlane.xlu0 %992
      %v994 = vsel %vm723, %v905, 0.0
      %995 = vadd.xlane.f32.xlu0 %v994
      %v996 = vpop.xlane.xlu0 %995
      %v997 = vsel %vm723, %v907, 0.0
      %998 = vadd.xlane.f32.xlu0 %v997
      %v999 = vpop.xlane.xlu0 %998
      %v1000 = vsel %vm723, %v909, 0.0
      %1001 = vadd.xlane.f32.xlu0 %v1000
      %v1002 = vpop.xlane.xlu0 %1001
      %v1003 = vsel %vm723, %v911, 0.0
      %1004 = vadd.xlane.f32.xlu0 %v1003
      %v1005 = vpop.xlane.xlu0 %1004
      %v1006 = vsel %vm723, %v913, 0.0
      %1007 = vadd.xlane.f32.xlu0 %v1006
      %v1008 = vpop.xlane.xlu0 %1007
      %v1009 = vsel %vm723, %v915, 0.0
      %1010 = vadd.xlane.f32.xlu0 %v1009
      %v1011 = vpop.xlane.xlu0 %1010
      %v1013 = vsel %vm723, %v853, 0
      %v1016 = vsel %vm723, %v855, 0
      %v1019 = vsel %vm723, %v857, 0
      %v1022 = vsel %vm723, %v859, 0
      %v1025 = vsel %vm723, %v861, 0
      %v1028 = vsel %vm723, %v863, 0
      %v1031 = vsel %vm723, %v865, 0
      %v1034 = vsel %vm723, %v867, 0
      %1036 = vmatpush.msra.mxu0 0.0
      %1037 = vmatpush.msra.mxu0 0.0
      %1038 = vmatpush.msra.mxu0 0.0
      %1039 = vmatpush.msra.mxu0 0.0
      %1040 = vmatpush.msra.mxu0 0.0
      %1041 = vmatpush.msra.mxu0 0.0
      %1042 = vmatpush.msra.mxu0 0.0
      %1043 = vmatpush.msra.mxu0 0.0
      %1044 = vmatpush.msra.mxu0 %v309
      %1045 = vmatpush.msra.mxu0 %v308
      %1046 = vmatpush.msra.mxu0 %v307
      %1047 = vmatpush.msra.mxu0 %v306
      %1048 = vmatpush.msra.mxu0 %v305
      %1049 = vmatpush.msra.mxu0 %v304
      %1050 = vmatpush.msra.mxu0 %v303
      %1051 = vmatpush.msra.mxu0 %v302
      %1052 = vmatmul.f32.gmra.mxu0 %v1013
      %v1053 = vpop.f32.mrf.mxu0
      %v1054 = vadd.f32 0.0, %v1053
      %1055 = vmatmul.f32.gmra.mxu0 %v1016
      %v1056 = vpop.f32.mrf.mxu0
      %v1057 = vadd.f32 0.0, %v1056
      %1058 = vmatmul.f32.gmra.mxu0 %v1019
      %v1059 = vpop.f32.mrf.mxu0
      %v1060 = vadd.f32 0.0, %v1059
      %1061 = vmatmul.f32.gmra.mxu0 %v1022
      %v1062 = vpop.f32.mrf.mxu0
      %v1063 = vadd.f32 0.0, %v1062
      %1064 = vmatmul.f32.gmra.mxu0 %v1025
      %v1065 = vpop.f32.mrf.mxu0
      %v1066 = vadd.f32 0.0, %v1065
      %1067 = vmatmul.f32.gmra.mxu0 %v1028
      %v1068 = vpop.f32.mrf.mxu0
      %v1069 = vadd.f32 0.0, %v1068
      %1070 = vmatmul.f32.gmra.mxu0 %v1031
      %v1071 = vpop.f32.mrf.mxu0
      %v1072 = vadd.f32 0.0, %v1071
      %1073 = vmatmul.f32.gmra.mxu0 %v1034
      %v1074 = vpop.f32.mrf.mxu0
      %v1075 = vadd.f32 0.0, %v1074
      %1076 = vdwg.mxu0
      %v1078 = vsel %vm723, %v869, 0
      %v1081 = vsel %vm723, %v871, 0
      %v1084 = vsel %vm723, %v873, 0
      %v1087 = vsel %vm723, %v875, 0
      %v1090 = vsel %vm723, %v877, 0
      %v1093 = vsel %vm723, %v879, 0
      %v1096 = vsel %vm723, %v881, 0
      %v1099 = vsel %vm723, %v883, 0
      %1101 = vmatpush.msra.mxu0 0.0
      %1102 = vmatpush.msra.mxu0 0.0
      %1103 = vmatpush.msra.mxu0 0.0
      %1104 = vmatpush.msra.mxu0 0.0
      %1105 = vmatpush.msra.mxu0 0.0
      %1106 = vmatpush.msra.mxu0 0.0
      %1107 = vmatpush.msra.mxu0 0.0
      %1108 = vmatpush.msra.mxu0 0.0
      %1109 = vmatpush.msra.mxu0 %v317
      %1110 = vmatpush.msra.mxu0 %v316
      %1111 = vmatpush.msra.mxu0 %v315
      %1112 = vmatpush.msra.mxu0 %v314
      %1113 = vmatpush.msra.mxu0 %v313
      %1114 = vmatpush.msra.mxu0 %v312
      %1115 = vmatpush.msra.mxu0 %v311
      %1116 = vmatpush.msra.mxu0 %v310
      %1117 = vmatmul.f32.gmra.mxu0 %v1078
      %v1118 = vpop.f32.mrf.mxu0
      %v1119 = vadd.f32 0.0, %v1118
      %1120 = vmatmul.f32.gmra.mxu0 %v1081
      %v1121 = vpop.f32.mrf.mxu0
      %v1122 = vadd.f32 0.0, %v1121
      %1123 = vmatmul.f32.gmra.mxu0 %v1084
      %v1124 = vpop.f32.mrf.mxu0
      %v1125 = vadd.f32 0.0, %v1124
      %1126 = vmatmul.f32.gmra.mxu0 %v1087
      %v1127 = vpop.f32.mrf.mxu0
      %v1128 = vadd.f32 0.0, %v1127
      %1129 = vmatmul.f32.gmra.mxu0 %v1090
      %v1130 = vpop.f32.mrf.mxu0
      %v1131 = vadd.f32 0.0, %v1130
      %1132 = vmatmul.f32.gmra.mxu0 %v1093
      %v1133 = vpop.f32.mrf.mxu0
      %v1134 = vadd.f32 0.0, %v1133
      %1135 = vmatmul.f32.gmra.mxu0 %v1096
      %v1136 = vpop.f32.mrf.mxu0
      %v1137 = vadd.f32 0.0, %v1136
      %1138 = vmatmul.f32.gmra.mxu0 %v1099
      %v1139 = vpop.f32.mrf.mxu0
      %v1140 = vadd.f32 0.0, %v1139
      %1141 = vdwg.mxu0
      %v1143 = vsel %vm723, %v885, 0
      %v1146 = vsel %vm723, %v887, 0
      %v1149 = vsel %vm723, %v889, 0
      %v1152 = vsel %vm723, %v891, 0
      %v1155 = vsel %vm723, %v893, 0
      %v1158 = vsel %vm723, %v895, 0
      %v1161 = vsel %vm723, %v897, 0
      %v1164 = vsel %vm723, %v899, 0
      %1166 = vmatpush.msra.mxu0 0.0
      %1167 = vmatpush.msra.mxu0 0.0
      %1168 = vmatpush.msra.mxu0 0.0
      %1169 = vmatpush.msra.mxu0 0.0
      %1170 = vmatpush.msra.mxu0 0.0
      %1171 = vmatpush.msra.mxu0 0.0
      %1172 = vmatpush.msra.mxu0 0.0
      %1173 = vmatpush.msra.mxu0 0.0
      %1174 = vmatpush.msra.mxu0 %v325
      %1175 = vmatpush.msra.mxu0 %v324
      %1176 = vmatpush.msra.mxu0 %v323
      %1177 = vmatpush.msra.mxu0 %v322
      %1178 = vmatpush.msra.mxu0 %v321
      %1179 = vmatpush.msra.mxu0 %v320
      %1180 = vmatpush.msra.mxu0 %v319
      %1181 = vmatpush.msra.mxu0 %v318
      %1182 = vmatmul.f32.gmra.mxu0 %v1143
      %v1183 = vpop.f32.mrf.mxu0
      %v1184 = vadd.f32 0.0, %v1183
      %1185 = vmatmul.f32.gmra.mxu0 %v1146
      %v1186 = vpop.f32.mrf.mxu0
      %v1187 = vadd.f32 0.0, %v1186
      %1188 = vmatmul.f32.gmra.mxu0 %v1149
      %v1189 = vpop.f32.mrf.mxu0
      %v1190 = vadd.f32 0.0, %v1189
      %1191 = vmatmul.f32.gmra.mxu0 %v1152
      %v1192 = vpop.f32.mrf.mxu0
      %v1193 = vadd.f32 0.0, %v1192
      %1194 = vmatmul.f32.gmra.mxu0 %v1155
      %v1195 = vpop.f32.mrf.mxu0
      %v1196 = vadd.f32 0.0, %v1195
      %1197 = vmatmul.f32.gmra.mxu0 %v1158
      %v1198 = vpop.f32.mrf.mxu0
      %v1199 = vadd.f32 0.0, %v1198
      %1200 = vmatmul.f32.gmra.mxu0 %v1161
      %v1201 = vpop.f32.mrf.mxu0
      %v1202 = vadd.f32 0.0, %v1201
      %1203 = vmatmul.f32.gmra.mxu0 %v1164
      %v1204 = vpop.f32.mrf.mxu0
      %v1205 = vadd.f32 0.0, %v1204
      %1206 = vdwg.mxu0
      %v1208 = vsel %vm723, %v901, 0
      %v1211 = vsel %vm723, %v903, 0
      %v1214 = vsel %vm723, %v905, 0
      %v1217 = vsel %vm723, %v907, 0
      %v1220 = vsel %vm723, %v909, 0
      %v1223 = vsel %vm723, %v911, 0
      %v1226 = vsel %vm723, %v913, 0
      %v1229 = vsel %vm723, %v915, 0
      %1231 = vmatpush.msra.mxu0 0.0
      %1232 = vmatpush.msra.mxu0 0.0
      %1233 = vmatpush.msra.mxu0 0.0
      %1234 = vmatpush.msra.mxu0 0.0
      %1235 = vmatpush.msra.mxu0 0.0
      %1236 = vmatpush.msra.mxu0 0.0
      %1237 = vmatpush.msra.mxu0 0.0
      %1238 = vmatpush.msra.mxu0 0.0
      %1239 = vmatpush.msra.mxu0 %v333
      %1240 = vmatpush.msra.mxu0 %v332
      %1241 = vmatpush.msra.mxu0 %v331
      %1242 = vmatpush.msra.mxu0 %v330
      %1243 = vmatpush.msra.mxu0 %v329
      %1244 = vmatpush.msra.mxu0 %v328
      %1245 = vmatpush.msra.mxu0 %v327
      %1246 = vmatpush.msra.mxu0 %v326
      %1247 = vmatmul.f32.gmra.mxu0 %v1208
      %v1248 = vpop.f32.mrf.mxu0
      %v1249 = vadd.f32 0.0, %v1248
      %1250 = vmatmul.f32.gmra.mxu0 %v1211
      %v1251 = vpop.f32.mrf.mxu0
      %v1252 = vadd.f32 0.0, %v1251
      %1253 = vmatmul.f32.gmra.mxu0 %v1214
      %v1254 = vpop.f32.mrf.mxu0
      %v1255 = vadd.f32 0.0, %v1254
      %1256 = vmatmul.f32.gmra.mxu0 %v1217
      %v1257 = vpop.f32.mrf.mxu0
      %v1258 = vadd.f32 0.0, %v1257
      %1259 = vmatmul.f32.gmra.mxu0 %v1220
      %v1260 = vpop.f32.mrf.mxu0
      %v1261 = vadd.f32 0.0, %v1260
      %1262 = vmatmul.f32.gmra.mxu0 %v1223
      %v1263 = vpop.f32.mrf.mxu0
      %v1264 = vadd.f32 0.0, %v1263
      %1265 = vmatmul.f32.gmra.mxu0 %v1226
      %v1266 = vpop.f32.mrf.mxu0
      %v1267 = vadd.f32 0.0, %v1266
      %1268 = vmatmul.f32.gmra.mxu0 %v1229
      %v1269 = vpop.f32.mrf.mxu0
      %v1270 = vadd.f32 0.0, %v1269
      %1271 = vdwg.mxu0
      %v1272 = vrcp.pop %v918
      %v1273 = vrcp.pop %v921
      %v1274 = vrcp.pop %v924
      %v1275 = vrcp.pop %v927
      %v1276 = vrcp.pop %v930
      %v1277 = vrcp.pop %v933
      %v1278 = vrcp.pop %v936
      %v1279 = vrcp.pop %v939
      %v1280 = vrcp.pop %v942
      %v1281 = vrcp.pop %v945
      %v1282 = vrcp.pop %v948
      %v1283 = vrcp.pop %v951
      %v1284 = vrcp.pop %v954
      %v1285 = vrcp.pop %v957
      %v1286 = vrcp.pop %v960
      %v1287 = vrcp.pop %v963
      %v1288 = vrcp.pop %v966
      %v1289 = vrcp.pop %v969
      %v1290 = vrcp.pop %v972
      %v1291 = vrcp.pop %v975
      %v1292 = vrcp.pop %v978
      %v1293 = vrcp.pop %v981
      %v1294 = vrcp.pop %v984
      %v1295 = vrcp.pop %v987
      %v1296 = vrcp.pop %v990
      %v1297 = vrcp.pop %v993
      %v1298 = vrcp.pop %v996
      %v1299 = vrcp.pop %v999
      %v1300 = vrcp.pop %v1002
      %v1301 = vrcp.pop %v1005
      %v1302 = vrcp.pop %v1008
      %v1303 = vrcp.pop %v1011
      %v1304 = vmul.f32 %v1054, %v1272
      %v1305 = vmul.f32 %v1057, %v1273
      %v1306 = vmul.f32 %v1060, %v1274
      %v1307 = vmul.f32 %v1063, %v1275
      %v1308 = vmul.f32 %v1066, %v1276
      %v1309 = vmul.f32 %v1069, %v1277
      %v1310 = vmul.f32 %v1072, %v1278
      %v1311 = vmul.f32 %v1075, %v1279
      %v1312 = vmul.f32 %v1119, %v1280
      %v1313 = vmul.f32 %v1122, %v1281
      %v1314 = vmul.f32 %v1125, %v1282
      %v1315 = vmul.f32 %v1128, %v1283
      %v1316 = vmul.f32 %v1131, %v1284
      %v1317 = vmul.f32 %v1134, %v1285
      %v1318 = vmul.f32 %v1137, %v1286
      %v1319 = vmul.f32 %v1140, %v1287
      %v1320 = vmul.f32 %v1184, %v1288
      %v1321 = vmul.f32 %v1187, %v1289
      %v1322 = vmul.f32 %v1190, %v1290
      %v1323 = vmul.f32 %v1193, %v1291
      %v1324 = vmul.f32 %v1196, %v1292
      %v1325 = vmul.f32 %v1199, %v1293
      %v1326 = vmul.f32 %v1202, %v1294
      %v1327 = vmul.f32 %v1205, %v1295
      %v1328 = vmul.f32 %v1249, %v1296
      %v1329 = vmul.f32 %v1252, %v1297
      %v1330 = vmul.f32 %v1255, %v1298
      %v1331 = vmul.f32 %v1258, %v1299
      %v1332 = vmul.f32 %v1261, %v1300
      %v1333 = vmul.f32 %v1264, %v1301
      %v1334 = vmul.f32 %v1267, %v1302
      %v1335 = vmul.f32 %v1270, %v1303
      %1336 = vst.msk [vmem:[%s237] sm:$0xff] %vm366, %v1304
      %1337 = vst.msk [vmem:[%s237 + $0x8] sm:$0xff] %vm366, %v1305
      %1338 = vst.msk [vmem:[%s237 + $0x10] sm:$0xff] %vm366, %v1306
      %1339 = vst.msk [vmem:[%s237 + $0x18] sm:$0xff] %vm366, %v1307
      %1340 = vst.msk [vmem:[%s237 + $0x20] sm:$0xff] %vm366, %v1308
      %1341 = vst.msk [vmem:[%s237 + $0x28] sm:$0xff] %vm366, %v1309
      %1342 = vst.msk [vmem:[%s237 + $0x30] sm:$0xff] %vm366, %v1310
      %1343 = vst.msk [vmem:[%s237 + $0x38] sm:$0xff] %vm366, %v1311
      %1344 = vst.msk [vmem:[%s237 + $0x40] sm:$0xff] %vm366, %v1312
      %1345 = vst.msk [vmem:[%s237 + $0x48] sm:$0xff] %vm366, %v1313
      %1346 = vst.msk [vmem:[%s237 + $0x50] sm:$0xff] %vm366, %v1314
      %1347 = vst.msk [vmem:[%s237 + $0x58] sm:$0xff] %vm366, %v1315
      %1348 = vst.msk [vmem:[%s237 + $0x60] sm:$0xff] %vm366, %v1316
      %1349 = vst.msk [vmem:[%s237 + $0x68] sm:$0xff] %vm366, %v1317
      %1350 = vst.msk [vmem:[%s237 + $0x70] sm:$0xff] %vm366, %v1318
      %1351 = vst.msk [vmem:[%s237 + $0x78] sm:$0xff] %vm366, %v1319
      %1352 = vst.msk [vmem:[%s237 + $0x80] sm:$0xff] %vm366, %v1320
      %1353 = vst.msk [vmem:[%s237 + $0x88] sm:$0xff] %vm366, %v1321
      %1354 = vst.msk [vmem:[%s237 + $0x90] sm:$0xff] %vm366, %v1322
      %1355 = vst.msk [vmem:[%s237 + $0x98] sm:$0xff] %vm366, %v1323
      %1356 = vst.msk [vmem:[%s237 + $0xa0] sm:$0xff] %vm366, %v1324
      %1357 = vst.msk [vmem:[%s237 + $0xa8] sm:$0xff] %vm366, %v1325
      %1358 = vst.msk [vmem:[%s237 + $0xb0] sm:$0xff] %vm366, %v1326
      %1359 = vst.msk [vmem:[%s237 + $0xb8] sm:$0xff] %vm366, %v1327
      %1360 = vst.msk [vmem:[%s237 + $0xc0] sm:$0xff] %vm366, %v1328
      %1361 = vst.msk [vmem:[%s237 + $0xc8] sm:$0xff] %vm366, %v1329
      %1362 = vst.msk [vmem:[%s237 + $0xd0] sm:$0xff] %vm366, %v1330
      %1363 = vst.msk [vmem:[%s237 + $0xd8] sm:$0xff] %vm366, %v1331
      %1364 = vst.msk [vmem:[%s237 + $0xe0] sm:$0xff] %vm366, %v1332
      %1365 = vst.msk [vmem:[%s237 + $0xe8] sm:$0xff] %vm366, %v1333
      %1366 = vst.msk [vmem:[%s237 + $0xf0] sm:$0xff] %vm366, %v1334
      %1367 = vst.msk [vmem:[%s237 + $0xf8] sm:$0xff] %vm366, %v1335
      %p1368 = scmp.lt.s32.totalorder %s15, 1
      %s1369 = scalar_select %p1368, %s15, 1
      %s1370 = smul.addr %s1369, 32
      %s1371 = smul.addr %s1370, 8
      %s1372 = scalar_lea.vmem %s4, %s1371
      // Predicated region
      $region37: #{fuxi_forward.29} parent=35 // pred_check
        %p1373 = pneg %p132
      $region38: #{fuxi_forward.29} parent=35 // pred_check_branch
        %1375 = sbr.rel (%p1373) target = $region40
      $region39: #{fuxi_forward.29} parent=35 // pred_region
        _
      $region40: #{fuxi_forward.29} parent=35 // pred_fallthru
        _
    $region36: #{fuxi_forward.29} parent=5 // pred_fallthru
      _
    %p1376 = scmp.le.s32.totalorder 2, %s10
    // Predicated region
    $region41: #{fuxi_forward.29} parent=5 // pred_check
      %p1377 = pneg %p1376
    $region42: #{fuxi_forward.29} parent=5 // pred_check_branch
      %1379 = sbr.rel (%p1377) target = $region44
    $region43: #{fuxi_forward.29} parent=5 // pred_region
      %s1380 = ssub.s32 %s10, 2
      // Predicated region
      $region45: #{fuxi_forward.29} parent=43 // pred_check
        %p1381 = pneg %p138
      $region46: #{fuxi_forward.29} parent=43 // pred_check_branch
        %1383 = sbr.rel (%p1381) target = $region48
      $region47: #{fuxi_forward.29} parent=43 // pred_region
        %p1384 = scmp.lt.s32.totalorder %s16, 1
        %s1385 = scalar_select %p1384, %s16, 1
        %s1386 = smul.addr %s1385, 32
        %s1387 = smul.addr %s1386, 8
        %s1388 = scalar_lea.vmem %s4, %s1387
      $region48: #{fuxi_forward.29} parent=43 // pred_fallthru
        _
    $region44: #{fuxi_forward.29} parent=5 // pred_fallthru
      _
  $region6: #{fuxi_forward.29} parent=0 // loop_footer
    %s14 = sadd.s32 1, %s10
  $region7: #{fuxi_forward.29} parent=0 // loop_footer_branch
    %9 = sbr.rel target = $region3
  $region8: #{fuxi_forward.29} parent=0 // loop_exit
    _

// kernel: fuxi_forward.43
$region0: #{fuxi_forward.43}
  #allocation0 [shape = 'u32[]', space=smem, size = 0x4, offset = 0x4, fixed_abs, tag = 'smem constant byte address 0x4 - core index']
  #allocation1 [shape = 'u32[72,128]{1,0:T(1,128)}', space=vmem, size = 0x9000, scoped, tag = 'internal scratch']
  %s0 = inlined_call_operand.vmem [shape: f32[2,8,512], index: 0, kind: input, shape index: {}]
  %s1 = inlined_call_operand.vmem [shape: f32[2,1,512], index: 1, kind: input, shape index: {}]
  %s2 = inlined_call_operand.vmem [shape: f32[2,1,512], index: 2, kind: input, shape index: {}]
  %s3 = inlined_call_operand.vmem [shape: f32[2,8,512], index: 3, kind: output, shape index: {}]
  %s4 = sld [smem:[#allocation0]]
  $region45: #{fuxi_forward.43} parent=0
    _
  %s6 = ssub.s32 1, %s4
  %s7 = scalar_select 0, %s6, %s4
  loop: start=0, step=1, limit=4
  $region2: #{fuxi_forward.43} parent=0 // loop_pre_header
    _
  $region3: #{fuxi_forward.43} parent=0 // loop_header
    %s9 = sphi 0, %s13
    %p10 = scmp.ge.s32.totalorder %s9, 4
    %s16 = sphi 0, %s28
    %s17 = sphi 0, %s24
    %s18 = sphi 0, %s16
    %s19 = sphi 0, %s17
    %s20 = sphi 0, %s18
    %s21 = sphi 0, %s19
    %s33 = sphi 0, %s35
    %s36 = sphi 0, %s33
    %s37 = sphi 0, %s36
    %s53 = sphi 0, %s37
    %s59 = sphi 0, %s61
    %s62 = sphi 0, %s59
    %s63 = sphi 0, %s62
    %s79 = sphi 0, %s63
    %s85 = sphi 0, %s87
    %s88 = sphi 0, %s85
    %s89 = sphi 0, %s88
    %s105 = sphi 0, %s89
    %s113 = sphi 0, %s115
    %s116 = sphi 0, %s113
    %s117 = sphi 0, %s116
    %s133 = sphi 0, %s117
  $region4: #{fuxi_forward.43} parent=0 // loop_header_branch
    %12 = sbr.rel (%p10) target = $region8
  $region5: #{fuxi_forward.43} parent=0 // loop_body
    %s14 = ssub.s32 %s9, 1
    %s15 = ssub.s32 %s9, 2
    %s22 = sadd.s32 1, %s17
    %p23 = scmp.ge.s32.totalorder %s22, 1
    %s24 = scalar_select %p23, 0, %s22
    %s25 = sadd.s32 1, %s16
    %s26 = scalar_select %p23, %s25, %s16
    %p27 = scmp.ge.s32.totalorder %s26, 2
    %s28 = scalar_select %p27, 0, %s26
    %s29 = ssub.s32 %s16, %s28
    %s30 = ssub.s32 %s17, %s24
    %s31 = sor.u32 %s29, %s30
    %p32 = scmp.eq.s32.totalorder %s31, 0
    %s34 = sadd.s32 %s33, 1
    %s35 = scalar_select %p32, %s33, %s34
    %p38 = pneg %p32
    %p39 = scmp.eq.s32.totalorder %s9, 1
    %p40 = por %p38, %p39
    %p41 = scmp.ne.s32.totalorder %s33, %s36
    %p42 = scmp.eq.s32.totalorder %s9, 0
    %p43 = por %p41, %p42
    %p44 = scmp.ne.s32.totalorder %s33, %s36
    %p45 = scmp.eq.s32.totalorder %s14, 1
    %p46 = por %p44, %p45
    %p47 = scmp.ne.s32.totalorder %s36, %s37
    %p48 = scmp.eq.s32.totalorder %s14, 0
    %p49 = por %p47, %p48
    %p50 = scmp.ne.s32.totalorder %s36, %s37
    %p51 = scmp.eq.s32.totalorder %s15, 1
    %p52 = por %p50, %p51
    %p54 = scmp.ne.s32.totalorder %s37, %s53
    %p55 = scmp.eq.s32.totalorder %s15, 0
    %p56 = por %p54, %p55
    %s57 = ssub.s32 %s16, %s28
    %p58 = scmp.eq.s32.totalorder %s57, 0
    %s60 = sadd.s32 %s59, 1
    %s61 = scalar_select %p58, %s59, %s60
    %p64 = pneg %p58
    %p65 = scmp.eq.s32.totalorder %s9, 1
    %p66 = por %p64, %p65
    %p67 = scmp.ne.s32.totalorder %s59, %s62
    %p68 = scmp.eq.s32.totalorder %s9, 0
    %p69 = por %p67, %p68
    %p70 = scmp.ne.s32.totalorder %s59, %s62
    %p71 = scmp.eq.s32.totalorder %s14, 1
    %p72 = por %p70, %p71
    %p73 = scmp.ne.s32.totalorder %s62, %s63
    %p74 = scmp.eq.s32.totalorder %s14, 0
    %p75 = por %p73, %p74
    %p76 = scmp.ne.s32.totalorder %s62, %s63
    %p77 = scmp.eq.s32.totalorder %s15, 1
    %p78 = por %p76, %p77
    %p80 = scmp.ne.s32.totalorder %s63, %s79
    %p81 = scmp.eq.s32.totalorder %s15, 0
    %p82 = por %p80, %p81
    %s83 = ssub.s32 %s16, %s28
    %p84 = scmp.eq.s32.totalorder %s83, 0
    %s86 = sadd.s32 %s85, 1
    %s87 = scalar_select %p84, %s85, %s86
    %p90 = pneg %p84
    %p91 = scmp.eq.s32.totalorder %s9, 1
    %p92 = por %p90, %p91
    %p93 = scmp.ne.s32.totalorder %s85, %s88
    %p94 = scmp.eq.s32.totalorder %s9, 0
    %p95 = por %p93, %p94
    %p96 = scmp.ne.s32.totalorder %s85, %s88
    %p97 = scmp.eq.s32.totalorder %s14, 1
    %p98 = por %p96, %p97
    %p99 = scmp.ne.s32.totalorder %s88, %s89
    %p100 = scmp.eq.s32.totalorder %s14, 0
    %p101 = por %p99, %p100
    %p102 = scmp.ne.s32.totalorder %s88, %s89
    %p103 = scmp.eq.s32.totalorder %s15, 1
    %p104 = por %p102, %p103
    %p106 = scmp.ne.s32.totalorder %s89, %s105
    %p107 = scmp.eq.s32.totalorder %s15, 0
    %p108 = por %p106, %p107
    %s109 = ssub.s32 %s16, %s28
    %s110 = ssub.s32 %s17, %s24
    %s111 = sor.u32 %s109, %s110
    %p112 = scmp.eq.s32.totalorder %s111, 0
    %s114 = sadd.s32 %s113, 1
    %s115 = scalar_select %p112, %s113, %s114
    %p118 = pneg %p112
    %p119 = scmp.eq.s32.totalorder %s9, 1
    %p120 = por %p118, %p119
    %p121 = scmp.ne.s32.totalorder %s113, %s116
    %p122 = scmp.eq.s32.totalorder %s9, 0
    %p123 = por %p121, %p122
    %p124 = scmp.ne.s32.totalorder %s113, %s116
    %p125 = scmp.eq.s32.totalorder %s14, 1
    %p126 = por %p124, %p125
    %p127 = scmp.ne.s32.totalorder %s116, %s117
    %p128 = scmp.eq.s32.totalorder %s14, 0
    %p129 = por %p127, %p128
    %p130 = scmp.ne.s32.totalorder %s116, %s117
    %p131 = scmp.eq.s32.totalorder %s15, 1
    %p132 = por %p130, %p131
    %p134 = scmp.ne.s32.totalorder %s117, %s133
    %p135 = scmp.eq.s32.totalorder %s15, 0
    %p136 = por %p134, %p135
    %p137 = scmp.le.s32.totalorder 1, %s9
    %p138 = scmp.lt.s32.totalorder %s9, 3
    %p139 = pnand %p137, %p138
    %p140 = pneg %p139
    // Predicated region
    $region9: #{fuxi_forward.43} parent=5 // pred_check
      _
    $region10: #{fuxi_forward.43} parent=5 // pred_check_branch
      %142 = sbr.rel (%p139) target = $region12
    $region11: #{fuxi_forward.43} parent=5 // pred_region
      %s143 = ssub.s32 %s9, 1
    $region12: #{fuxi_forward.43} parent=5 // pred_fallthru
      _
    %p144 = scmp.lt.s32.totalorder %s9, 2
    // Predicated region
    $region13: #{fuxi_forward.43} parent=5 // pred_check
      %p145 = pneg %p144
    $region14: #{fuxi_forward.43} parent=5 // pred_check_branch
      %147 = sbr.rel (%p145) target = $region16
    $region15: #{fuxi_forward.43} parent=5 // pred_region
      // Predicated region
      $region17: #{fuxi_forward.43} parent=15 // pred_check
        %p148 = pneg %p43
      $region18: #{fuxi_forward.43} parent=15 // pred_check_branch
        %150 = sbr.rel (%p148) target = $region20
      $region19: #{fuxi_forward.43} parent=15 // pred_region
        %p151 = scmp.lt.s32.totalorder %s16, 1
        %s152 = scalar_select %p151, %s16, 1
        %p153 = scmp.lt.s32.totalorder %s17, 0
        %s154 = scalar_select %p153, %s17, 0
        %s155 = smul.addr %s154, 4
        %s156 = smul.addr %s152, 4
        %s157 = sadd.s32 %s155, %s156
        %s158 = smul.addr %s157, 8
        %s159 = scalar_lea.vmem %s0, %s158
      $region20: #{fuxi_forward.43} parent=15 // pred_fallthru
        _
      // Predicated region
      $region21: #{fuxi_forward.43} parent=15 // pred_check
        %p160 = pneg %p69
      $region22: #{fuxi_forward.43} parent=15 // pred_check_branch
        %162 = sbr.rel (%p160) target = $region24
      $region23: #{fuxi_forward.43} parent=15 // pred_region
        %p163 = scmp.lt.s32.totalorder %s16, 1
        %s164 = scalar_select %p163, %s16, 1
        %s165 = smul.addr %s164, 4
        %s166 = scalar_lea.vmem %s1, %s165
      $region24: #{fuxi_forward.43} parent=15 // pred_fallthru
        _
      // Predicated region
      $region25: #{fuxi_forward.43} parent=15 // pred_check
        %p167 = pneg %p95
      $region26: #{fuxi_forward.43} parent=15 // pred_check_branch
        %169 = sbr.rel (%p167) target = $region28
      $region27: #{fuxi_forward.43} parent=15 // pred_region
        %p170 = scmp.lt.s32.totalorder %s16, 1
        %s171 = scalar_select %p170, %s16, 1
        %s172 = smul.addr %s171, 4
        %s173 = scalar_lea.vmem %s2, %s172
      $region28: #{fuxi_forward.43} parent=15 // pred_fallthru
        _
    $region16: #{fuxi_forward.43} parent=5 // pred_fallthru
      _
    %p174 = scmp.le.s32.totalorder 1, %s9
    %p175 = scmp.lt.s32.totalorder %s9, 3
    %p176 = pnand %p174, %p175
    %p177 = pneg %p176
    // Predicated region
    $region29: #{fuxi_forward.43} parent=5 // pred_check
      _
    $region30: #{fuxi_forward.43} parent=5 // pred_check_branch
      %179 = sbr.rel (%p176) target = $region32
    $region31: #{fuxi_forward.43} parent=5 // pred_region
      %s180 = ssub.s32 %s9, 1
      %p181 = scmp.lt.s32.totalorder %s18, 1
      %s182 = scalar_select %p181, %s18, 1
      %p183 = scmp.lt.s32.totalorder %s19, 0
      %s184 = scalar_select %p183, %s19, 0
      %s185 = smul.addr %s184, 4
      %s186 = smul.addr %s182, 4
      %s187 = sadd.s32 %s185, %s186
      %s188 = smul.addr %s187, 8
      %s189 = scalar_lea.vmem %s0, %s188
      %p190 = pneg %p49
      %p191 = pneg %p46
      %p192 = scmp.lt.s32.totalorder %s18, 1
      %s193 = scalar_select %p192, %s18, 1
      %s194 = smul.addr %s193, 4
      %s195 = scalar_lea.vmem %s1, %s194
      %p196 = pneg %p75
      %p197 = pneg %p72
      %p198 = scmp.lt.s32.totalorder %s18, 1
      %s199 = scalar_select %p198, %s18, 1
      %s200 = smul.addr %s199, 4
      %s201 = scalar_lea.vmem %s2, %s200
      %p202 = pneg %p101
      %p203 = pneg %p98
      %p204 = pneg %p129
      %p205 = pneg %p126
      %p206 = scmp.lt.s32.totalorder %s18, 1
      %s207 = scalar_select %p206, %s18, 1
      %p208 = scmp.lt.s32.totalorder %s19, 0
      %s209 = scalar_select %p208, %s19, 0
      %s210 = smul.addr %s209, 4
      %s211 = smul.addr %s207, 4
      %s212 = sadd.s32 %s210, %s211
      %s213 = smul.addr %s212, 8
      %s214 = scalar_lea.vmem %s3, %s213
      %p215 = scmp.lt.s32.totalorder %s18, 1
      %s216 = scalar_select %p215, %s18, 1
      %p217 = scmp.lt.s32.totalorder %s19, 0
      %s218 = scalar_select %p217, %s19, 0
      %s219 = smul.addr %s218, 4
      %s220 = smul.addr %s216, 4
      %s221 = sadd.s32 %s219, %s220
      %s222 = smul.addr %s221, 8
      %s223 = scalar_lea.vmem %s0, %s222
      %p224 = scmp.lt.s32.totalorder %s18, 1
      %s225 = scalar_select %p224, %s18, 1
      %s226 = smul.addr %s225, 4
      %s227 = scalar_lea.vmem %s1, %s226
      %p228 = scmp.lt.s32.totalorder %s18, 1
      %s229 = scalar_select %p228, %s18, 1
      %s230 = smul.addr %s229, 4
      %s231 = scalar_lea.vmem %s2, %s230
      %p232 = scmp.lt.s32.totalorder %s18, 1
      %s233 = scalar_select %p232, %s18, 1
      %p234 = scmp.lt.s32.totalorder %s19, 0
      %s235 = scalar_select %p234, %s19, 0
      %s236 = smul.addr %s235, 4
      %s237 = smul.addr %s233, 4
      %s238 = sadd.s32 %s236, %s237
      %s239 = smul.addr %s238, 8
      %s240 = scalar_lea.vmem %s3, %s239
      %v241 = vld [vmem:[%s223] sm:$0xff]
      %v242 = vld [vmem:[%s223 + $0x8] sm:$0xff]
      %v243 = vld [vmem:[%s223 + $0x10] sm:$0xff]
      %v244 = vld [vmem:[%s223 + $0x18] sm:$0xff]
      %v245 = vld [vmem:[%s227] sm:$0xf]
      %v246 = vld [vmem:[%s231] sm:$0xf]
      %v247 = vlaneseq
      %v248 = vand.u32 %v247, 127
      %v249 = vadd.s32 %v248, 128
      %v250 = vadd.s32 %v248, 256
      %v251 = vadd.s32 %v248, 384
      %vm252 = vcmp.lt.s32.totalorder %v248, 512
      %vm253 = vcmp.lt.s32.totalorder %v249, 512
      %vm254 = vcmp.lt.s32.totalorder %v250, 512
      %vm255 = vcmp.lt.s32.totalorder %v251, 512
      %v256 = vsel %vm252, %v241, 0.0
      %v257 = vsel %vm253, %v242, 0.0
      %v258 = vsel %vm254, %v243, 0.0
      %v259 = vsel %vm255, %v244, 0.0
      %v260 = vadd.f32 %v256, %v257
      %v261 = vadd.f32 %v260, %v258
      %v262 = vadd.f32 %v261, %v259
      %263 = vadd.xlane.f32.xlu0 %v262
      %v264 = vpop.xlane.xlu0 %263
      %v265 = vmul.f32 %v264, 0.001953125
      %v266 = vsub.f32 %v241, %v265
      %v267 = vsub.f32 %v242, %v265
      %v268 = vsub.f32 %v243, %v265
      %v269 = vsub.f32 %v244, %v265
      %v270 = vsel %vm252, %v266, 0.0
      %v271 = vsel %vm253, %v267, 0.0
      %v272 = vsel %vm254, %v268, 0.0
      %v273 = vsel %vm255, %v269, 0.0
      %v274 = vmul.f32 %v270, %v270
      %v275 = vmul.f32 %v271, %v271
      %v276 = vmul.f32 %v272, %v272
      %v277 = vmul.f32 %v273, %v273
      %v278 = vadd.f32 %v274, %v275
      %v279 = vadd.f32 %v278, %v276
      %v280 = vadd.f32 %v279, %v277
      %281 = vadd.xlane.f32.xlu0 %v280
      %v282 = vpop.xlane.xlu0 %281
      %v283 = vmul.f32 %v282, 0.001953125
      %v284 = vadd.f32 %v283, 1e-05
      %v285 = vrsqrt.pop %v284
      %v286 = vmul.f32 %v285, %v284
      %v287 = vmul.f32 %v286, %v285
      %v288 = vmul.f32 0.5, %v287
      %v289 = vsub.f32 1.5, %v288
      %v290 = vmul.f32 %v285, %v289
      %vm291 = vweird.f32 %v284
      %vm292 = vweird.f32 %v285
      %vm293 = vmor %vm291, %vm292
      %v294 = vsel %vm293, %v285, %v290
      %v295 = vmul.f32 %v266, %v294
      %v296 = vmul.f32 %v267, %v294
      %v297 = vmul.f32 %v268, %v294
      %v298 = vmul.f32 %v269, %v294
      %v300 = vperm.slane %v245, 0
      %v301 = vperm.slane %v245, 1
      %v302 = vperm.slane %v245, 2
      %v303 = vperm.slane %v245, 3
      %v308 = vmul.f32 %v295, %v300
      %v309 = vmul.f32 %v296, %v301
      %v310 = vmul.f32 %v297, %v302
      %v311 = vmul.f32 %v298, %v303
      %v313 = vperm.slane %v246, 0
      %v314 = vperm.slane %v246, 1
      %v315 = vperm.slane %v246, 2
      %v316 = vperm.slane %v246, 3
      %v321 = vadd.f32 %v308, %v313
      %v322 = vadd.f32 %v309, %v314
      %v323 = vadd.f32 %v310, %v315
      %v324 = vadd.f32 %v311, %v316
      %v325 = vsub.f32 0.0, %v321
      %v326 = vsub.f32 0.0, %v322
      %v327 = vsub.f32 0.0, %v323
      %v328 = vsub.f32 0.0, %v324
      %v329 = vmul.f32 %v325, 1.442695
      %v330 = vpow.pop %v329
      %v331 = vmul.f32 %v326, 1.442695
      %v332 = vpow.pop %v331
      %v333 = vmul.f32 %v327, 1.442695
      %v334 = vpow.pop %v333
      %v335 = vmul.f32 %v328, 1.442695
      %v336 = vpow.pop %v335
      %v337 = vadd.f32 %v330, 1.0
      %v338 = vadd.f32 %v332, 1.0
      %v339 = vadd.f32 %v334, 1.0
      %v340 = vadd.f32 %v336, 1.0
      %v341 = vrcp.pop %v337
      %v342 = vrcp.pop %v338
      %v343 = vrcp.pop %v339
      %v344 = vrcp.pop %v340
      %v345 = vmul.f32 %v321, %v341
      %v346 = vmul.f32 %v322, %v342
      %v347 = vmul.f32 %v323, %v343
      %v348 = vmul.f32 %v324, %v344
      %349 = vst [vmem:[%s240] sm:$0xff] %v345
      %350 = vst [vmem:[%s240 + $0x8] sm:$0xff] %v346
      %351 = vst [vmem:[%s240 + $0x10] sm:$0xff] %v347
      %352 = vst [vmem:[%s240 + $0x18] sm:$0xff] %v348
      %p353 = scmp.lt.s32.totalorder %s18, 1
      %s354 = scalar_select %p353, %s18, 1
      %p355 = scmp.lt.s32.totalorder %s19, 0
      %s356 = scalar_select %p355, %s19, 0
      %s357 = smul.addr %s356, 4
      %s358 = smul.addr %s354, 4
      %s359 = sadd.s32 %s357, %s358
      %s360 = smul.addr %s359, 8
      %s361 = scalar_lea.vmem %s3, %s360
      // Predicated region
      $region33: #{fuxi_forward.43} parent=31 // pred_check
        %p362 = pneg %p126
      $region34: #{fuxi_forward.43} parent=31 // pred_check_branch
        %364 = sbr.rel (%p362) target = $region36
      $region35: #{fuxi_forward.43} parent=31 // pred_region
        _
      $region36: #{fuxi_forward.43} parent=31 // pred_fallthru
        _
    $region32: #{fuxi_forward.43} parent=5 // pred_fallthru
      _
    %p365 = scmp.le.s32.totalorder 2, %s9
    // Predicated region
    $region37: #{fuxi_forward.43} parent=5 // pred_check
      %p366 = pneg %p365
    $region38: #{fuxi_forward.43} parent=5 // pred_check_branch
      %368 = sbr.rel (%p366) target = $region40
    $region39: #{fuxi_forward.43} parent=5 // pred_region
      %s369 = ssub.s32 %s9, 2
      // Predicated region
      $region41: #{fuxi_forward.43} parent=39 // pred_check
        %p370 = pneg %p132
      $region42: #{fuxi_forward.43} parent=39 // pred_check_branch
        %372 = sbr.rel (%p370) target = $region44
      $region43: #{fuxi_forward.43} parent=39 // pred_region
        %p373 = scmp.lt.s32.totalorder %s20, 1
        %s374 = scalar_select %p373, %s20, 1
        %p375 = scmp.lt.s32.totalorder %s21, 0
        %s376 = scalar_select %p375, %s21, 0
        %s377 = smul.addr %s376, 4
        %s378 = smul.addr %s374, 4
        %s379 = sadd.s32 %s377, %s378
        %s380 = smul.addr %s379, 8
        %s381 = scalar_lea.vmem %s3, %s380
      $region44: #{fuxi_forward.43} parent=39 // pred_fallthru
        _
    $region40: #{fuxi_forward.43} parent=5 // pred_fallthru
      _
  $region6: #{fuxi_forward.43} parent=0 // loop_footer
    %s13 = sadd.s32 1, %s9
  $region7: #{fuxi_forward.43} parent=0 // loop_footer_branch
    %8 = sbr.rel target = $region3
  $region8: #{fuxi_forward.43} parent=0 // loop_exit
    _

</llo_original>
